<compile_context>
chip_gen: v5e
topology: v5e:2x2
jax: 0.10.0
libtpu: 0.0.40
codegen_flags: <defaults>
</compile_context>

<pallas_src>
import functools
import math

import jax
import jax.numpy as jnp
from jax.experimental import pallas as pl
from jax.experimental.pallas import tpu as pltpu

_VMEM = pl.BlockSpec(memory_space=pltpu.MemorySpace.VMEM)


# ----------------------------------------------------------------------------
# Kernel 1 (one per conv layer): fused conv-as-GEMM + 2x2 max-pool + bias + ReLU.
# a_ref rows are pre-ordered into 4 pool-window quarters: quarter q occupies rows
# [q*L, (q+1)*L), each ordered (n, y', x').  Pool = max over the four quarters.
# ----------------------------------------------------------------------------
def _conv_relu_pool_kernel(a_ref, w_ref, b_ref, o_ref):
    l = o_ref.shape[0]                                   # pooled row count
    y = jnp.dot(a_ref[...], w_ref[...], preferred_element_type=jnp.float32)
    m = jnp.maximum(jnp.maximum(y[0 * l:1 * l], y[1 * l:2 * l]),
                    jnp.maximum(y[2 * l:3 * l], y[3 * l:4 * l]))
    o_ref[...] = jnp.maximum(m + b_ref[...], 0.0).astype(o_ref.dtype)


def conv_relu_pool(a, w_p, b_p):
    m4, k = a.shape
    kp, c = w_p.shape
    assert k == kp and m4 % 4 == 0
    l = m4 // 4
    cost = pl.CostEstimate(
        flops=2 * m4 * k * c, transcendentals=0,
        bytes_accessed=a.size * 2 + w_p.size * 2 + b_p.size * 4 + l * c * 2)
    return pl.pallas_call(
        _conv_relu_pool_kernel,
        out_shape=jax.ShapeDtypeStruct((l, c), jnp.bfloat16),
        in_specs=[_VMEM, _VMEM, _VMEM],
        out_specs=_VMEM,
        cost_estimate=cost,
    )(a, w_p, b_p)


# ----------------------------------------------------------------------------
# Kernel 2: the whole classifier head in one call (fc1+ReLU -> fc2+ReLU -> fc3).
# ----------------------------------------------------------------------------
def _mlp_kernel(x_ref, w1_ref, b1_ref, w2_ref, b2_ref, w3_ref, b3_ref, o_ref):
    h = jnp.dot(x_ref[...], w1_ref[...], preferred_element_type=jnp.float32)
    h = jnp.maximum(h + b1_ref[...], 0.0).astype(jnp.bfloat16)
    # TODO(synk): nn.Dropout(0.5) is identity in eval mode; training parity would
    # need pltpu.prng_seed / pltpu.prng_random_bits masking here.
    h = jnp.dot(h, w2_ref[...], preferred_element_type=jnp.float32)
    h = jnp.maximum(h + b2_ref[...], 0.0).astype(jnp.bfloat16)
    o_ref[...] = (jnp.dot(h, w3_ref[...], preferred_element_type=jnp.float32)
                  + b3_ref[...]).astype(o_ref.dtype)


def mlp_forward(x, p1, p2, p3):
    n = x.shape[0]
    n_out = p3["w"].shape[1]
    flops = 2 * n * (p1["w"].shape[0] * p1["w"].shape[1]
                     + p2["w"].shape[0] * p2["w"].shape[1]
                     + p3["w"].shape[0] * p3["w"].shape[1])
    bytes_acc = (x.size * 2 + (p1["w"].size + p2["w"].size + p3["w"].size) * 2
                 + (p1["b"].size + p2["b"].size + p3["b"].size) * 4 + n * n_out * 4)
    cost = pl.CostEstimate(flops=flops, transcendentals=0, bytes_accessed=bytes_acc)
    return pl.pallas_call(
        _mlp_kernel,
        out_shape=jax.ShapeDtypeStruct((n, n_out), jnp.float32),
        in_specs=[_VMEM] * 7,
        out_specs=_VMEM,
        cost_estimate=cost,
    )(x, p1["w"], p1["b"], p2["w"], p2["b"], p3["w"], p3["b"])


# ----------------------------------------------------------------------------
# Glue: im2col patches pre-ordered into 2x2-pool quarters (one fused XLA gather
# + one small transpose per layer), feature dim channel-major / tap-minor.
# ----------------------------------------------------------------------------
def _patches_pool_order(x_nhwc, kh=3, kw=3):
    n, h, w, _ = x_nhwc.shape
    p = jax.lax.conv_general_dilated_patches(
        x_nhwc, filter_shape=(kh, kw), window_strides=(1, 1),
        padding=((kh // 2, kh // 2), (kw // 2, kw // 2)),
        dimension_numbers=("NHWC", "HWIO", "NHWC"))          # (n, h, w, c*kh*kw)
    k = p.shape[-1]
    p = p.reshape(n, h // 2, 2, w // 2, 2, k)                # (n, y', dy, x', dx, k)
    p = jnp.transpose(p, (2, 4, 0, 1, 3, 5))                 # (dy, dx, n, y', x', k)
    return p.reshape(n * h * w, k)


def conv_block(x_nhwc, p):
    """One Conv2d(3x3,pad=1)+ReLU+MaxPool2 block: NHWC bf16 in, pooled NHWC bf16 out."""
    n, h, w, _ = x_nhwc.shape
    a = _patches_pool_order(x_nhwc)
    if p["k_pad"]:                                           # conv1 only: K 27 -> 32
        a = jnp.pad(a, ((0, 0), (0, p["k_pad"])))
    c = p["w"].shape[1]
    y = conv_relu_pool(a, p["w"], p["b"])                    # (n*(h//2)*(w//2), c)
    return y.reshape(n, h // 2, w // 2, c)


# ----------------------------------------------------------------------------
# Forward pass (matches the PyTorch nn.Sequential, eval semantics)
# ----------------------------------------------------------------------------
def net_forward(x_nchw, params):
    x = jnp.transpose(x_nchw, (0, 2, 3, 1)).astype(jnp.bfloat16)   # NCHW -> NHWC, bf16
    for name in ("conv1", "conv2", "conv3"):
        x = conv_block(x, params[name])
    n = x.shape[0]
    # NHWC flatten; fc1's columns were pre-permuted to the PyTorch NCHW order.
    x = x.reshape(n, -1)
    return mlp_forward(x, params["fc1"], params["fc2"], params["fc3"])


# ----------------------------------------------------------------------------
# Parameters: PyTorch-layout init + one-time matmul-ready relayout
# ----------------------------------------------------------------------------
def init_params(key):
    def conv(k, ci, co, ks=3):
        k1, k2 = jax.random.split(k)
        fan = ci * ks * ks
        return {"w": jax.random.normal(k1, (co, ci, ks, ks), jnp.float32) / math.sqrt(fan),
                "b": 0.05 * jax.random.normal(k2, (co,), jnp.float32)}

    def linear(k, fi, fo):
        k1, k2 = jax.random.split(k)
        return {"w": jax.random.normal(k1, (fo, fi), jnp.float32) / math.sqrt(fi),
                "b": 0.05 * jax.random.normal(k2, (fo,), jnp.float32)}

    ks = jax.random.split(key, 6)
    return {"conv1": conv(ks[0], 3, 16), "conv2": conv(ks[1], 16, 32),
            "conv3": conv(ks[2], 32, 64),
            "fc1": linear(ks[3], 1024, 256), "fc2": linear(ks[4], 256, 64),
            "fc3": linear(ks[5], 64, 10)}


def prepare_params(params):
    """One-time weight relayout OUTSIDE the forward: (K, N) order, bf16 weights,
    f32 (1, N) biases; conv1's K padded to the bf16 sublane granularity (16)."""
    def conv_pack(name):
        w = params[name]["w"]                                # (co, ci, kh, kw)
        co, ci, kh, kw = w.shape
        # row index = c*kh*kw + i*kw + j (matches conv_general_dilated_patches)
        w_kn = jnp.transpose(w, (1, 2, 3, 0)).reshape(ci * kh * kw, co)
        k_pad = (-w_kn.shape[0]) % 16
        if k_pad:
            w_kn = jnp.pad(w_kn, ((0, k_pad), (0, 0)))
        return {"w": w_kn.astype(jnp.bfloat16),
                "b": params[name]["b"].astype(jnp.float32).reshape(1, co),
                "k_pad": k_pad}

    def fc_pack(w_kn, b):
        return {"w": w_kn.astype(jnp.bfloat16),
                "b": b.astype(jnp.float32).reshape(1, -1)}

    out = {name: conv_pack(name) for name in ("conv1", "conv2", "conv3")}
    # Fold the PyTorch NCHW flatten into fc1's columns: new row = h*(W*C) + w*C + c.
    w1 = params["fc1"]["w"]                                  # (256, 1024) = (out, c*h*w)
    fo, fi = w1.shape
    c3 = params["conv3"]["w"].shape[0]
    s = int(math.isqrt(fi // c3))
    w1 = w1.reshape(fo, c3, s, s).transpose(2, 3, 1, 0).reshape(fi, fo)
    out["fc1"] = fc_pack(w1, params["fc1"]["b"])
    out["fc2"] = fc_pack(params["fc2"]["w"].T, params["fc2"]["b"])
    out["fc3"] = fc_pack(params["fc3"]["w"].T, params["fc3"]["b"])
    return out


# ----------------------------------------------------------------------------
# Plain-JAX f32 reference (same semantics, no Pallas) for sanity checks
# ----------------------------------------------------------------------------
def _maxpool2x2(x_nhwc):
    n, h, w, c = x_nhwc.shape
    return x_nhwc.reshape(n, h // 2, 2, w // 2, 2, c).max(axis=(2, 4))


def reference_forward(x_nchw, params):
    x = jnp.transpose(x_nchw, (0, 2, 3, 1))
    for name in ("conv1", "conv2", "conv3"):
        w = jnp.transpose(params[name]["w"], (2, 3, 1, 0))   # OIHW -> HWIO
        x = jax.lax.conv_general_dilated(
            x, w, (1, 1), ((1, 1), (1, 1)),
            dimension_numbers=("NHWC", "HWIO", "NHWC"))
        x = _maxpool2x2(jnp.maximum(x + params[name]["b"], 0.0))
    n = x.shape[0]
    x = jnp.transpose(x, (0, 3, 1, 2)).reshape(n, -1)        # torch NCHW flatten
    x = jnp.maximum(x @ params["fc1"]["w"].T + params["fc1"]["b"], 0.0)
    x = jnp.maximum(x @ params["fc2"]["w"].T + params["fc2"]["b"], 0.0)
    return x @ params["fc3"]["w"].T + params["fc3"]["b"]


# ----------------------------------------------------------------------------
if __name__ == "__main__":
    key = jax.random.PRNGKey(0)
    kx, kp = jax.random.split(key)
    # The module requires 3x32x32 input (Flatten -> Linear(1024,256) = 64ch * 4*4).
    x = jax.random.normal(kx, (2, 3, 32, 32), jnp.float32)

    params = init_params(kp)
    prepared = prepare_params(params)                        # one-time relayout

    fwd = jax.jit(functools.partial(net_forward, params=prepared))
    logits = jax.block_until_ready(fwd(x))
    assert logits.shape == (2, 10), logits.shape
    assert bool(jnp.all(jnp.isfinite(logits)))

    # Intermediate check (per review): conv1 fused GEMM+bias+ReLU+pool vs f32 ref.
    x_nhwc = jnp.transpose(x, (0, 2, 3, 1))
    c1 = jax.block_until_ready(
        jax.jit(lambda xi: conv_block(xi.astype(jnp.bfloat16), prepared["conv1"]))(x_nhwc))
    w1_hwio = jnp.transpose(params["conv1"]["w"], (2, 3, 1, 0))
    c1_ref = jax.lax.conv_general_dilated(
        x_nhwc, w1_hwio, (1, 1), ((1, 1), (1, 1)),
        dimension_numbers=("NHWC", "HWIO", "NHWC"))
    c1_ref = _maxpool2x2(jnp.maximum(c1_ref + params["conv1"]["b"], 0.0))
    err1 = float(jnp.max(jnp.abs(c1.astype(jnp.float32) - c1_ref)))
    assert err1 < 0.1, f"conv1 block: max |pallas - reference| = {err1}"

    # End-to-end check vs plain-JAX f32 reference (small bf16 MXU drift expected).
    ref = jax.block_until_ready(reference_forward(x, params))
    err = float(jnp.max(jnp.abs(logits - ref)))
    assert err < 0.25, f"max |pallas - reference| = {err}"

    print("KERNEL_OK")
</pallas_src>

<mosaic_0001>
module attributes {stable_mosaic.version = 11 : i64} {
  func.func @_conv_relu_pool_kernel(%arg0: memref<2048x32xbf16, #tpu.memory_space<vmem>>, %arg1: memref<32x16xbf16, #tpu.memory_space<vmem>>, %arg2: memref<1x16xf32, #tpu.memory_space<vmem>>, %arg3: memref<512x16xbf16, #tpu.memory_space<vmem>>) attributes {dimension_semantics = [], scalar_prefetch = 0 : i64, scratch_operands = 0 : i64, tpu.core_type = #tpu.core_type<tc>} {
    %c0 = arith.constant 0 : index
    %c0_0 = arith.constant 0 : index
    %0 = vector.load %arg0[%c0, %c0_0] : memref<2048x32xbf16, #tpu.memory_space<vmem>>, vector<2048x32xbf16>
    %c0_1 = arith.constant 0 : index
    %c0_2 = arith.constant 0 : index
    %1 = vector.load %arg1[%c0_1, %c0_2] : memref<32x16xbf16, #tpu.memory_space<vmem>>, vector<32x16xbf16>
    %cst = arith.constant dense<0.000000e+00> : vector<2048x16xf32>
    %2 = tpu.matmul %0, %1, %cst {dimension_numbers = #tpu.dot_dimension_numbers<[1], [0], [0], [1], [0, 0, 1, 1], [], []>} : vector<2048x32xbf16>, vector<32x16xbf16>, vector<2048x16xf32> -> vector<2048x16xf32>
    %3 = vector.extract_strided_slice %2 {offsets = [0, 0], sizes = [512, 16], strides = [1, 1]} : vector<2048x16xf32> to vector<512x16xf32>
    %4 = vector.extract_strided_slice %2 {offsets = [512, 0], sizes = [512, 16], strides = [1, 1]} : vector<2048x16xf32> to vector<512x16xf32>
    %5 = arith.maximumf %3, %4 : vector<512x16xf32>
    %6 = vector.extract_strided_slice %2 {offsets = [1024, 0], sizes = [512, 16], strides = [1, 1]} : vector<2048x16xf32> to vector<512x16xf32>
    %7 = vector.extract_strided_slice %2 {offsets = [1536, 0], sizes = [512, 16], strides = [1, 1]} : vector<2048x16xf32> to vector<512x16xf32>
    %8 = arith.maximumf %6, %7 : vector<512x16xf32>
    %9 = arith.maximumf %5, %8 : vector<512x16xf32>
    %c0_3 = arith.constant 0 : index
    %c0_4 = arith.constant 0 : index
    %10 = vector.load %arg2[%c0_3, %c0_4] : memref<1x16xf32, #tpu.memory_space<vmem>>, vector<1x16xf32>
    %11 = vector.broadcast %10 : vector<1x16xf32> to vector<512x16xf32>
    %12 = arith.addf %9, %11 : vector<512x16xf32>
    %cst_5 = arith.constant 0.000000e+00 : f32
    %13 = vector.broadcast %cst_5 : f32 to vector<512x16xf32>
    %14 = arith.maximumf %12, %13 : vector<512x16xf32>
    %15 = arith.truncf %14 : vector<512x16xf32> to vector<512x16xbf16>
    %c0_6 = arith.constant 0 : index
    %c0_7 = arith.constant 0 : index
    %16 = vector.load %arg3[%c0_6, %c0_7] : memref<512x16xbf16, #tpu.memory_space<vmem>>, vector<512x16xbf16>
    tpu.vector_store %arg3[%c0_6, %c0_7], %15 {strides = array<i32>} : memref<512x16xbf16, #tpu.memory_space<vmem>>, vector<512x16xbf16>,
    return
  }
}

module attributes {stable_mosaic.version = 11 : i64} {
  func.func @_conv_relu_pool_kernel(%arg0: memref<512x144xbf16, #tpu.memory_space<vmem>>, %arg1: memref<144x32xbf16, #tpu.memory_space<vmem>>, %arg2: memref<1x32xf32, #tpu.memory_space<vmem>>, %arg3: memref<128x32xbf16, #tpu.memory_space<vmem>>) attributes {dimension_semantics = [], scalar_prefetch = 0 : i64, scratch_operands = 0 : i64, tpu.core_type = #tpu.core_type<tc>} {
    %c0 = arith.constant 0 : index
    %c0_0 = arith.constant 0 : index
    %0 = vector.load %arg0[%c0, %c0_0] : memref<512x144xbf16, #tpu.memory_space<vmem>>, vector<512x144xbf16>
    %c0_1 = arith.constant 0 : index
    %c0_2 = arith.constant 0 : index
    %1 = vector.load %arg1[%c0_1, %c0_2] : memref<144x32xbf16, #tpu.memory_space<vmem>>, vector<144x32xbf16>
    %cst = arith.constant dense<0.000000e+00> : vector<512x32xf32>
    %2 = tpu.matmul %0, %1, %cst {dimension_numbers = #tpu.dot_dimension_numbers<[1], [0], [0], [1], [0, 0, 1, 1], [], []>} : vector<512x144xbf16>, vector<144x32xbf16>, vector<512x32xf32> -> vector<512x32xf32>
    %3 = vector.extract_strided_slice %2 {offsets = [0, 0], sizes = [128, 32], strides = [1, 1]} : vector<512x32xf32> to vector<128x32xf32>
    %4 = vector.extract_strided_slice %2 {offsets = [128, 0], sizes = [128, 32], strides = [1, 1]} : vector<512x32xf32> to vector<128x32xf32>
    %5 = arith.maximumf %3, %4 : vector<128x32xf32>
    %6 = vector.extract_strided_slice %2 {offsets = [256, 0], sizes = [128, 32], strides = [1, 1]} : vector<512x32xf32> to vector<128x32xf32>
    %7 = vector.extract_strided_slice %2 {offsets = [384, 0], sizes = [128, 32], strides = [1, 1]} : vector<512x32xf32> to vector<128x32xf32>
    %8 = arith.maximumf %6, %7 : vector<128x32xf32>
    %9 = arith.maximumf %5, %8 : vector<128x32xf32>
    %c0_3 = arith.constant 0 : index
    %c0_4 = arith.constant 0 : index
    %10 = vector.load %arg2[%c0_3, %c0_4] : memref<1x32xf32, #tpu.memory_space<vmem>>, vector<1x32xf32>
    %11 = vector.broadcast %10 : vector<1x32xf32> to vector<128x32xf32>
    %12 = arith.addf %9, %11 : vector<128x32xf32>
    %cst_5 = arith.constant 0.000000e+00 : f32
    %13 = vector.broadcast %cst_5 : f32 to vector<128x32xf32>
    %14 = arith.maximumf %12, %13 : vector<128x32xf32>
    %15 = arith.truncf %14 : vector<128x32xf32> to vector<128x32xbf16>
    %c0_6 = arith.constant 0 : index
    %c0_7 = arith.constant 0 : index
    %16 = vector.load %arg3[%c0_6, %c0_7] : memref<128x32xbf16, #tpu.memory_space<vmem>>, vector<128x32xbf16>
    tpu.vector_store %arg3[%c0_6, %c0_7], %15 {strides = array<i32>} : memref<128x32xbf16, #tpu.memory_space<vmem>>, vector<128x32xbf16>,
    return
  }
}

module attributes {stable_mosaic.version = 11 : i64} {
  func.func @_conv_relu_pool_kernel(%arg0: memref<128x288xbf16, #tpu.memory_space<vmem>>, %arg1: memref<288x64xbf16, #tpu.memory_space<vmem>>, %arg2: memref<1x64xf32, #tpu.memory_space<vmem>>, %arg3: memref<32x64xbf16, #tpu.memory_space<vmem>>) attributes {dimension_semantics = [], scalar_prefetch = 0 : i64, scratch_operands = 0 : i64, tpu.core_type = #tpu.core_type<tc>} {
    %c0 = arith.constant 0 : index
    %c0_0 = arith.constant 0 : index
    %0 = vector.load %arg0[%c0, %c0_0] : memref<128x288xbf16, #tpu.memory_space<vmem>>, vector<128x288xbf16>
    %c0_1 = arith.constant 0 : index
    %c0_2 = arith.constant 0 : index
    %1 = vector.load %arg1[%c0_1, %c0_2] : memref<288x64xbf16, #tpu.memory_space<vmem>>, vector<288x64xbf16>
    %cst = arith.constant dense<0.000000e+00> : vector<128x64xf32>
    %2 = tpu.matmul %0, %1, %cst {dimension_numbers = #tpu.dot_dimension_numbers<[1], [0], [0], [1], [0, 0, 1, 1], [], []>} : vector<128x288xbf16>, vector<288x64xbf16>, vector<128x64xf32> -> vector<128x64xf32>
    %3 = vector.extract_strided_slice %2 {offsets = [0, 0], sizes = [32, 64], strides = [1, 1]} : vector<128x64xf32> to vector<32x64xf32>
    %4 = vector.extract_strided_slice %2 {offsets = [32, 0], sizes = [32, 64], strides = [1, 1]} : vector<128x64xf32> to vector<32x64xf32>
    %5 = arith.maximumf %3, %4 : vector<32x64xf32>
    %6 = vector.extract_strided_slice %2 {offsets = [64, 0], sizes = [32, 64], strides = [1, 1]} : vector<128x64xf32> to vector<32x64xf32>
    %7 = vector.extract_strided_slice %2 {offsets = [96, 0], sizes = [32, 64], strides = [1, 1]} : vector<128x64xf32> to vector<32x64xf32>
    %8 = arith.maximumf %6, %7 : vector<32x64xf32>
    %9 = arith.maximumf %5, %8 : vector<32x64xf32>
    %c0_3 = arith.constant 0 : index
    %c0_4 = arith.constant 0 : index
    %10 = vector.load %arg2[%c0_3, %c0_4] : memref<1x64xf32, #tpu.memory_space<vmem>>, vector<1x64xf32>
    %11 = vector.broadcast %10 : vector<1x64xf32> to vector<32x64xf32>
    %12 = arith.addf %9, %11 : vector<32x64xf32>
    %cst_5 = arith.constant 0.000000e+00 : f32
    %13 = vector.broadcast %cst_5 : f32 to vector<32x64xf32>
    %14 = arith.maximumf %12, %13 : vector<32x64xf32>
    %15 = arith.truncf %14 : vector<32x64xf32> to vector<32x64xbf16>
    %c0_6 = arith.constant 0 : index
    %c0_7 = arith.constant 0 : index
    %16 = vector.load %arg3[%c0_6, %c0_7] : memref<32x64xbf16, #tpu.memory_space<vmem>>, vector<32x64xbf16>
    tpu.vector_store %arg3[%c0_6, %c0_7], %15 {strides = array<i32>} : memref<32x64xbf16, #tpu.memory_space<vmem>>, vector<32x64xbf16>,
    return
  }
}

module attributes {stable_mosaic.version = 11 : i64} {
  func.func @_mlp_kernel(%arg0: memref<2x1024xbf16, #tpu.memory_space<vmem>>, %arg1: memref<1024x256xbf16, #tpu.memory_space<vmem>>, %arg2: memref<1x256xf32, #tpu.memory_space<vmem>>, %arg3: memref<256x64xbf16, #tpu.memory_space<vmem>>, %arg4: memref<1x64xf32, #tpu.memory_space<vmem>>, %arg5: memref<64x10xbf16, #tpu.memory_space<vmem>>, %arg6: memref<1x10xf32, #tpu.memory_space<vmem>>, %arg7: memref<2x10xf32, #tpu.memory_space<vmem>>) attributes {dimension_semantics = [], scalar_prefetch = 0 : i64, scratch_operands = 0 : i64, tpu.core_type = #tpu.core_type<tc>} {
    %c0 = arith.constant 0 : index
    %c0_0 = arith.constant 0 : index
    %0 = vector.load %arg0[%c0, %c0_0] : memref<2x1024xbf16, #tpu.memory_space<vmem>>, vector<2x1024xbf16>
    %c0_1 = arith.constant 0 : index
    %c0_2 = arith.constant 0 : index
    %1 = vector.load %arg1[%c0_1, %c0_2] : memref<1024x256xbf16, #tpu.memory_space<vmem>>, vector<1024x256xbf16>
    %cst = arith.constant dense<0.000000e+00> : vector<2x256xf32>
    %2 = tpu.matmul %0, %1, %cst {dimension_numbers = #tpu.dot_dimension_numbers<[1], [0], [0], [1], [0, 0, 1, 1], [], []>} : vector<2x1024xbf16>, vector<1024x256xbf16>, vector<2x256xf32> -> vector<2x256xf32>
    %c0_3 = arith.constant 0 : index
    %c0_4 = arith.constant 0 : index
    %3 = vector.load %arg2[%c0_3, %c0_4] : memref<1x256xf32, #tpu.memory_space<vmem>>, vector<1x256xf32>
    %4 = vector.broadcast %3 : vector<1x256xf32> to vector<2x256xf32>
    %5 = arith.addf %2, %4 : vector<2x256xf32>
    %cst_5 = arith.constant 0.000000e+00 : f32
    %6 = vector.broadcast %cst_5 : f32 to vector<2x256xf32>
    %7 = arith.maximumf %5, %6 : vector<2x256xf32>
    %8 = arith.truncf %7 : vector<2x256xf32> to vector<2x256xbf16>
    %c0_6 = arith.constant 0 : index
    %c0_7 = arith.constant 0 : index
    %9 = vector.load %arg3[%c0_6, %c0_7] : memref<256x64xbf16, #tpu.memory_space<vmem>>, vector<256x64xbf16>
    %cst_8 = arith.constant dense<0.000000e+00> : vector<2x64xf32>
    %10 = tpu.matmul %8, %9, %cst_8 {dimension_numbers = #tpu.dot_dimension_numbers<[1], [0], [0], [1], [0, 0, 1, 1], [], []>} : vector<2x256xbf16>, vector<256x64xbf16>, vector<2x64xf32> -> vector<2x64xf32>
    %c0_9 = arith.constant 0 : index
    %c0_10 = arith.constant 0 : index
    %11 = vector.load %arg4[%c0_9, %c0_10] : memref<1x64xf32, #tpu.memory_space<vmem>>, vector<1x64xf32>
    %12 = vector.broadcast %11 : vector<1x64xf32> to vector<2x64xf32>
    %13 = arith.addf %10, %12 : vector<2x64xf32>
    %cst_11 = arith.constant 0.000000e+00 : f32
    %14 = vector.broadcast %cst_11 : f32 to vector<2x64xf32>
    %15 = arith.maximumf %13, %14 : vector<2x64xf32>
    %16 = arith.truncf %15 : vector<2x64xf32> to vector<2x64xbf16>
    %c0_12 = arith.constant 0 : index
    %c0_13 = arith.constant 0 : index
    %17 = vector.load %arg5[%c0_12, %c0_13] : memref<64x10xbf16, #tpu.memory_space<vmem>>, vector<64x10xbf16>
    %cst_14 = arith.constant dense<0.000000e+00> : vector<2x10xf32>
    %18 = tpu.matmul %16, %17, %cst_14 {dimension_numbers = #tpu.dot_dimension_numbers<[1], [0], [0], [1], [0, 0, 1, 1], [], []>} : vector<2x64xbf16>, vector<64x10xbf16>, vector<2x10xf32> -> vector<2x10xf32>
    %c0_15 = arith.constant 0 : index
    %c0_16 = arith.constant 0 : index
    %19 = vector.load %arg6[%c0_15, %c0_16] : memref<1x10xf32, #tpu.memory_space<vmem>>, vector<1x10xf32>
    %20 = vector.broadcast %19 : vector<1x10xf32> to vector<2x10xf32>
    %21 = arith.addf %18, %20 : vector<2x10xf32>
    %c0_17 = arith.constant 0 : index
    %c0_18 = arith.constant 0 : index
    %22 = vector.load %arg7[%c0_17, %c0_18] : memref<2x10xf32, #tpu.memory_space<vmem>>, vector<2x10xf32>
    tpu.vector_store %arg7[%c0_17, %c0_18], %21 {strides = array<i32>} : memref<2x10xf32, #tpu.memory_space<vmem>>, vector<2x10xf32>,
    return
  }
}

</mosaic_0001>

<llo_original>
// kernel: net_forward.5
$region0: #{net_forward.5}
  #allocation0 [shape = 'u32[]', space=smem, size = 0x4, offset = 0x4, fixed_abs, tag = 'smem constant byte address 0x4 - core index']
  #allocation1 [shape = 'u32[72,128]{1,0:T(1,128)}', space=vmem, size = 0x9000, scoped, tag = 'internal scratch']
  %s0 = inlined_call_operand.vmem [shape: bf16[512,144], index: 0, kind: input, shape index: {}]
  %s1 = inlined_call_operand.vmem [shape: bf16[144,32], index: 1, kind: input, shape index: {}]
  %s2 = inlined_call_operand.vmem [shape: f32[1,32], index: 2, kind: input, shape index: {}]
  %s3 = inlined_call_operand.vmem [shape: bf16[128,32], index: 3, kind: output, shape index: {}]
  %s4 = sld [smem:[#allocation0]]
  $region22: #{net_forward.5} parent=0
    _
  %s6 = ssub.s32 1, %s4
  %s7 = scalar_select 0, %s6, %s4
  // Predicated region
  $region2: #{net_forward.5} parent=0 // pred_check
    _
  $region3: #{net_forward.5} parent=0 // pred_check_branch
    %9 = sbr.rel (0) target = $region5
  $region4: #{net_forward.5} parent=0 // pred_region
    _
  $region5: #{net_forward.5} parent=0 // pred_fallthru
    _
  // Predicated region
  $region6: #{net_forward.5} parent=0 // pred_check
    _
  $region7: #{net_forward.5} parent=0 // pred_check_branch
    %11 = sbr.rel (0) target = $region9
  $region8: #{net_forward.5} parent=0 // pred_region
    _
  $region9: #{net_forward.5} parent=0 // pred_fallthru
    _
  // Predicated region
  $region10: #{net_forward.5} parent=0 // pred_check
    _
  $region11: #{net_forward.5} parent=0 // pred_check_branch
    %13 = sbr.rel (0) target = $region13
  $region12: #{net_forward.5} parent=0 // pred_region
    _
  $region13: #{net_forward.5} parent=0 // pred_fallthru
    _
  %v15 = vld [vmem:[%s0] sm:$0xff]
  %v16 = vld [vmem:[%s0 + $0x8] sm:$0xff]
  %v17 = vld [vmem:[%s0 + $0x10] sm:$0xff]
  %v18 = vld [vmem:[%s0 + $0x18] sm:$0xff]
  %v19 = vld [vmem:[%s0 + $0x20] sm:$0xff]
  %v20 = vld [vmem:[%s0 + $0x28] sm:$0xff]
  %v21 = vld [vmem:[%s0 + $0x30] sm:$0xff]
  %v22 = vld [vmem:[%s0 + $0x38] sm:$0xff]
  %v23 = vld [vmem:[%s0 + $0x40] sm:$0xff]
  %v24 = vld [vmem:[%s0 + $0x48] sm:$0xff]
  %v25 = vld [vmem:[%s0 + $0x50] sm:$0xff]
  %v26 = vld [vmem:[%s0 + $0x58] sm:$0xff]
  %v27 = vld [vmem:[%s0 + $0x60] sm:$0xff]
  %v28 = vld [vmem:[%s0 + $0x68] sm:$0xff]
  %v29 = vld [vmem:[%s0 + $0x70] sm:$0xff]
  %v30 = vld [vmem:[%s0 + $0x78] sm:$0xff]
  %v31 = vld [vmem:[%s0 + $0x80] sm:$0xff]
  %v32 = vld [vmem:[%s0 + $0x88] sm:$0xff]
  %v33 = vld [vmem:[%s0 + $0x90] sm:$0xff]
  %v34 = vld [vmem:[%s0 + $0x98] sm:$0xff]
  %v35 = vld [vmem:[%s0 + $0xa0] sm:$0xff]
  %v36 = vld [vmem:[%s0 + $0xa8] sm:$0xff]
  %v37 = vld [vmem:[%s0 + $0xb0] sm:$0xff]
  %v38 = vld [vmem:[%s0 + $0xb8] sm:$0xff]
  %v39 = vld [vmem:[%s0 + $0xc0] sm:$0xff]
  %v40 = vld [vmem:[%s0 + $0xc8] sm:$0xff]
  %v41 = vld [vmem:[%s0 + $0xd0] sm:$0xff]
  %v42 = vld [vmem:[%s0 + $0xd8] sm:$0xff]
  %v43 = vld [vmem:[%s0 + $0xe0] sm:$0xff]
  %v44 = vld [vmem:[%s0 + $0xe8] sm:$0xff]
  %v45 = vld [vmem:[%s0 + $0xf0] sm:$0xff]
  %v46 = vld [vmem:[%s0 + $0xf8] sm:$0xff]
  %v47 = vld [vmem:[%s0 + $0x100] sm:$0xff]
  %v48 = vld [vmem:[%s0 + $0x108] sm:$0xff]
  %v49 = vld [vmem:[%s0 + $0x110] sm:$0xff]
  %v50 = vld [vmem:[%s0 + $0x118] sm:$0xff]
  %v51 = vld [vmem:[%s0 + $0x120] sm:$0xff]
  %v52 = vld [vmem:[%s0 + $0x128] sm:$0xff]
  %v53 = vld [vmem:[%s0 + $0x130] sm:$0xff]
  %v54 = vld [vmem:[%s0 + $0x138] sm:$0xff]
  %v55 = vld [vmem:[%s0 + $0x140] sm:$0xff]
  %v56 = vld [vmem:[%s0 + $0x148] sm:$0xff]
  %v57 = vld [vmem:[%s0 + $0x150] sm:$0xff]
  %v58 = vld [vmem:[%s0 + $0x158] sm:$0xff]
  %v59 = vld [vmem:[%s0 + $0x160] sm:$0xff]
  %v60 = vld [vmem:[%s0 + $0x168] sm:$0xff]
  %v61 = vld [vmem:[%s0 + $0x170] sm:$0xff]
  %v62 = vld [vmem:[%s0 + $0x178] sm:$0xff]
  %v63 = vld [vmem:[%s0 + $0x180] sm:$0xff]
  %v64 = vld [vmem:[%s0 + $0x188] sm:$0xff]
  %v65 = vld [vmem:[%s0 + $0x190] sm:$0xff]
  %v66 = vld [vmem:[%s0 + $0x198] sm:$0xff]
  %v67 = vld [vmem:[%s0 + $0x1a0] sm:$0xff]
  %v68 = vld [vmem:[%s0 + $0x1a8] sm:$0xff]
  %v69 = vld [vmem:[%s0 + $0x1b0] sm:$0xff]
  %v70 = vld [vmem:[%s0 + $0x1b8] sm:$0xff]
  %v71 = vld [vmem:[%s0 + $0x1c0] sm:$0xff]
  %v72 = vld [vmem:[%s0 + $0x1c8] sm:$0xff]
  %v73 = vld [vmem:[%s0 + $0x1d0] sm:$0xff]
  %v74 = vld [vmem:[%s0 + $0x1d8] sm:$0xff]
  %v75 = vld [vmem:[%s0 + $0x1e0] sm:$0xff]
  %v76 = vld [vmem:[%s0 + $0x1e8] sm:$0xff]
  %v77 = vld [vmem:[%s0 + $0x1f0] sm:$0xff]
  %v78 = vld [vmem:[%s0 + $0x1f8] sm:$0xff]
  %v79 = vld [vmem:[%s1] sm:$0xf]
  %v80 = vld [vmem:[%s1 + $0x4] sm:$0xf]
  %v81 = vld [vmem:[%s1 + $0x8] sm:$0xf]
  %v82 = vld [vmem:[%s1 + $0xc] sm:$0xf]
  %v83 = vld [vmem:[%s1 + $0x10] sm:$0xf]
  %v84 = vld [vmem:[%s1 + $0x14] sm:$0xf]
  %v85 = vld [vmem:[%s1 + $0x18] sm:$0xf]
  %v86 = vld [vmem:[%s1 + $0x1c] sm:$0xf]
  %v87 = vld [vmem:[%s1 + $0x20] sm:$0xf]
  %v88 = vld [vmem:[%s1 + $0x24] sm:$0xf]
  %v89 = vld [vmem:[%s1 + $0x28] sm:$0xf]
  %v90 = vld [vmem:[%s1 + $0x2c] sm:$0xf]
  %v91 = vld [vmem:[%s1 + $0x30] sm:$0xf]
  %v92 = vld [vmem:[%s1 + $0x34] sm:$0xf]
  %v93 = vld [vmem:[%s1 + $0x38] sm:$0xf]
  %v94 = vld [vmem:[%s1 + $0x3c] sm:$0xf]
  %v95 = vld [vmem:[%s1 + $0x40] sm:$0xf]
  %v96 = vld [vmem:[%s1 + $0x44] sm:$0xf]
  %v161 = vunpack.c.l.b16 %v15
  %v162 = vunpack.c.h.b16 %v15
  %v163 = vunpack.c.l.b16 %v16
  %v164 = vunpack.c.h.b16 %v16
  %v165 = vunpack.c.l.b16 %v17
  %v166 = vunpack.c.h.b16 %v17
  %v167 = vunpack.c.l.b16 %v18
  %v168 = vunpack.c.h.b16 %v18
  %v169 = vunpack.c.l.b16 %v19
  %v170 = vunpack.c.h.b16 %v19
  %v171 = vunpack.c.l.b16 %v20
  %v172 = vunpack.c.h.b16 %v20
  %v173 = vunpack.c.l.b16 %v21
  %v174 = vunpack.c.h.b16 %v21
  %v175 = vunpack.c.l.b16 %v22
  %v176 = vunpack.c.h.b16 %v22
  %v177 = vunpack.c.l.b16 %v23
  %v178 = vunpack.c.h.b16 %v23
  %v179 = vunpack.c.l.b16 %v24
  %v180 = vunpack.c.h.b16 %v24
  %v181 = vunpack.c.l.b16 %v25
  %v182 = vunpack.c.h.b16 %v25
  %v183 = vunpack.c.l.b16 %v26
  %v184 = vunpack.c.h.b16 %v26
  %v185 = vunpack.c.l.b16 %v27
  %v186 = vunpack.c.h.b16 %v27
  %v187 = vunpack.c.l.b16 %v28
  %v188 = vunpack.c.h.b16 %v28
  %v189 = vunpack.c.l.b16 %v29
  %v190 = vunpack.c.h.b16 %v29
  %v191 = vunpack.c.l.b16 %v30
  %v192 = vunpack.c.h.b16 %v30
  %v193 = vunpack.c.l.b16 %v31
  %v194 = vunpack.c.h.b16 %v31
  %v195 = vunpack.c.l.b16 %v32
  %v196 = vunpack.c.h.b16 %v32
  %v197 = vunpack.c.l.b16 %v33
  %v198 = vunpack.c.h.b16 %v33
  %v199 = vunpack.c.l.b16 %v34
  %v200 = vunpack.c.h.b16 %v34
  %v201 = vunpack.c.l.b16 %v35
  %v202 = vunpack.c.h.b16 %v35
  %v203 = vunpack.c.l.b16 %v36
  %v204 = vunpack.c.h.b16 %v36
  %v205 = vunpack.c.l.b16 %v37
  %v206 = vunpack.c.h.b16 %v37
  %v207 = vunpack.c.l.b16 %v38
  %v208 = vunpack.c.h.b16 %v38
  %v209 = vunpack.c.l.b16 %v39
  %v210 = vunpack.c.h.b16 %v39
  %v211 = vunpack.c.l.b16 %v40
  %v212 = vunpack.c.h.b16 %v40
  %v213 = vunpack.c.l.b16 %v41
  %v214 = vunpack.c.h.b16 %v41
  %v215 = vunpack.c.l.b16 %v42
  %v216 = vunpack.c.h.b16 %v42
  %v217 = vunpack.c.l.b16 %v43
  %v218 = vunpack.c.h.b16 %v43
  %v219 = vunpack.c.l.b16 %v44
  %v220 = vunpack.c.h.b16 %v44
  %v221 = vunpack.c.l.b16 %v45
  %v222 = vunpack.c.h.b16 %v45
  %v223 = vunpack.c.l.b16 %v46
  %v224 = vunpack.c.h.b16 %v46
  %v225 = vunpack.c.l.b16 %v47
  %v226 = vunpack.c.h.b16 %v47
  %v227 = vunpack.c.l.b16 %v48
  %v228 = vunpack.c.h.b16 %v48
  %v229 = vunpack.c.l.b16 %v49
  %v230 = vunpack.c.h.b16 %v49
  %v231 = vunpack.c.l.b16 %v50
  %v232 = vunpack.c.h.b16 %v50
  %v233 = vunpack.c.l.b16 %v51
  %v234 = vunpack.c.h.b16 %v51
  %v235 = vunpack.c.l.b16 %v52
  %v236 = vunpack.c.h.b16 %v52
  %v237 = vunpack.c.l.b16 %v53
  %v238 = vunpack.c.h.b16 %v53
  %v239 = vunpack.c.l.b16 %v54
  %v240 = vunpack.c.h.b16 %v54
  %v241 = vunpack.c.l.b16 %v55
  %v242 = vunpack.c.h.b16 %v55
  %v243 = vunpack.c.l.b16 %v56
  %v244 = vunpack.c.h.b16 %v56
  %v245 = vunpack.c.l.b16 %v57
  %v246 = vunpack.c.h.b16 %v57
  %v247 = vunpack.c.l.b16 %v58
  %v248 = vunpack.c.h.b16 %v58
  %v249 = vunpack.c.l.b16 %v59
  %v250 = vunpack.c.h.b16 %v59
  %v251 = vunpack.c.l.b16 %v60
  %v252 = vunpack.c.h.b16 %v60
  %v253 = vunpack.c.l.b16 %v61
  %v254 = vunpack.c.h.b16 %v61
  %v255 = vunpack.c.l.b16 %v62
  %v256 = vunpack.c.h.b16 %v62
  %v257 = vunpack.c.l.b16 %v63
  %v258 = vunpack.c.h.b16 %v63
  %v259 = vunpack.c.l.b16 %v64
  %v260 = vunpack.c.h.b16 %v64
  %v261 = vunpack.c.l.b16 %v65
  %v262 = vunpack.c.h.b16 %v65
  %v263 = vunpack.c.l.b16 %v66
  %v264 = vunpack.c.h.b16 %v66
  %v265 = vunpack.c.l.b16 %v67
  %v266 = vunpack.c.h.b16 %v67
  %v267 = vunpack.c.l.b16 %v68
  %v268 = vunpack.c.h.b16 %v68
  %v269 = vunpack.c.l.b16 %v69
  %v270 = vunpack.c.h.b16 %v69
  %v271 = vunpack.c.l.b16 %v70
  %v272 = vunpack.c.h.b16 %v70
  %v273 = vunpack.c.l.b16 %v71
  %v274 = vunpack.c.h.b16 %v71
  %v275 = vunpack.c.l.b16 %v72
  %v276 = vunpack.c.h.b16 %v72
  %v277 = vunpack.c.l.b16 %v73
  %v278 = vunpack.c.h.b16 %v73
  %v279 = vunpack.c.l.b16 %v74
  %v280 = vunpack.c.h.b16 %v74
  %v281 = vunpack.c.l.b16 %v75
  %v282 = vunpack.c.h.b16 %v75
  %v283 = vunpack.c.l.b16 %v76
  %v284 = vunpack.c.h.b16 %v76
  %v285 = vunpack.c.l.b16 %v77
  %v286 = vunpack.c.h.b16 %v77
  %v287 = vunpack.c.l.b16 %v78
  %v288 = vunpack.c.h.b16 %v78
  %v289 = vpack.c.b16 %v163, %v161
  %v290 = vpack.c.b16 %v164, %v162
  %v291 = vpack.c.b16 %v167, %v165
  %v292 = vpack.c.b16 %v168, %v166
  %v293 = vpack.c.b16 %v171, %v169
  %v294 = vpack.c.b16 %v172, %v170
  %v295 = vpack.c.b16 %v175, %v173
  %v296 = vpack.c.b16 %v176, %v174
  %v297 = vpack.c.b16 %v179, %v177
  %v298 = vpack.c.b16 %v180, %v178
  %v299 = vpack.c.b16 %v183, %v181
  %v300 = vpack.c.b16 %v184, %v182
  %v301 = vpack.c.b16 %v187, %v185
  %v302 = vpack.c.b16 %v188, %v186
  %v303 = vpack.c.b16 %v191, %v189
  %v304 = vpack.c.b16 %v192, %v190
  %v305 = vpack.c.b16 %v195, %v193
  %v306 = vpack.c.b16 %v196, %v194
  %v307 = vpack.c.b16 %v199, %v197
  %v308 = vpack.c.b16 %v200, %v198
  %v309 = vpack.c.b16 %v203, %v201
  %v310 = vpack.c.b16 %v204, %v202
  %v311 = vpack.c.b16 %v207, %v205
  %v312 = vpack.c.b16 %v208, %v206
  %v313 = vpack.c.b16 %v211, %v209
  %v314 = vpack.c.b16 %v212, %v210
  %v315 = vpack.c.b16 %v215, %v213
  %v316 = vpack.c.b16 %v216, %v214
  %v317 = vpack.c.b16 %v219, %v217
  %v318 = vpack.c.b16 %v220, %v218
  %v319 = vpack.c.b16 %v223, %v221
  %v320 = vpack.c.b16 %v224, %v222
  %v321 = vpack.c.b16 %v227, %v225
  %v322 = vpack.c.b16 %v228, %v226
  %v323 = vpack.c.b16 %v231, %v229
  %v324 = vpack.c.b16 %v232, %v230
  %v325 = vpack.c.b16 %v235, %v233
  %v326 = vpack.c.b16 %v236, %v234
  %v327 = vpack.c.b16 %v239, %v237
  %v328 = vpack.c.b16 %v240, %v238
  %v329 = vpack.c.b16 %v243, %v241
  %v330 = vpack.c.b16 %v244, %v242
  %v331 = vpack.c.b16 %v247, %v245
  %v332 = vpack.c.b16 %v248, %v246
  %v333 = vpack.c.b16 %v251, %v249
  %v334 = vpack.c.b16 %v252, %v250
  %v335 = vpack.c.b16 %v255, %v253
  %v336 = vpack.c.b16 %v256, %v254
  %v337 = vpack.c.b16 %v259, %v257
  %v338 = vpack.c.b16 %v260, %v258
  %v339 = vpack.c.b16 %v263, %v261
  %v340 = vpack.c.b16 %v264, %v262
  %v341 = vpack.c.b16 %v267, %v265
  %v342 = vpack.c.b16 %v268, %v266
  %v343 = vpack.c.b16 %v271, %v269
  %v344 = vpack.c.b16 %v272, %v270
  %v345 = vpack.c.b16 %v275, %v273
  %v346 = vpack.c.b16 %v276, %v274
  %v347 = vpack.c.b16 %v279, %v277
  %v348 = vpack.c.b16 %v280, %v278
  %v349 = vpack.c.b16 %v283, %v281
  %v350 = vpack.c.b16 %v284, %v282
  %v351 = vpack.c.b16 %v287, %v285
  %v352 = vpack.c.b16 %v288, %v286
  %v403 = vunpack.c.l.b16 %v79
  %v404 = vunpack.c.l.b16 %v80
  %v405 = vunpack.c.l.b16 %v81
  %v406 = vunpack.c.l.b16 %v82
  %v407 = vunpack.c.l.b16 %v83
  %v408 = vunpack.c.l.b16 %v84
  %v409 = vunpack.c.l.b16 %v85
  %v410 = vunpack.c.l.b16 %v86
  %v411 = vunpack.c.l.b16 %v87
  %v412 = vunpack.c.l.b16 %v88
  %v413 = vunpack.c.l.b16 %v89
  %v414 = vunpack.c.l.b16 %v90
  %v415 = vunpack.c.l.b16 %v91
  %v416 = vunpack.c.l.b16 %v92
  %v417 = vunpack.c.l.b16 %v93
  %v418 = vunpack.c.l.b16 %v94
  %v419 = vunpack.c.l.b16 %v95
  %v420 = vunpack.c.l.b16 %v96
  %v421 = vpack.c.b16 %v404, %v403
  %v422 = vpack.c.b16 %v406, %v405
  %v423 = vpack.c.b16 %v408, %v407
  %v424 = vpack.c.b16 %v410, %v409
  %v425 = vpack.c.b16 %v412, %v411
  %v426 = vpack.c.b16 %v414, %v413
  %v427 = vpack.c.b16 %v416, %v415
  %v428 = vpack.c.b16 %v418, %v417
  %v429 = vpack.c.b16 %v420, %v419
  %vm439 = vcmask 130048
  %v441 = vsel %vm439, %v290, 0
  %v444 = vsel %vm439, %v292, 0
  %v447 = vsel %vm439, %v294, 0
  %v450 = vsel %vm439, %v296, 0
  %v453 = vsel %vm439, %v298, 0
  %v456 = vsel %vm439, %v300, 0
  %v459 = vsel %vm439, %v302, 0
  %v462 = vsel %vm439, %v304, 0
  %v465 = vsel %vm439, %v306, 0
  %v468 = vsel %vm439, %v308, 0
  %v471 = vsel %vm439, %v310, 0
  %v474 = vsel %vm439, %v312, 0
  %v477 = vsel %vm439, %v314, 0
  %v480 = vsel %vm439, %v316, 0
  %v483 = vsel %vm439, %v318, 0
  %v486 = vsel %vm439, %v320, 0
  %v489 = vsel %vm439, %v322, 0
  %v492 = vsel %vm439, %v324, 0
  %v495 = vsel %vm439, %v326, 0
  %v498 = vsel %vm439, %v328, 0
  %v501 = vsel %vm439, %v330, 0
  %v504 = vsel %vm439, %v332, 0
  %v507 = vsel %vm439, %v334, 0
  %v510 = vsel %vm439, %v336, 0
  %v513 = vsel %vm439, %v338, 0
  %v516 = vsel %vm439, %v340, 0
  %v519 = vsel %vm439, %v342, 0
  %v522 = vsel %vm439, %v344, 0
  %v525 = vsel %vm439, %v346, 0
  %v528 = vsel %vm439, %v348, 0
  %v531 = vsel %vm439, %v350, 0
  %v534 = vsel %vm439, %v352, 0
  %536 = vmatpush.bf16.msra.mxu0 %v428
  %537 = vmatpush.bf16.msra.mxu0 %v427
  %538 = vmatpush.bf16.msra.mxu0 %v426
  %539 = vmatpush.bf16.msra.mxu0 %v425
  %540 = vmatpush.bf16.msra.mxu0 %v424
  %541 = vmatpush.bf16.msra.mxu0 %v423
  %542 = vmatpush.bf16.msra.mxu0 %v422
  %543 = vmatpush.bf16.msra.mxu0 %v421
  %544 = vmatmul.bf16.gmra.mxu0 %v289
  %v545 = vpop.f32.mrf.mxu0
  %v546 = vadd.f32 0.0, %v545
  %v547 = vpop.f32.mrf.mxu0
  %v548 = vadd.f32 0.0, %v547
  %549 = vmatmul.bf16.gmra.mxu0 %v291
  %v550 = vpop.f32.mrf.mxu0
  %v551 = vadd.f32 0.0, %v550
  %v552 = vpop.f32.mrf.mxu0
  %v553 = vadd.f32 0.0, %v552
  %554 = vmatmul.bf16.gmra.mxu0 %v293
  %v555 = vpop.f32.mrf.mxu0
  %v556 = vadd.f32 0.0, %v555
  %v557 = vpop.f32.mrf.mxu0
  %v558 = vadd.f32 0.0, %v557
  %559 = vmatmul.bf16.gmra.mxu0 %v295
  %v560 = vpop.f32.mrf.mxu0
  %v561 = vadd.f32 0.0, %v560
  %v562 = vpop.f32.mrf.mxu0
  %v563 = vadd.f32 0.0, %v562
  %564 = vmatmul.bf16.gmra.mxu0 %v297
  %v565 = vpop.f32.mrf.mxu0
  %v566 = vadd.f32 0.0, %v565
  %v567 = vpop.f32.mrf.mxu0
  %v568 = vadd.f32 0.0, %v567
  %569 = vmatmul.bf16.gmra.mxu0 %v299
  %v570 = vpop.f32.mrf.mxu0
  %v571 = vadd.f32 0.0, %v570
  %v572 = vpop.f32.mrf.mxu0
  %v573 = vadd.f32 0.0, %v572
  %574 = vmatmul.bf16.gmra.mxu0 %v301
  %v575 = vpop.f32.mrf.mxu0
  %v576 = vadd.f32 0.0, %v575
  %v577 = vpop.f32.mrf.mxu0
  %v578 = vadd.f32 0.0, %v577
  %579 = vmatmul.bf16.gmra.mxu0 %v303
  %v580 = vpop.f32.mrf.mxu0
  %v581 = vadd.f32 0.0, %v580
  %v582 = vpop.f32.mrf.mxu0
  %v583 = vadd.f32 0.0, %v582
  %584 = vmatmul.bf16.gmra.mxu0 %v305
  %v585 = vpop.f32.mrf.mxu0
  %v586 = vadd.f32 0.0, %v585
  %v587 = vpop.f32.mrf.mxu0
  %v588 = vadd.f32 0.0, %v587
  %589 = vmatmul.bf16.gmra.mxu0 %v307
  %v590 = vpop.f32.mrf.mxu0
  %v591 = vadd.f32 0.0, %v590
  %v592 = vpop.f32.mrf.mxu0
  %v593 = vadd.f32 0.0, %v592
  %594 = vmatmul.bf16.gmra.mxu0 %v309
  %v595 = vpop.f32.mrf.mxu0
  %v596 = vadd.f32 0.0, %v595
  %v597 = vpop.f32.mrf.mxu0
  %v598 = vadd.f32 0.0, %v597
  %599 = vmatmul.bf16.gmra.mxu0 %v311
  %v600 = vpop.f32.mrf.mxu0
  %v601 = vadd.f32 0.0, %v600
  %v602 = vpop.f32.mrf.mxu0
  %v603 = vadd.f32 0.0, %v602
  %604 = vmatmul.bf16.gmra.mxu0 %v313
  %v605 = vpop.f32.mrf.mxu0
  %v606 = vadd.f32 0.0, %v605
  %v607 = vpop.f32.mrf.mxu0
  %v608 = vadd.f32 0.0, %v607
  %609 = vmatmul.bf16.gmra.mxu0 %v315
  %v610 = vpop.f32.mrf.mxu0
  %v611 = vadd.f32 0.0, %v610
  %v612 = vpop.f32.mrf.mxu0
  %v613 = vadd.f32 0.0, %v612
  %614 = vmatmul.bf16.gmra.mxu0 %v317
  %v615 = vpop.f32.mrf.mxu0
  %v616 = vadd.f32 0.0, %v615
  %v617 = vpop.f32.mrf.mxu0
  %v618 = vadd.f32 0.0, %v617
  %619 = vmatmul.bf16.gmra.mxu0 %v319
  %v620 = vpop.f32.mrf.mxu0
  %v621 = vadd.f32 0.0, %v620
  %v622 = vpop.f32.mrf.mxu0
  %v623 = vadd.f32 0.0, %v622
  %624 = vmatmul.bf16.gmra.mxu0 %v321
  %v625 = vpop.f32.mrf.mxu0
  %v626 = vadd.f32 0.0, %v625
  %v627 = vpop.f32.mrf.mxu0
  %v628 = vadd.f32 0.0, %v627
  %629 = vmatmul.bf16.gmra.mxu0 %v323
  %v630 = vpop.f32.mrf.mxu0
  %v631 = vadd.f32 0.0, %v630
  %v632 = vpop.f32.mrf.mxu0
  %v633 = vadd.f32 0.0, %v632
  %634 = vmatmul.bf16.gmra.mxu0 %v325
  %v635 = vpop.f32.mrf.mxu0
  %v636 = vadd.f32 0.0, %v635
  %v637 = vpop.f32.mrf.mxu0
  %v638 = vadd.f32 0.0, %v637
  %639 = vmatmul.bf16.gmra.mxu0 %v327
  %v640 = vpop.f32.mrf.mxu0
  %v641 = vadd.f32 0.0, %v640
  %v642 = vpop.f32.mrf.mxu0
  %v643 = vadd.f32 0.0, %v642
  %644 = vmatmul.bf16.gmra.mxu0 %v329
  %v645 = vpop.f32.mrf.mxu0
  %v646 = vadd.f32 0.0, %v645
  %v647 = vpop.f32.mrf.mxu0
  %v648 = vadd.f32 0.0, %v647
  %649 = vmatmul.bf16.gmra.mxu0 %v331
  %v650 = vpop.f32.mrf.mxu0
  %v651 = vadd.f32 0.0, %v650
  %v652 = vpop.f32.mrf.mxu0
  %v653 = vadd.f32 0.0, %v652
  %654 = vmatmul.bf16.gmra.mxu0 %v333
  %v655 = vpop.f32.mrf.mxu0
  %v656 = vadd.f32 0.0, %v655
  %v657 = vpop.f32.mrf.mxu0
  %v658 = vadd.f32 0.0, %v657
  %659 = vmatmul.bf16.gmra.mxu0 %v335
  %v660 = vpop.f32.mrf.mxu0
  %v661 = vadd.f32 0.0, %v660
  %v662 = vpop.f32.mrf.mxu0
  %v663 = vadd.f32 0.0, %v662
  %664 = vmatmul.bf16.gmra.mxu0 %v337
  %v665 = vpop.f32.mrf.mxu0
  %v666 = vadd.f32 0.0, %v665
  %v667 = vpop.f32.mrf.mxu0
  %v668 = vadd.f32 0.0, %v667
  %669 = vmatmul.bf16.gmra.mxu0 %v339
  %v670 = vpop.f32.mrf.mxu0
  %v671 = vadd.f32 0.0, %v670
  %v672 = vpop.f32.mrf.mxu0
  %v673 = vadd.f32 0.0, %v672
  %674 = vmatmul.bf16.gmra.mxu0 %v341
  %v675 = vpop.f32.mrf.mxu0
  %v676 = vadd.f32 0.0, %v675
  %v677 = vpop.f32.mrf.mxu0
  %v678 = vadd.f32 0.0, %v677
  %679 = vmatmul.bf16.gmra.mxu0 %v343
  %v680 = vpop.f32.mrf.mxu0
  %v681 = vadd.f32 0.0, %v680
  %v682 = vpop.f32.mrf.mxu0
  %v683 = vadd.f32 0.0, %v682
  %684 = vmatmul.bf16.gmra.mxu0 %v345
  %v685 = vpop.f32.mrf.mxu0
  %v686 = vadd.f32 0.0, %v685
  %v687 = vpop.f32.mrf.mxu0
  %v688 = vadd.f32 0.0, %v687
  %689 = vmatmul.bf16.gmra.mxu0 %v347
  %v690 = vpop.f32.mrf.mxu0
  %v691 = vadd.f32 0.0, %v690
  %v692 = vpop.f32.mrf.mxu0
  %v693 = vadd.f32 0.0, %v692
  %694 = vmatmul.bf16.gmra.mxu0 %v349
  %v695 = vpop.f32.mrf.mxu0
  %v696 = vadd.f32 0.0, %v695
  %v697 = vpop.f32.mrf.mxu0
  %v698 = vadd.f32 0.0, %v697
  %699 = vmatmul.bf16.gmra.mxu0 %v351
  %v700 = vpop.f32.mrf.mxu0
  %v701 = vadd.f32 0.0, %v700
  %v702 = vpop.f32.mrf.mxu0
  %v703 = vadd.f32 0.0, %v702
  %704 = vdwg.mxu0
  %705 = vmatpush.bf16.msra.mxu0 0
  %706 = vmatpush.bf16.msra.mxu0 0
  %707 = vmatpush.bf16.msra.mxu0 0
  %708 = vmatpush.bf16.msra.mxu0 0
  %709 = vmatpush.bf16.msra.mxu0 0
  %710 = vmatpush.bf16.msra.mxu0 0
  %711 = vmatpush.bf16.msra.mxu0 0
  %712 = vmatpush.bf16.msra.mxu0 %v429
  %713 = vmatmul.bf16.gmra.mxu0 %v441
  %v714 = vpop.f32.mrf.mxu0
  %v715 = vadd.f32 %v546, %v714
  %v716 = vpop.f32.mrf.mxu0
  %v717 = vadd.f32 %v548, %v716
  %718 = vmatmul.bf16.gmra.mxu0 %v444
  %v719 = vpop.f32.mrf.mxu0
  %v720 = vadd.f32 %v551, %v719
  %v721 = vpop.f32.mrf.mxu0
  %v722 = vadd.f32 %v553, %v721
  %723 = vmatmul.bf16.gmra.mxu0 %v447
  %v724 = vpop.f32.mrf.mxu0
  %v725 = vadd.f32 %v556, %v724
  %v726 = vpop.f32.mrf.mxu0
  %v727 = vadd.f32 %v558, %v726
  %728 = vmatmul.bf16.gmra.mxu0 %v450
  %v729 = vpop.f32.mrf.mxu0
  %v730 = vadd.f32 %v561, %v729
  %v731 = vpop.f32.mrf.mxu0
  %v732 = vadd.f32 %v563, %v731
  %733 = vmatmul.bf16.gmra.mxu0 %v453
  %v734 = vpop.f32.mrf.mxu0
  %v735 = vadd.f32 %v566, %v734
  %v736 = vpop.f32.mrf.mxu0
  %v737 = vadd.f32 %v568, %v736
  %738 = vmatmul.bf16.gmra.mxu0 %v456
  %v739 = vpop.f32.mrf.mxu0
  %v740 = vadd.f32 %v571, %v739
  %v741 = vpop.f32.mrf.mxu0
  %v742 = vadd.f32 %v573, %v741
  %743 = vmatmul.bf16.gmra.mxu0 %v459
  %v744 = vpop.f32.mrf.mxu0
  %v745 = vadd.f32 %v576, %v744
  %v746 = vpop.f32.mrf.mxu0
  %v747 = vadd.f32 %v578, %v746
  %748 = vmatmul.bf16.gmra.mxu0 %v462
  %v749 = vpop.f32.mrf.mxu0
  %v750 = vadd.f32 %v581, %v749
  %v751 = vpop.f32.mrf.mxu0
  %v752 = vadd.f32 %v583, %v751
  %753 = vmatmul.bf16.gmra.mxu0 %v465
  %v754 = vpop.f32.mrf.mxu0
  %v755 = vadd.f32 %v586, %v754
  %v756 = vpop.f32.mrf.mxu0
  %v757 = vadd.f32 %v588, %v756
  %758 = vmatmul.bf16.gmra.mxu0 %v468
  %v759 = vpop.f32.mrf.mxu0
  %v760 = vadd.f32 %v591, %v759
  %v761 = vpop.f32.mrf.mxu0
  %v762 = vadd.f32 %v593, %v761
  %763 = vmatmul.bf16.gmra.mxu0 %v471
  %v764 = vpop.f32.mrf.mxu0
  %v765 = vadd.f32 %v596, %v764
  %v766 = vpop.f32.mrf.mxu0
  %v767 = vadd.f32 %v598, %v766
  %768 = vmatmul.bf16.gmra.mxu0 %v474
  %v769 = vpop.f32.mrf.mxu0
  %v770 = vadd.f32 %v601, %v769
  %v771 = vpop.f32.mrf.mxu0
  %v772 = vadd.f32 %v603, %v771
  %773 = vmatmul.bf16.gmra.mxu0 %v477
  %v774 = vpop.f32.mrf.mxu0
  %v775 = vadd.f32 %v606, %v774
  %v776 = vpop.f32.mrf.mxu0
  %v777 = vadd.f32 %v608, %v776
  %778 = vmatmul.bf16.gmra.mxu0 %v480
  %v779 = vpop.f32.mrf.mxu0
  %v780 = vadd.f32 %v611, %v779
  %v781 = vpop.f32.mrf.mxu0
  %v782 = vadd.f32 %v613, %v781
  %783 = vmatmul.bf16.gmra.mxu0 %v483
  %v784 = vpop.f32.mrf.mxu0
  %v785 = vadd.f32 %v616, %v784
  %v786 = vpop.f32.mrf.mxu0
  %v787 = vadd.f32 %v618, %v786
  %788 = vmatmul.bf16.gmra.mxu0 %v486
  %v789 = vpop.f32.mrf.mxu0
  %v790 = vadd.f32 %v621, %v789
  %v791 = vpop.f32.mrf.mxu0
  %v792 = vadd.f32 %v623, %v791
  %793 = vmatmul.bf16.gmra.mxu0 %v489
  %v794 = vpop.f32.mrf.mxu0
  %v795 = vadd.f32 %v626, %v794
  %v796 = vpop.f32.mrf.mxu0
  %v797 = vadd.f32 %v628, %v796
  %798 = vmatmul.bf16.gmra.mxu0 %v492
  %v799 = vpop.f32.mrf.mxu0
  %v800 = vadd.f32 %v631, %v799
  %v801 = vpop.f32.mrf.mxu0
  %v802 = vadd.f32 %v633, %v801
  %803 = vmatmul.bf16.gmra.mxu0 %v495
  %v804 = vpop.f32.mrf.mxu0
  %v805 = vadd.f32 %v636, %v804
  %v806 = vpop.f32.mrf.mxu0
  %v807 = vadd.f32 %v638, %v806
  %808 = vmatmul.bf16.gmra.mxu0 %v498
  %v809 = vpop.f32.mrf.mxu0
  %v810 = vadd.f32 %v641, %v809
  %v811 = vpop.f32.mrf.mxu0
  %v812 = vadd.f32 %v643, %v811
  %813 = vmatmul.bf16.gmra.mxu0 %v501
  %v814 = vpop.f32.mrf.mxu0
  %v815 = vadd.f32 %v646, %v814
  %v816 = vpop.f32.mrf.mxu0
  %v817 = vadd.f32 %v648, %v816
  %818 = vmatmul.bf16.gmra.mxu0 %v504
  %v819 = vpop.f32.mrf.mxu0
  %v820 = vadd.f32 %v651, %v819
  %v821 = vpop.f32.mrf.mxu0
  %v822 = vadd.f32 %v653, %v821
  %823 = vmatmul.bf16.gmra.mxu0 %v507
  %v824 = vpop.f32.mrf.mxu0
  %v825 = vadd.f32 %v656, %v824
  %v826 = vpop.f32.mrf.mxu0
  %v827 = vadd.f32 %v658, %v826
  %828 = vmatmul.bf16.gmra.mxu0 %v510
  %v829 = vpop.f32.mrf.mxu0
  %v830 = vadd.f32 %v661, %v829
  %v831 = vpop.f32.mrf.mxu0
  %v832 = vadd.f32 %v663, %v831
  %833 = vmatmul.bf16.gmra.mxu0 %v513
  %v834 = vpop.f32.mrf.mxu0
  %v835 = vadd.f32 %v666, %v834
  %v836 = vpop.f32.mrf.mxu0
  %v837 = vadd.f32 %v668, %v836
  %838 = vmatmul.bf16.gmra.mxu0 %v516
  %v839 = vpop.f32.mrf.mxu0
  %v840 = vadd.f32 %v671, %v839
  %v841 = vpop.f32.mrf.mxu0
  %v842 = vadd.f32 %v673, %v841
  %843 = vmatmul.bf16.gmra.mxu0 %v519
  %v844 = vpop.f32.mrf.mxu0
  %v845 = vadd.f32 %v676, %v844
  %v846 = vpop.f32.mrf.mxu0
  %v847 = vadd.f32 %v678, %v846
  %848 = vmatmul.bf16.gmra.mxu0 %v522
  %v849 = vpop.f32.mrf.mxu0
  %v850 = vadd.f32 %v681, %v849
  %v851 = vpop.f32.mrf.mxu0
  %v852 = vadd.f32 %v683, %v851
  %853 = vmatmul.bf16.gmra.mxu0 %v525
  %v854 = vpop.f32.mrf.mxu0
  %v855 = vadd.f32 %v686, %v854
  %v856 = vpop.f32.mrf.mxu0
  %v857 = vadd.f32 %v688, %v856
  %858 = vmatmul.bf16.gmra.mxu0 %v528
  %v859 = vpop.f32.mrf.mxu0
  %v860 = vadd.f32 %v691, %v859
  %v861 = vpop.f32.mrf.mxu0
  %v862 = vadd.f32 %v693, %v861
  %863 = vmatmul.bf16.gmra.mxu0 %v531
  %v864 = vpop.f32.mrf.mxu0
  %v865 = vadd.f32 %v696, %v864
  %v866 = vpop.f32.mrf.mxu0
  %v867 = vadd.f32 %v698, %v866
  %868 = vmatmul.bf16.gmra.mxu0 %v534
  %v869 = vpop.f32.mrf.mxu0
  %v870 = vadd.f32 %v701, %v869
  %v871 = vpop.f32.mrf.mxu0
  %v872 = vadd.f32 %v703, %v871
  %873 = vdwg.mxu0
  %v874 = vmax.f32 %v715, %v755
  %v875 = vmax.f32 %v717, %v757
  %v876 = vmax.f32 %v720, %v760
  %v877 = vmax.f32 %v722, %v762
  %v878 = vmax.f32 %v725, %v765
  %v879 = vmax.f32 %v727, %v767
  %v880 = vmax.f32 %v730, %v770
  %v881 = vmax.f32 %v732, %v772
  %v882 = vmax.f32 %v735, %v775
  %v883 = vmax.f32 %v737, %v777
  %v884 = vmax.f32 %v740, %v780
  %v885 = vmax.f32 %v742, %v782
  %v886 = vmax.f32 %v745, %v785
  %v887 = vmax.f32 %v747, %v787
  %v888 = vmax.f32 %v750, %v790
  %v889 = vmax.f32 %v752, %v792
  %v890 = vmax.f32 %v795, %v835
  %v891 = vmax.f32 %v797, %v837
  %v892 = vmax.f32 %v800, %v840
  %v893 = vmax.f32 %v802, %v842
  %v894 = vmax.f32 %v805, %v845
  %v895 = vmax.f32 %v807, %v847
  %v896 = vmax.f32 %v810, %v850
  %v897 = vmax.f32 %v812, %v852
  %v898 = vmax.f32 %v815, %v855
  %v899 = vmax.f32 %v817, %v857
  %v900 = vmax.f32 %v820, %v860
  %v901 = vmax.f32 %v822, %v862
  %v902 = vmax.f32 %v825, %v865
  %v903 = vmax.f32 %v827, %v867
  %v904 = vmax.f32 %v830, %v870
  %v905 = vmax.f32 %v832, %v872
  %v906 = vmax.f32 %v874, %v890
  %v907 = vmax.f32 %v875, %v891
  %v908 = vmax.f32 %v876, %v892
  %v909 = vmax.f32 %v877, %v893
  %v910 = vmax.f32 %v878, %v894
  %v911 = vmax.f32 %v879, %v895
  %v912 = vmax.f32 %v880, %v896
  %v913 = vmax.f32 %v881, %v897
  %v914 = vmax.f32 %v882, %v898
  %v915 = vmax.f32 %v883, %v899
  %v916 = vmax.f32 %v884, %v900
  %v917 = vmax.f32 %v885, %v901
  %v918 = vmax.f32 %v886, %v902
  %v919 = vmax.f32 %v887, %v903
  %v920 = vmax.f32 %v888, %v904
  %v921 = vmax.f32 %v889, %v905
  %v922 = vld [vmem:[%s2] sm:$0x1]
  %v924 = vperm.slane %v922, 0
  %v926 = vadd.f32 %v906, %v924
  %v927 = vadd.f32 %v907, %v924
  %v928 = vadd.f32 %v908, %v924
  %v929 = vadd.f32 %v909, %v924
  %v930 = vadd.f32 %v910, %v924
  %v931 = vadd.f32 %v911, %v924
  %v932 = vadd.f32 %v912, %v924
  %v933 = vadd.f32 %v913, %v924
  %v934 = vadd.f32 %v914, %v924
  %v935 = vadd.f32 %v915, %v924
  %v936 = vadd.f32 %v916, %v924
  %v937 = vadd.f32 %v917, %v924
  %v938 = vadd.f32 %v918, %v924
  %v939 = vadd.f32 %v919, %v924
  %v940 = vadd.f32 %v920, %v924
  %v941 = vadd.f32 %v921, %v924
  %v942 = vmax.f32 %v926, 0.0
  %v943 = vmax.f32 %v927, 0.0
  %v944 = vmax.f32 %v928, 0.0
  %v945 = vmax.f32 %v929, 0.0
  %v946 = vmax.f32 %v930, 0.0
  %v947 = vmax.f32 %v931, 0.0
  %v948 = vmax.f32 %v932, 0.0
  %v949 = vmax.f32 %v933, 0.0
  %v950 = vmax.f32 %v934, 0.0
  %v951 = vmax.f32 %v935, 0.0
  %v952 = vmax.f32 %v936, 0.0
  %v953 = vmax.f32 %v937, 0.0
  %v954 = vmax.f32 %v938, 0.0
  %v955 = vmax.f32 %v939, 0.0
  %v956 = vmax.f32 %v940, 0.0
  %v957 = vmax.f32 %v941, 0.0
  %v958 = vpack.c.bf16 %v942, %v942
  %v959 = vpack.c.bf16 %v943, %v943
  %v960 = vpack.c.bf16 %v944, %v944
  %v961 = vpack.c.bf16 %v945, %v945
  %v962 = vpack.c.bf16 %v946, %v946
  %v963 = vpack.c.bf16 %v947, %v947
  %v964 = vpack.c.bf16 %v948, %v948
  %v965 = vpack.c.bf16 %v949, %v949
  %v966 = vpack.c.bf16 %v950, %v950
  %v967 = vpack.c.bf16 %v951, %v951
  %v968 = vpack.c.bf16 %v952, %v952
  %v969 = vpack.c.bf16 %v953, %v953
  %v970 = vpack.c.bf16 %v954, %v954
  %v971 = vpack.c.bf16 %v955, %v955
  %v972 = vpack.c.bf16 %v956, %v956
  %v973 = vpack.c.bf16 %v957, %v957
  %vm974 = vcmask 257024
  %975 = vst.msk [vmem:[%s3] sm:$0xf] %vm974, %v958
  %976 = vst.msk [vmem:[%s3 + $0x4] sm:$0xf] %vm974, %v959
  %977 = vst.msk [vmem:[%s3 + $0x8] sm:$0xf] %vm974, %v960
  %978 = vst.msk [vmem:[%s3 + $0xc] sm:$0xf] %vm974, %v961
  %979 = vst.msk [vmem:[%s3 + $0x10] sm:$0xf] %vm974, %v962
  %980 = vst.msk [vmem:[%s3 + $0x14] sm:$0xf] %vm974, %v963
  %981 = vst.msk [vmem:[%s3 + $0x18] sm:$0xf] %vm974, %v964
  %982 = vst.msk [vmem:[%s3 + $0x1c] sm:$0xf] %vm974, %v965
  %983 = vst.msk [vmem:[%s3 + $0x20] sm:$0xf] %vm974, %v966
  %984 = vst.msk [vmem:[%s3 + $0x24] sm:$0xf] %vm974, %v967
  %985 = vst.msk [vmem:[%s3 + $0x28] sm:$0xf] %vm974, %v968
  %986 = vst.msk [vmem:[%s3 + $0x2c] sm:$0xf] %vm974, %v969
  %987 = vst.msk [vmem:[%s3 + $0x30] sm:$0xf] %vm974, %v970
  %988 = vst.msk [vmem:[%s3 + $0x34] sm:$0xf] %vm974, %v971
  %989 = vst.msk [vmem:[%s3 + $0x38] sm:$0xf] %vm974, %v972
  %990 = vst.msk [vmem:[%s3 + $0x3c] sm:$0xf] %vm974, %v973
  // Predicated region
  $region14: #{net_forward.5} parent=0 // pred_check
    _
  $region15: #{net_forward.5} parent=0 // pred_check_branch
    %992 = sbr.rel (0) target = $region17
  $region16: #{net_forward.5} parent=0 // pred_region
    _
  $region17: #{net_forward.5} parent=0 // pred_fallthru
    _
  // Predicated region
  $region18: #{net_forward.5} parent=0 // pred_check
    _
  $region19: #{net_forward.5} parent=0 // pred_check_branch
    %994 = sbr.rel (0) target = $region21
  $region20: #{net_forward.5} parent=0 // pred_region
    _
  $region21: #{net_forward.5} parent=0 // pred_fallthru
    _

// kernel: net_forward.4
$region0: #{net_forward.4}
  #allocation0 [shape = 'u32[]', space=smem, size = 0x4, offset = 0x4, fixed_abs, tag = 'smem constant byte address 0x4 - core index']
  #allocation1 [shape = 'u32[72,128]{1,0:T(1,128)}', space=vmem, size = 0x9000, scoped, tag = 'internal scratch']
  %s0 = inlined_call_operand.vmem [shape: bf16[2048,32], index: 0, kind: input, shape index: {}]
  %s1 = inlined_call_operand.vmem [shape: bf16[32,16], index: 1, kind: input, shape index: {}]
  %s2 = inlined_call_operand.vmem [shape: f32[1,16], index: 2, kind: input, shape index: {}]
  %s3 = inlined_call_operand.vmem [shape: bf16[512,16], index: 3, kind: output, shape index: {}]
  %s4 = sld [smem:[#allocation0]]
  $region22: #{net_forward.4} parent=0
    _
  %s6 = ssub.s32 1, %s4
  %s7 = scalar_select 0, %s6, %s4
  // Predicated region
  $region2: #{net_forward.4} parent=0 // pred_check
    _
  $region3: #{net_forward.4} parent=0 // pred_check_branch
    %9 = sbr.rel (0) target = $region5
  $region4: #{net_forward.4} parent=0 // pred_region
    _
  $region5: #{net_forward.4} parent=0 // pred_fallthru
    _
  // Predicated region
  $region6: #{net_forward.4} parent=0 // pred_check
    _
  $region7: #{net_forward.4} parent=0 // pred_check_branch
    %11 = sbr.rel (0) target = $region9
  $region8: #{net_forward.4} parent=0 // pred_region
    _
  $region9: #{net_forward.4} parent=0 // pred_fallthru
    _
  // Predicated region
  $region10: #{net_forward.4} parent=0 // pred_check
    _
  $region11: #{net_forward.4} parent=0 // pred_check_branch
    %13 = sbr.rel (0) target = $region13
  $region12: #{net_forward.4} parent=0 // pred_region
    _
  $region13: #{net_forward.4} parent=0 // pred_fallthru
    _
  %v15 = vld [vmem:[%s0] sm:$0xf]
  %v16 = vld [vmem:[%s0 + $0x4] sm:$0xf]
  %v17 = vld [vmem:[%s0 + $0x8] sm:$0xf]
  %v18 = vld [vmem:[%s0 + $0xc] sm:$0xf]
  %v19 = vld [vmem:[%s0 + $0x10] sm:$0xf]
  %v20 = vld [vmem:[%s0 + $0x14] sm:$0xf]
  %v21 = vld [vmem:[%s0 + $0x18] sm:$0xf]
  %v22 = vld [vmem:[%s0 + $0x1c] sm:$0xf]
  %v23 = vld [vmem:[%s0 + $0x20] sm:$0xf]
  %v24 = vld [vmem:[%s0 + $0x24] sm:$0xf]
  %v25 = vld [vmem:[%s0 + $0x28] sm:$0xf]
  %v26 = vld [vmem:[%s0 + $0x2c] sm:$0xf]
  %v27 = vld [vmem:[%s0 + $0x30] sm:$0xf]
  %v28 = vld [vmem:[%s0 + $0x34] sm:$0xf]
  %v29 = vld [vmem:[%s0 + $0x38] sm:$0xf]
  %v30 = vld [vmem:[%s0 + $0x3c] sm:$0xf]
  %v31 = vld [vmem:[%s0 + $0x40] sm:$0xf]
  %v32 = vld [vmem:[%s0 + $0x44] sm:$0xf]
  %v33 = vld [vmem:[%s0 + $0x48] sm:$0xf]
  %v34 = vld [vmem:[%s0 + $0x4c] sm:$0xf]
  %v35 = vld [vmem:[%s0 + $0x50] sm:$0xf]
  %v36 = vld [vmem:[%s0 + $0x54] sm:$0xf]
  %v37 = vld [vmem:[%s0 + $0x58] sm:$0xf]
  %v38 = vld [vmem:[%s0 + $0x5c] sm:$0xf]
  %v39 = vld [vmem:[%s0 + $0x60] sm:$0xf]
  %v40 = vld [vmem:[%s0 + $0x64] sm:$0xf]
  %v41 = vld [vmem:[%s0 + $0x68] sm:$0xf]
  %v42 = vld [vmem:[%s0 + $0x6c] sm:$0xf]
  %v43 = vld [vmem:[%s0 + $0x70] sm:$0xf]
  %v44 = vld [vmem:[%s0 + $0x74] sm:$0xf]
  %v45 = vld [vmem:[%s0 + $0x78] sm:$0xf]
  %v46 = vld [vmem:[%s0 + $0x7c] sm:$0xf]
  %v47 = vld [vmem:[%s0 + $0x80] sm:$0xf]
  %v48 = vld [vmem:[%s0 + $0x84] sm:$0xf]
  %v49 = vld [vmem:[%s0 + $0x88] sm:$0xf]
  %v50 = vld [vmem:[%s0 + $0x8c] sm:$0xf]
  %v51 = vld [vmem:[%s0 + $0x90] sm:$0xf]
  %v52 = vld [vmem:[%s0 + $0x94] sm:$0xf]
  %v53 = vld [vmem:[%s0 + $0x98] sm:$0xf]
  %v54 = vld [vmem:[%s0 + $0x9c] sm:$0xf]
  %v55 = vld [vmem:[%s0 + $0xa0] sm:$0xf]
  %v56 = vld [vmem:[%s0 + $0xa4] sm:$0xf]
  %v57 = vld [vmem:[%s0 + $0xa8] sm:$0xf]
  %v58 = vld [vmem:[%s0 + $0xac] sm:$0xf]
  %v59 = vld [vmem:[%s0 + $0xb0] sm:$0xf]
  %v60 = vld [vmem:[%s0 + $0xb4] sm:$0xf]
  %v61 = vld [vmem:[%s0 + $0xb8] sm:$0xf]
  %v62 = vld [vmem:[%s0 + $0xbc] sm:$0xf]
  %v63 = vld [vmem:[%s0 + $0xc0] sm:$0xf]
  %v64 = vld [vmem:[%s0 + $0xc4] sm:$0xf]
  %v65 = vld [vmem:[%s0 + $0xc8] sm:$0xf]
  %v66 = vld [vmem:[%s0 + $0xcc] sm:$0xf]
  %v67 = vld [vmem:[%s0 + $0xd0] sm:$0xf]
  %v68 = vld [vmem:[%s0 + $0xd4] sm:$0xf]
  %v69 = vld [vmem:[%s0 + $0xd8] sm:$0xf]
  %v70 = vld [vmem:[%s0 + $0xdc] sm:$0xf]
  %v71 = vld [vmem:[%s0 + $0xe0] sm:$0xf]
  %v72 = vld [vmem:[%s0 + $0xe4] sm:$0xf]
  %v73 = vld [vmem:[%s0 + $0xe8] sm:$0xf]
  %v74 = vld [vmem:[%s0 + $0xec] sm:$0xf]
  %v75 = vld [vmem:[%s0 + $0xf0] sm:$0xf]
  %v76 = vld [vmem:[%s0 + $0xf4] sm:$0xf]
  %v77 = vld [vmem:[%s0 + $0xf8] sm:$0xf]
  %v78 = vld [vmem:[%s0 + $0xfc] sm:$0xf]
  %v79 = vld [vmem:[%s0 + $0x100] sm:$0xf]
  %v80 = vld [vmem:[%s0 + $0x104] sm:$0xf]
  %v81 = vld [vmem:[%s0 + $0x108] sm:$0xf]
  %v82 = vld [vmem:[%s0 + $0x10c] sm:$0xf]
  %v83 = vld [vmem:[%s0 + $0x110] sm:$0xf]
  %v84 = vld [vmem:[%s0 + $0x114] sm:$0xf]
  %v85 = vld [vmem:[%s0 + $0x118] sm:$0xf]
  %v86 = vld [vmem:[%s0 + $0x11c] sm:$0xf]
  %v87 = vld [vmem:[%s0 + $0x120] sm:$0xf]
  %v88 = vld [vmem:[%s0 + $0x124] sm:$0xf]
  %v89 = vld [vmem:[%s0 + $0x128] sm:$0xf]
  %v90 = vld [vmem:[%s0 + $0x12c] sm:$0xf]
  %v91 = vld [vmem:[%s0 + $0x130] sm:$0xf]
  %v92 = vld [vmem:[%s0 + $0x134] sm:$0xf]
  %v93 = vld [vmem:[%s0 + $0x138] sm:$0xf]
  %v94 = vld [vmem:[%s0 + $0x13c] sm:$0xf]
  %v95 = vld [vmem:[%s0 + $0x140] sm:$0xf]
  %v96 = vld [vmem:[%s0 + $0x144] sm:$0xf]
  %v97 = vld [vmem:[%s0 + $0x148] sm:$0xf]
  %v98 = vld [vmem:[%s0 + $0x14c] sm:$0xf]
  %v99 = vld [vmem:[%s0 + $0x150] sm:$0xf]
  %v100 = vld [vmem:[%s0 + $0x154] sm:$0xf]
  %v101 = vld [vmem:[%s0 + $0x158] sm:$0xf]
  %v102 = vld [vmem:[%s0 + $0x15c] sm:$0xf]
  %v103 = vld [vmem:[%s0 + $0x160] sm:$0xf]
  %v104 = vld [vmem:[%s0 + $0x164] sm:$0xf]
  %v105 = vld [vmem:[%s0 + $0x168] sm:$0xf]
  %v106 = vld [vmem:[%s0 + $0x16c] sm:$0xf]
  %v107 = vld [vmem:[%s0 + $0x170] sm:$0xf]
  %v108 = vld [vmem:[%s0 + $0x174] sm:$0xf]
  %v109 = vld [vmem:[%s0 + $0x178] sm:$0xf]
  %v110 = vld [vmem:[%s0 + $0x17c] sm:$0xf]
  %v111 = vld [vmem:[%s0 + $0x180] sm:$0xf]
  %v112 = vld [vmem:[%s0 + $0x184] sm:$0xf]
  %v113 = vld [vmem:[%s0 + $0x188] sm:$0xf]
  %v114 = vld [vmem:[%s0 + $0x18c] sm:$0xf]
  %v115 = vld [vmem:[%s0 + $0x190] sm:$0xf]
  %v116 = vld [vmem:[%s0 + $0x194] sm:$0xf]
  %v117 = vld [vmem:[%s0 + $0x198] sm:$0xf]
  %v118 = vld [vmem:[%s0 + $0x19c] sm:$0xf]
  %v119 = vld [vmem:[%s0 + $0x1a0] sm:$0xf]
  %v120 = vld [vmem:[%s0 + $0x1a4] sm:$0xf]
  %v121 = vld [vmem:[%s0 + $0x1a8] sm:$0xf]
  %v122 = vld [vmem:[%s0 + $0x1ac] sm:$0xf]
  %v123 = vld [vmem:[%s0 + $0x1b0] sm:$0xf]
  %v124 = vld [vmem:[%s0 + $0x1b4] sm:$0xf]
  %v125 = vld [vmem:[%s0 + $0x1b8] sm:$0xf]
  %v126 = vld [vmem:[%s0 + $0x1bc] sm:$0xf]
  %v127 = vld [vmem:[%s0 + $0x1c0] sm:$0xf]
  %v128 = vld [vmem:[%s0 + $0x1c4] sm:$0xf]
  %v129 = vld [vmem:[%s0 + $0x1c8] sm:$0xf]
  %v130 = vld [vmem:[%s0 + $0x1cc] sm:$0xf]
  %v131 = vld [vmem:[%s0 + $0x1d0] sm:$0xf]
  %v132 = vld [vmem:[%s0 + $0x1d4] sm:$0xf]
  %v133 = vld [vmem:[%s0 + $0x1d8] sm:$0xf]
  %v134 = vld [vmem:[%s0 + $0x1dc] sm:$0xf]
  %v135 = vld [vmem:[%s0 + $0x1e0] sm:$0xf]
  %v136 = vld [vmem:[%s0 + $0x1e4] sm:$0xf]
  %v137 = vld [vmem:[%s0 + $0x1e8] sm:$0xf]
  %v138 = vld [vmem:[%s0 + $0x1ec] sm:$0xf]
  %v139 = vld [vmem:[%s0 + $0x1f0] sm:$0xf]
  %v140 = vld [vmem:[%s0 + $0x1f4] sm:$0xf]
  %v141 = vld [vmem:[%s0 + $0x1f8] sm:$0xf]
  %v142 = vld [vmem:[%s0 + $0x1fc] sm:$0xf]
  %v143 = vld [vmem:[%s0 + $0x200] sm:$0xf]
  %v144 = vld [vmem:[%s0 + $0x204] sm:$0xf]
  %v145 = vld [vmem:[%s0 + $0x208] sm:$0xf]
  %v146 = vld [vmem:[%s0 + $0x20c] sm:$0xf]
  %v147 = vld [vmem:[%s0 + $0x210] sm:$0xf]
  %v148 = vld [vmem:[%s0 + $0x214] sm:$0xf]
  %v149 = vld [vmem:[%s0 + $0x218] sm:$0xf]
  %v150 = vld [vmem:[%s0 + $0x21c] sm:$0xf]
  %v151 = vld [vmem:[%s0 + $0x220] sm:$0xf]
  %v152 = vld [vmem:[%s0 + $0x224] sm:$0xf]
  %v153 = vld [vmem:[%s0 + $0x228] sm:$0xf]
  %v154 = vld [vmem:[%s0 + $0x22c] sm:$0xf]
  %v155 = vld [vmem:[%s0 + $0x230] sm:$0xf]
  %v156 = vld [vmem:[%s0 + $0x234] sm:$0xf]
  %v157 = vld [vmem:[%s0 + $0x238] sm:$0xf]
  %v158 = vld [vmem:[%s0 + $0x23c] sm:$0xf]
  %v159 = vld [vmem:[%s0 + $0x240] sm:$0xf]
  %v160 = vld [vmem:[%s0 + $0x244] sm:$0xf]
  %v161 = vld [vmem:[%s0 + $0x248] sm:$0xf]
  %v162 = vld [vmem:[%s0 + $0x24c] sm:$0xf]
  %v163 = vld [vmem:[%s0 + $0x250] sm:$0xf]
  %v164 = vld [vmem:[%s0 + $0x254] sm:$0xf]
  %v165 = vld [vmem:[%s0 + $0x258] sm:$0xf]
  %v166 = vld [vmem:[%s0 + $0x25c] sm:$0xf]
  %v167 = vld [vmem:[%s0 + $0x260] sm:$0xf]
  %v168 = vld [vmem:[%s0 + $0x264] sm:$0xf]
  %v169 = vld [vmem:[%s0 + $0x268] sm:$0xf]
  %v170 = vld [vmem:[%s0 + $0x26c] sm:$0xf]
  %v171 = vld [vmem:[%s0 + $0x270] sm:$0xf]
  %v172 = vld [vmem:[%s0 + $0x274] sm:$0xf]
  %v173 = vld [vmem:[%s0 + $0x278] sm:$0xf]
  %v174 = vld [vmem:[%s0 + $0x27c] sm:$0xf]
  %v175 = vld [vmem:[%s0 + $0x280] sm:$0xf]
  %v176 = vld [vmem:[%s0 + $0x284] sm:$0xf]
  %v177 = vld [vmem:[%s0 + $0x288] sm:$0xf]
  %v178 = vld [vmem:[%s0 + $0x28c] sm:$0xf]
  %v179 = vld [vmem:[%s0 + $0x290] sm:$0xf]
  %v180 = vld [vmem:[%s0 + $0x294] sm:$0xf]
  %v181 = vld [vmem:[%s0 + $0x298] sm:$0xf]
  %v182 = vld [vmem:[%s0 + $0x29c] sm:$0xf]
  %v183 = vld [vmem:[%s0 + $0x2a0] sm:$0xf]
  %v184 = vld [vmem:[%s0 + $0x2a4] sm:$0xf]
  %v185 = vld [vmem:[%s0 + $0x2a8] sm:$0xf]
  %v186 = vld [vmem:[%s0 + $0x2ac] sm:$0xf]
  %v187 = vld [vmem:[%s0 + $0x2b0] sm:$0xf]
  %v188 = vld [vmem:[%s0 + $0x2b4] sm:$0xf]
  %v189 = vld [vmem:[%s0 + $0x2b8] sm:$0xf]
  %v190 = vld [vmem:[%s0 + $0x2bc] sm:$0xf]
  %v191 = vld [vmem:[%s0 + $0x2c0] sm:$0xf]
  %v192 = vld [vmem:[%s0 + $0x2c4] sm:$0xf]
  %v193 = vld [vmem:[%s0 + $0x2c8] sm:$0xf]
  %v194 = vld [vmem:[%s0 + $0x2cc] sm:$0xf]
  %v195 = vld [vmem:[%s0 + $0x2d0] sm:$0xf]
  %v196 = vld [vmem:[%s0 + $0x2d4] sm:$0xf]
  %v197 = vld [vmem:[%s0 + $0x2d8] sm:$0xf]
  %v198 = vld [vmem:[%s0 + $0x2dc] sm:$0xf]
  %v199 = vld [vmem:[%s0 + $0x2e0] sm:$0xf]
  %v200 = vld [vmem:[%s0 + $0x2e4] sm:$0xf]
  %v201 = vld [vmem:[%s0 + $0x2e8] sm:$0xf]
  %v202 = vld [vmem:[%s0 + $0x2ec] sm:$0xf]
  %v203 = vld [vmem:[%s0 + $0x2f0] sm:$0xf]
  %v204 = vld [vmem:[%s0 + $0x2f4] sm:$0xf]
  %v205 = vld [vmem:[%s0 + $0x2f8] sm:$0xf]
  %v206 = vld [vmem:[%s0 + $0x2fc] sm:$0xf]
  %v207 = vld [vmem:[%s0 + $0x300] sm:$0xf]
  %v208 = vld [vmem:[%s0 + $0x304] sm:$0xf]
  %v209 = vld [vmem:[%s0 + $0x308] sm:$0xf]
  %v210 = vld [vmem:[%s0 + $0x30c] sm:$0xf]
  %v211 = vld [vmem:[%s0 + $0x310] sm:$0xf]
  %v212 = vld [vmem:[%s0 + $0x314] sm:$0xf]
  %v213 = vld [vmem:[%s0 + $0x318] sm:$0xf]
  %v214 = vld [vmem:[%s0 + $0x31c] sm:$0xf]
  %v215 = vld [vmem:[%s0 + $0x320] sm:$0xf]
  %v216 = vld [vmem:[%s0 + $0x324] sm:$0xf]
  %v217 = vld [vmem:[%s0 + $0x328] sm:$0xf]
  %v218 = vld [vmem:[%s0 + $0x32c] sm:$0xf]
  %v219 = vld [vmem:[%s0 + $0x330] sm:$0xf]
  %v220 = vld [vmem:[%s0 + $0x334] sm:$0xf]
  %v221 = vld [vmem:[%s0 + $0x338] sm:$0xf]
  %v222 = vld [vmem:[%s0 + $0x33c] sm:$0xf]
  %v223 = vld [vmem:[%s0 + $0x340] sm:$0xf]
  %v224 = vld [vmem:[%s0 + $0x344] sm:$0xf]
  %v225 = vld [vmem:[%s0 + $0x348] sm:$0xf]
  %v226 = vld [vmem:[%s0 + $0x34c] sm:$0xf]
  %v227 = vld [vmem:[%s0 + $0x350] sm:$0xf]
  %v228 = vld [vmem:[%s0 + $0x354] sm:$0xf]
  %v229 = vld [vmem:[%s0 + $0x358] sm:$0xf]
  %v230 = vld [vmem:[%s0 + $0x35c] sm:$0xf]
  %v231 = vld [vmem:[%s0 + $0x360] sm:$0xf]
  %v232 = vld [vmem:[%s0 + $0x364] sm:$0xf]
  %v233 = vld [vmem:[%s0 + $0x368] sm:$0xf]
  %v234 = vld [vmem:[%s0 + $0x36c] sm:$0xf]
  %v235 = vld [vmem:[%s0 + $0x370] sm:$0xf]
  %v236 = vld [vmem:[%s0 + $0x374] sm:$0xf]
  %v237 = vld [vmem:[%s0 + $0x378] sm:$0xf]
  %v238 = vld [vmem:[%s0 + $0x37c] sm:$0xf]
  %v239 = vld [vmem:[%s0 + $0x380] sm:$0xf]
  %v240 = vld [vmem:[%s0 + $0x384] sm:$0xf]
  %v241 = vld [vmem:[%s0 + $0x388] sm:$0xf]
  %v242 = vld [vmem:[%s0 + $0x38c] sm:$0xf]
  %v243 = vld [vmem:[%s0 + $0x390] sm:$0xf]
  %v244 = vld [vmem:[%s0 + $0x394] sm:$0xf]
  %v245 = vld [vmem:[%s0 + $0x398] sm:$0xf]
  %v246 = vld [vmem:[%s0 + $0x39c] sm:$0xf]
  %v247 = vld [vmem:[%s0 + $0x3a0] sm:$0xf]
  %v248 = vld [vmem:[%s0 + $0x3a4] sm:$0xf]
  %v249 = vld [vmem:[%s0 + $0x3a8] sm:$0xf]
  %v250 = vld [vmem:[%s0 + $0x3ac] sm:$0xf]
  %v251 = vld [vmem:[%s0 + $0x3b0] sm:$0xf]
  %v252 = vld [vmem:[%s0 + $0x3b4] sm:$0xf]
  %v253 = vld [vmem:[%s0 + $0x3b8] sm:$0xf]
  %v254 = vld [vmem:[%s0 + $0x3bc] sm:$0xf]
  %v255 = vld [vmem:[%s0 + $0x3c0] sm:$0xf]
  %v256 = vld [vmem:[%s0 + $0x3c4] sm:$0xf]
  %v257 = vld [vmem:[%s0 + $0x3c8] sm:$0xf]
  %v258 = vld [vmem:[%s0 + $0x3cc] sm:$0xf]
  %v259 = vld [vmem:[%s0 + $0x3d0] sm:$0xf]
  %v260 = vld [vmem:[%s0 + $0x3d4] sm:$0xf]
  %v261 = vld [vmem:[%s0 + $0x3d8] sm:$0xf]
  %v262 = vld [vmem:[%s0 + $0x3dc] sm:$0xf]
  %v263 = vld [vmem:[%s0 + $0x3e0] sm:$0xf]
  %v264 = vld [vmem:[%s0 + $0x3e4] sm:$0xf]
  %v265 = vld [vmem:[%s0 + $0x3e8] sm:$0xf]
  %v266 = vld [vmem:[%s0 + $0x3ec] sm:$0xf]
  %v267 = vld [vmem:[%s0 + $0x3f0] sm:$0xf]
  %v268 = vld [vmem:[%s0 + $0x3f4] sm:$0xf]
  %v269 = vld [vmem:[%s0 + $0x3f8] sm:$0xf]
  %v270 = vld [vmem:[%s0 + $0x3fc] sm:$0xf]
  %v271 = vld [vmem:[%s1] sm:$0xf]
  %v272 = vld [vmem:[%s1 + $0x4] sm:$0xf]
  %v273 = vld [vmem:[%s1 + $0x8] sm:$0xf]
  %v274 = vld [vmem:[%s1 + $0xc] sm:$0xf]
  %v531 = vunpack.c.l.b16 %v15
  %v532 = vunpack.c.l.b16 %v16
  %v533 = vunpack.c.l.b16 %v17
  %v534 = vunpack.c.l.b16 %v18
  %v535 = vunpack.c.l.b16 %v19
  %v536 = vunpack.c.l.b16 %v20
  %v537 = vunpack.c.l.b16 %v21
  %v538 = vunpack.c.l.b16 %v22
  %v539 = vunpack.c.l.b16 %v23
  %v540 = vunpack.c.l.b16 %v24
  %v541 = vunpack.c.l.b16 %v25
  %v542 = vunpack.c.l.b16 %v26
  %v543 = vunpack.c.l.b16 %v27
  %v544 = vunpack.c.l.b16 %v28
  %v545 = vunpack.c.l.b16 %v29
  %v546 = vunpack.c.l.b16 %v30
  %v547 = vunpack.c.l.b16 %v31
  %v548 = vunpack.c.l.b16 %v32
  %v549 = vunpack.c.l.b16 %v33
  %v550 = vunpack.c.l.b16 %v34
  %v551 = vunpack.c.l.b16 %v35
  %v552 = vunpack.c.l.b16 %v36
  %v553 = vunpack.c.l.b16 %v37
  %v554 = vunpack.c.l.b16 %v38
  %v555 = vunpack.c.l.b16 %v39
  %v556 = vunpack.c.l.b16 %v40
  %v557 = vunpack.c.l.b16 %v41
  %v558 = vunpack.c.l.b16 %v42
  %v559 = vunpack.c.l.b16 %v43
  %v560 = vunpack.c.l.b16 %v44
  %v561 = vunpack.c.l.b16 %v45
  %v562 = vunpack.c.l.b16 %v46
  %v563 = vunpack.c.l.b16 %v47
  %v564 = vunpack.c.l.b16 %v48
  %v565 = vunpack.c.l.b16 %v49
  %v566 = vunpack.c.l.b16 %v50
  %v567 = vunpack.c.l.b16 %v51
  %v568 = vunpack.c.l.b16 %v52
  %v569 = vunpack.c.l.b16 %v53
  %v570 = vunpack.c.l.b16 %v54
  %v571 = vunpack.c.l.b16 %v55
  %v572 = vunpack.c.l.b16 %v56
  %v573 = vunpack.c.l.b16 %v57
  %v574 = vunpack.c.l.b16 %v58
  %v575 = vunpack.c.l.b16 %v59
  %v576 = vunpack.c.l.b16 %v60
  %v577 = vunpack.c.l.b16 %v61
  %v578 = vunpack.c.l.b16 %v62
  %v579 = vunpack.c.l.b16 %v63
  %v580 = vunpack.c.l.b16 %v64
  %v581 = vunpack.c.l.b16 %v65
  %v582 = vunpack.c.l.b16 %v66
  %v583 = vunpack.c.l.b16 %v67
  %v584 = vunpack.c.l.b16 %v68
  %v585 = vunpack.c.l.b16 %v69
  %v586 = vunpack.c.l.b16 %v70
  %v587 = vunpack.c.l.b16 %v71
  %v588 = vunpack.c.l.b16 %v72
  %v589 = vunpack.c.l.b16 %v73
  %v590 = vunpack.c.l.b16 %v74
  %v591 = vunpack.c.l.b16 %v75
  %v592 = vunpack.c.l.b16 %v76
  %v593 = vunpack.c.l.b16 %v77
  %v594 = vunpack.c.l.b16 %v78
  %v595 = vunpack.c.l.b16 %v79
  %v596 = vunpack.c.l.b16 %v80
  %v597 = vunpack.c.l.b16 %v81
  %v598 = vunpack.c.l.b16 %v82
  %v599 = vunpack.c.l.b16 %v83
  %v600 = vunpack.c.l.b16 %v84
  %v601 = vunpack.c.l.b16 %v85
  %v602 = vunpack.c.l.b16 %v86
  %v603 = vunpack.c.l.b16 %v87
  %v604 = vunpack.c.l.b16 %v88
  %v605 = vunpack.c.l.b16 %v89
  %v606 = vunpack.c.l.b16 %v90
  %v607 = vunpack.c.l.b16 %v91
  %v608 = vunpack.c.l.b16 %v92
  %v609 = vunpack.c.l.b16 %v93
  %v610 = vunpack.c.l.b16 %v94
  %v611 = vunpack.c.l.b16 %v95
  %v612 = vunpack.c.l.b16 %v96
  %v613 = vunpack.c.l.b16 %v97
  %v614 = vunpack.c.l.b16 %v98
  %v615 = vunpack.c.l.b16 %v99
  %v616 = vunpack.c.l.b16 %v100
  %v617 = vunpack.c.l.b16 %v101
  %v618 = vunpack.c.l.b16 %v102
  %v619 = vunpack.c.l.b16 %v103
  %v620 = vunpack.c.l.b16 %v104
  %v621 = vunpack.c.l.b16 %v105
  %v622 = vunpack.c.l.b16 %v106
  %v623 = vunpack.c.l.b16 %v107
  %v624 = vunpack.c.l.b16 %v108
  %v625 = vunpack.c.l.b16 %v109
  %v626 = vunpack.c.l.b16 %v110
  %v627 = vunpack.c.l.b16 %v111
  %v628 = vunpack.c.l.b16 %v112
  %v629 = vunpack.c.l.b16 %v113
  %v630 = vunpack.c.l.b16 %v114
  %v631 = vunpack.c.l.b16 %v115
  %v632 = vunpack.c.l.b16 %v116
  %v633 = vunpack.c.l.b16 %v117
  %v634 = vunpack.c.l.b16 %v118
  %v635 = vunpack.c.l.b16 %v119
  %v636 = vunpack.c.l.b16 %v120
  %v637 = vunpack.c.l.b16 %v121
  %v638 = vunpack.c.l.b16 %v122
  %v639 = vunpack.c.l.b16 %v123
  %v640 = vunpack.c.l.b16 %v124
  %v641 = vunpack.c.l.b16 %v125
  %v642 = vunpack.c.l.b16 %v126
  %v643 = vunpack.c.l.b16 %v127
  %v644 = vunpack.c.l.b16 %v128
  %v645 = vunpack.c.l.b16 %v129
  %v646 = vunpack.c.l.b16 %v130
  %v647 = vunpack.c.l.b16 %v131
  %v648 = vunpack.c.l.b16 %v132
  %v649 = vunpack.c.l.b16 %v133
  %v650 = vunpack.c.l.b16 %v134
  %v651 = vunpack.c.l.b16 %v135
  %v652 = vunpack.c.l.b16 %v136
  %v653 = vunpack.c.l.b16 %v137
  %v654 = vunpack.c.l.b16 %v138
  %v655 = vunpack.c.l.b16 %v139
  %v656 = vunpack.c.l.b16 %v140
  %v657 = vunpack.c.l.b16 %v141
  %v658 = vunpack.c.l.b16 %v142
  %v659 = vunpack.c.l.b16 %v143
  %v660 = vunpack.c.l.b16 %v144
  %v661 = vunpack.c.l.b16 %v145
  %v662 = vunpack.c.l.b16 %v146
  %v663 = vunpack.c.l.b16 %v147
  %v664 = vunpack.c.l.b16 %v148
  %v665 = vunpack.c.l.b16 %v149
  %v666 = vunpack.c.l.b16 %v150
  %v667 = vunpack.c.l.b16 %v151
  %v668 = vunpack.c.l.b16 %v152
  %v669 = vunpack.c.l.b16 %v153
  %v670 = vunpack.c.l.b16 %v154
  %v671 = vunpack.c.l.b16 %v155
  %v672 = vunpack.c.l.b16 %v156
  %v673 = vunpack.c.l.b16 %v157
  %v674 = vunpack.c.l.b16 %v158
  %v675 = vunpack.c.l.b16 %v159
  %v676 = vunpack.c.l.b16 %v160
  %v677 = vunpack.c.l.b16 %v161
  %v678 = vunpack.c.l.b16 %v162
  %v679 = vunpack.c.l.b16 %v163
  %v680 = vunpack.c.l.b16 %v164
  %v681 = vunpack.c.l.b16 %v165
  %v682 = vunpack.c.l.b16 %v166
  %v683 = vunpack.c.l.b16 %v167
  %v684 = vunpack.c.l.b16 %v168
  %v685 = vunpack.c.l.b16 %v169
  %v686 = vunpack.c.l.b16 %v170
  %v687 = vunpack.c.l.b16 %v171
  %v688 = vunpack.c.l.b16 %v172
  %v689 = vunpack.c.l.b16 %v173
  %v690 = vunpack.c.l.b16 %v174
  %v691 = vunpack.c.l.b16 %v175
  %v692 = vunpack.c.l.b16 %v176
  %v693 = vunpack.c.l.b16 %v177
  %v694 = vunpack.c.l.b16 %v178
  %v695 = vunpack.c.l.b16 %v179
  %v696 = vunpack.c.l.b16 %v180
  %v697 = vunpack.c.l.b16 %v181
  %v698 = vunpack.c.l.b16 %v182
  %v699 = vunpack.c.l.b16 %v183
  %v700 = vunpack.c.l.b16 %v184
  %v701 = vunpack.c.l.b16 %v185
  %v702 = vunpack.c.l.b16 %v186
  %v703 = vunpack.c.l.b16 %v187
  %v704 = vunpack.c.l.b16 %v188
  %v705 = vunpack.c.l.b16 %v189
  %v706 = vunpack.c.l.b16 %v190
  %v707 = vunpack.c.l.b16 %v191
  %v708 = vunpack.c.l.b16 %v192
  %v709 = vunpack.c.l.b16 %v193
  %v710 = vunpack.c.l.b16 %v194
  %v711 = vunpack.c.l.b16 %v195
  %v712 = vunpack.c.l.b16 %v196
  %v713 = vunpack.c.l.b16 %v197
  %v714 = vunpack.c.l.b16 %v198
  %v715 = vunpack.c.l.b16 %v199
  %v716 = vunpack.c.l.b16 %v200
  %v717 = vunpack.c.l.b16 %v201
  %v718 = vunpack.c.l.b16 %v202
  %v719 = vunpack.c.l.b16 %v203
  %v720 = vunpack.c.l.b16 %v204
  %v721 = vunpack.c.l.b16 %v205
  %v722 = vunpack.c.l.b16 %v206
  %v723 = vunpack.c.l.b16 %v207
  %v724 = vunpack.c.l.b16 %v208
  %v725 = vunpack.c.l.b16 %v209
  %v726 = vunpack.c.l.b16 %v210
  %v727 = vunpack.c.l.b16 %v211
  %v728 = vunpack.c.l.b16 %v212
  %v729 = vunpack.c.l.b16 %v213
  %v730 = vunpack.c.l.b16 %v214
  %v731 = vunpack.c.l.b16 %v215
  %v732 = vunpack.c.l.b16 %v216
  %v733 = vunpack.c.l.b16 %v217
  %v734 = vunpack.c.l.b16 %v218
  %v735 = vunpack.c.l.b16 %v219
  %v736 = vunpack.c.l.b16 %v220
  %v737 = vunpack.c.l.b16 %v221
  %v738 = vunpack.c.l.b16 %v222
  %v739 = vunpack.c.l.b16 %v223
  %v740 = vunpack.c.l.b16 %v224
  %v741 = vunpack.c.l.b16 %v225
  %v742 = vunpack.c.l.b16 %v226
  %v743 = vunpack.c.l.b16 %v227
  %v744 = vunpack.c.l.b16 %v228
  %v745 = vunpack.c.l.b16 %v229
  %v746 = vunpack.c.l.b16 %v230
  %v747 = vunpack.c.l.b16 %v231
  %v748 = vunpack.c.l.b16 %v232
  %v749 = vunpack.c.l.b16 %v233
  %v750 = vunpack.c.l.b16 %v234
  %v751 = vunpack.c.l.b16 %v235
  %v752 = vunpack.c.l.b16 %v236
  %v753 = vunpack.c.l.b16 %v237
  %v754 = vunpack.c.l.b16 %v238
  %v755 = vunpack.c.l.b16 %v239
  %v756 = vunpack.c.l.b16 %v240
  %v757 = vunpack.c.l.b16 %v241
  %v758 = vunpack.c.l.b16 %v242
  %v759 = vunpack.c.l.b16 %v243
  %v760 = vunpack.c.l.b16 %v244
  %v761 = vunpack.c.l.b16 %v245
  %v762 = vunpack.c.l.b16 %v246
  %v763 = vunpack.c.l.b16 %v247
  %v764 = vunpack.c.l.b16 %v248
  %v765 = vunpack.c.l.b16 %v249
  %v766 = vunpack.c.l.b16 %v250
  %v767 = vunpack.c.l.b16 %v251
  %v768 = vunpack.c.l.b16 %v252
  %v769 = vunpack.c.l.b16 %v253
  %v770 = vunpack.c.l.b16 %v254
  %v771 = vunpack.c.l.b16 %v255
  %v772 = vunpack.c.l.b16 %v256
  %v773 = vunpack.c.l.b16 %v257
  %v774 = vunpack.c.l.b16 %v258
  %v775 = vunpack.c.l.b16 %v259
  %v776 = vunpack.c.l.b16 %v260
  %v777 = vunpack.c.l.b16 %v261
  %v778 = vunpack.c.l.b16 %v262
  %v779 = vunpack.c.l.b16 %v263
  %v780 = vunpack.c.l.b16 %v264
  %v781 = vunpack.c.l.b16 %v265
  %v782 = vunpack.c.l.b16 %v266
  %v783 = vunpack.c.l.b16 %v267
  %v784 = vunpack.c.l.b16 %v268
  %v785 = vunpack.c.l.b16 %v269
  %v786 = vunpack.c.l.b16 %v270
  %v787 = vpack.c.b16 %v532, %v531
  %v788 = vpack.c.b16 %v534, %v533
  %v789 = vpack.c.b16 %v536, %v535
  %v790 = vpack.c.b16 %v538, %v537
  %v791 = vpack.c.b16 %v540, %v539
  %v792 = vpack.c.b16 %v542, %v541
  %v793 = vpack.c.b16 %v544, %v543
  %v794 = vpack.c.b16 %v546, %v545
  %v795 = vpack.c.b16 %v548, %v547
  %v796 = vpack.c.b16 %v550, %v549
  %v797 = vpack.c.b16 %v552, %v551
  %v798 = vpack.c.b16 %v554, %v553
  %v799 = vpack.c.b16 %v556, %v555
  %v800 = vpack.c.b16 %v558, %v557
  %v801 = vpack.c.b16 %v560, %v559
  %v802 = vpack.c.b16 %v562, %v561
  %v803 = vpack.c.b16 %v564, %v563
  %v804 = vpack.c.b16 %v566, %v565
  %v805 = vpack.c.b16 %v568, %v567
  %v806 = vpack.c.b16 %v570, %v569
  %v807 = vpack.c.b16 %v572, %v571
  %v808 = vpack.c.b16 %v574, %v573
  %v809 = vpack.c.b16 %v576, %v575
  %v810 = vpack.c.b16 %v578, %v577
  %v811 = vpack.c.b16 %v580, %v579
  %v812 = vpack.c.b16 %v582, %v581
  %v813 = vpack.c.b16 %v584, %v583
  %v814 = vpack.c.b16 %v586, %v585
  %v815 = vpack.c.b16 %v588, %v587
  %v816 = vpack.c.b16 %v590, %v589
  %v817 = vpack.c.b16 %v592, %v591
  %v818 = vpack.c.b16 %v594, %v593
  %v819 = vpack.c.b16 %v596, %v595
  %v820 = vpack.c.b16 %v598, %v597
  %v821 = vpack.c.b16 %v600, %v599
  %v822 = vpack.c.b16 %v602, %v601
  %v823 = vpack.c.b16 %v604, %v603
  %v824 = vpack.c.b16 %v606, %v605
  %v825 = vpack.c.b16 %v608, %v607
  %v826 = vpack.c.b16 %v610, %v609
  %v827 = vpack.c.b16 %v612, %v611
  %v828 = vpack.c.b16 %v614, %v613
  %v829 = vpack.c.b16 %v616, %v615
  %v830 = vpack.c.b16 %v618, %v617
  %v831 = vpack.c.b16 %v620, %v619
  %v832 = vpack.c.b16 %v622, %v621
  %v833 = vpack.c.b16 %v624, %v623
  %v834 = vpack.c.b16 %v626, %v625
  %v835 = vpack.c.b16 %v628, %v627
  %v836 = vpack.c.b16 %v630, %v629
  %v837 = vpack.c.b16 %v632, %v631
  %v838 = vpack.c.b16 %v634, %v633
  %v839 = vpack.c.b16 %v636, %v635
  %v840 = vpack.c.b16 %v638, %v637
  %v841 = vpack.c.b16 %v640, %v639
  %v842 = vpack.c.b16 %v642, %v641
  %v843 = vpack.c.b16 %v644, %v643
  %v844 = vpack.c.b16 %v646, %v645
  %v845 = vpack.c.b16 %v648, %v647
  %v846 = vpack.c.b16 %v650, %v649
  %v847 = vpack.c.b16 %v652, %v651
  %v848 = vpack.c.b16 %v654, %v653
  %v849 = vpack.c.b16 %v656, %v655
  %v850 = vpack.c.b16 %v658, %v657
  %v851 = vpack.c.b16 %v660, %v659
  %v852 = vpack.c.b16 %v662, %v661
  %v853 = vpack.c.b16 %v664, %v663
  %v854 = vpack.c.b16 %v666, %v665
  %v855 = vpack.c.b16 %v668, %v667
  %v856 = vpack.c.b16 %v670, %v669
  %v857 = vpack.c.b16 %v672, %v671
  %v858 = vpack.c.b16 %v674, %v673
  %v859 = vpack.c.b16 %v676, %v675
  %v860 = vpack.c.b16 %v678, %v677
  %v861 = vpack.c.b16 %v680, %v679
  %v862 = vpack.c.b16 %v682, %v681
  %v863 = vpack.c.b16 %v684, %v683
  %v864 = vpack.c.b16 %v686, %v685
  %v865 = vpack.c.b16 %v688, %v687
  %v866 = vpack.c.b16 %v690, %v689
  %v867 = vpack.c.b16 %v692, %v691
  %v868 = vpack.c.b16 %v694, %v693
  %v869 = vpack.c.b16 %v696, %v695
  %v870 = vpack.c.b16 %v698, %v697
  %v871 = vpack.c.b16 %v700, %v699
  %v872 = vpack.c.b16 %v702, %v701
  %v873 = vpack.c.b16 %v704, %v703
  %v874 = vpack.c.b16 %v706, %v705
  %v875 = vpack.c.b16 %v708, %v707
  %v876 = vpack.c.b16 %v710, %v709
  %v877 = vpack.c.b16 %v712, %v711
  %v878 = vpack.c.b16 %v714, %v713
  %v879 = vpack.c.b16 %v716, %v715
  %v880 = vpack.c.b16 %v718, %v717
  %v881 = vpack.c.b16 %v720, %v719
  %v882 = vpack.c.b16 %v722, %v721
  %v883 = vpack.c.b16 %v724, %v723
  %v884 = vpack.c.b16 %v726, %v725
  %v885 = vpack.c.b16 %v728, %v727
  %v886 = vpack.c.b16 %v730, %v729
  %v887 = vpack.c.b16 %v732, %v731
  %v888 = vpack.c.b16 %v734, %v733
  %v889 = vpack.c.b16 %v736, %v735
  %v890 = vpack.c.b16 %v738, %v737
  %v891 = vpack.c.b16 %v740, %v739
  %v892 = vpack.c.b16 %v742, %v741
  %v893 = vpack.c.b16 %v744, %v743
  %v894 = vpack.c.b16 %v746, %v745
  %v895 = vpack.c.b16 %v748, %v747
  %v896 = vpack.c.b16 %v750, %v749
  %v897 = vpack.c.b16 %v752, %v751
  %v898 = vpack.c.b16 %v754, %v753
  %v899 = vpack.c.b16 %v756, %v755
  %v900 = vpack.c.b16 %v758, %v757
  %v901 = vpack.c.b16 %v760, %v759
  %v902 = vpack.c.b16 %v762, %v761
  %v903 = vpack.c.b16 %v764, %v763
  %v904 = vpack.c.b16 %v766, %v765
  %v905 = vpack.c.b16 %v768, %v767
  %v906 = vpack.c.b16 %v770, %v769
  %v907 = vpack.c.b16 %v772, %v771
  %v908 = vpack.c.b16 %v774, %v773
  %v909 = vpack.c.b16 %v776, %v775
  %v910 = vpack.c.b16 %v778, %v777
  %v911 = vpack.c.b16 %v780, %v779
  %v912 = vpack.c.b16 %v782, %v781
  %v913 = vpack.c.b16 %v784, %v783
  %v914 = vpack.c.b16 %v786, %v785
  %v919 = vunpack.c.l.b16 %v271
  %v920 = vunpack.c.l.b16 %v272
  %v921 = vunpack.c.l.b16 %v273
  %v922 = vunpack.c.l.b16 %v274
  %v923 = vpack.c.b16 %v920, %v919
  %v924 = vpack.c.b16 %v922, %v921
  %vm927 = vcmask 261120
  %v929 = vsel %vm927, %v787, 0
  %v932 = vsel %vm927, %v788, 0
  %v935 = vsel %vm927, %v789, 0
  %v938 = vsel %vm927, %v790, 0
  %v941 = vsel %vm927, %v791, 0
  %v944 = vsel %vm927, %v792, 0
  %v947 = vsel %vm927, %v793, 0
  %v950 = vsel %vm927, %v794, 0
  %v953 = vsel %vm927, %v795, 0
  %v956 = vsel %vm927, %v796, 0
  %v959 = vsel %vm927, %v797, 0
  %v962 = vsel %vm927, %v798, 0
  %v965 = vsel %vm927, %v799, 0
  %v968 = vsel %vm927, %v800, 0
  %v971 = vsel %vm927, %v801, 0
  %v974 = vsel %vm927, %v802, 0
  %v977 = vsel %vm927, %v803, 0
  %v980 = vsel %vm927, %v804, 0
  %v983 = vsel %vm927, %v805, 0
  %v986 = vsel %vm927, %v806, 0
  %v989 = vsel %vm927, %v807, 0
  %v992 = vsel %vm927, %v808, 0
  %v995 = vsel %vm927, %v809, 0
  %v998 = vsel %vm927, %v810, 0
  %v1001 = vsel %vm927, %v811, 0
  %v1004 = vsel %vm927, %v812, 0
  %v1007 = vsel %vm927, %v813, 0
  %v1010 = vsel %vm927, %v814, 0
  %v1013 = vsel %vm927, %v815, 0
  %v1016 = vsel %vm927, %v816, 0
  %v1019 = vsel %vm927, %v817, 0
  %v1022 = vsel %vm927, %v818, 0
  %v1025 = vsel %vm927, %v819, 0
  %v1028 = vsel %vm927, %v820, 0
  %v1031 = vsel %vm927, %v821, 0
  %v1034 = vsel %vm927, %v822, 0
  %v1037 = vsel %vm927, %v823, 0
  %v1040 = vsel %vm927, %v824, 0
  %v1043 = vsel %vm927, %v825, 0
  %v1046 = vsel %vm927, %v826, 0
  %v1049 = vsel %vm927, %v827, 0
  %v1052 = vsel %vm927, %v828, 0
  %v1055 = vsel %vm927, %v829, 0
  %v1058 = vsel %vm927, %v830, 0
  %v1061 = vsel %vm927, %v831, 0
  %v1064 = vsel %vm927, %v832, 0
  %v1067 = vsel %vm927, %v833, 0
  %v1070 = vsel %vm927, %v834, 0
  %v1073 = vsel %vm927, %v835, 0
  %v1076 = vsel %vm927, %v836, 0
  %v1079 = vsel %vm927, %v837, 0
  %v1082 = vsel %vm927, %v838, 0
  %v1085 = vsel %vm927, %v839, 0
  %v1088 = vsel %vm927, %v840, 0
  %v1091 = vsel %vm927, %v841, 0
  %v1094 = vsel %vm927, %v842, 0
  %v1097 = vsel %vm927, %v843, 0
  %v1100 = vsel %vm927, %v844, 0
  %v1103 = vsel %vm927, %v845, 0
  %v1106 = vsel %vm927, %v846, 0
  %v1109 = vsel %vm927, %v847, 0
  %v1112 = vsel %vm927, %v848, 0
  %v1115 = vsel %vm927, %v849, 0
  %v1118 = vsel %vm927, %v850, 0
  %v1121 = vsel %vm927, %v851, 0
  %v1124 = vsel %vm927, %v852, 0
  %v1127 = vsel %vm927, %v853, 0
  %v1130 = vsel %vm927, %v854, 0
  %v1133 = vsel %vm927, %v855, 0
  %v1136 = vsel %vm927, %v856, 0
  %v1139 = vsel %vm927, %v857, 0
  %v1142 = vsel %vm927, %v858, 0
  %v1145 = vsel %vm927, %v859, 0
  %v1148 = vsel %vm927, %v860, 0
  %v1151 = vsel %vm927, %v861, 0
  %v1154 = vsel %vm927, %v862, 0
  %v1157 = vsel %vm927, %v863, 0
  %v1160 = vsel %vm927, %v864, 0
  %v1163 = vsel %vm927, %v865, 0
  %v1166 = vsel %vm927, %v866, 0
  %v1169 = vsel %vm927, %v867, 0
  %v1172 = vsel %vm927, %v868, 0
  %v1175 = vsel %vm927, %v869, 0
  %v1178 = vsel %vm927, %v870, 0
  %v1181 = vsel %vm927, %v871, 0
  %v1184 = vsel %vm927, %v872, 0
  %v1187 = vsel %vm927, %v873, 0
  %v1190 = vsel %vm927, %v874, 0
  %v1193 = vsel %vm927, %v875, 0
  %v1196 = vsel %vm927, %v876, 0
  %v1199 = vsel %vm927, %v877, 0
  %v1202 = vsel %vm927, %v878, 0
  %v1205 = vsel %vm927, %v879, 0
  %v1208 = vsel %vm927, %v880, 0
  %v1211 = vsel %vm927, %v881, 0
  %v1214 = vsel %vm927, %v882, 0
  %v1217 = vsel %vm927, %v883, 0
  %v1220 = vsel %vm927, %v884, 0
  %v1223 = vsel %vm927, %v885, 0
  %v1226 = vsel %vm927, %v886, 0
  %v1229 = vsel %vm927, %v887, 0
  %v1232 = vsel %vm927, %v888, 0
  %v1235 = vsel %vm927, %v889, 0
  %v1238 = vsel %vm927, %v890, 0
  %v1241 = vsel %vm927, %v891, 0
  %v1244 = vsel %vm927, %v892, 0
  %v1247 = vsel %vm927, %v893, 0
  %v1250 = vsel %vm927, %v894, 0
  %v1253 = vsel %vm927, %v895, 0
  %v1256 = vsel %vm927, %v896, 0
  %v1259 = vsel %vm927, %v897, 0
  %v1262 = vsel %vm927, %v898, 0
  %v1265 = vsel %vm927, %v899, 0
  %v1268 = vsel %vm927, %v900, 0
  %v1271 = vsel %vm927, %v901, 0
  %v1274 = vsel %vm927, %v902, 0
  %v1277 = vsel %vm927, %v903, 0
  %v1280 = vsel %vm927, %v904, 0
  %v1283 = vsel %vm927, %v905, 0
  %v1286 = vsel %vm927, %v906, 0
  %v1289 = vsel %vm927, %v907, 0
  %v1292 = vsel %vm927, %v908, 0
  %v1295 = vsel %vm927, %v909, 0
  %v1298 = vsel %vm927, %v910, 0
  %v1301 = vsel %vm927, %v911, 0
  %v1304 = vsel %vm927, %v912, 0
  %v1307 = vsel %vm927, %v913, 0
  %v1310 = vsel %vm927, %v914, 0
  %1312 = vmatpush.bf16.msra.mxu0 0
  %1313 = vmatpush.bf16.msra.mxu0 0
  %1314 = vmatpush.bf16.msra.mxu0 0
  %1315 = vmatpush.bf16.msra.mxu0 0
  %1316 = vmatpush.bf16.msra.mxu0 0
  %1317 = vmatpush.bf16.msra.mxu0 0
  %1318 = vmatpush.bf16.msra.mxu0 %v924
  %1319 = vmatpush.bf16.msra.mxu0 %v923
  %1320 = vmatmul.bf16.gmra.mxu0 %v929
  %v1321 = vpop.f32.mrf.mxu0
  %v1322 = vadd.f32 0.0, %v1321
  %v1323 = vpop.f32.mrf.mxu0
  %v1324 = vadd.f32 0.0, %v1323
  %1325 = vmatmul.bf16.gmra.mxu0 %v932
  %v1326 = vpop.f32.mrf.mxu0
  %v1327 = vadd.f32 0.0, %v1326
  %v1328 = vpop.f32.mrf.mxu0
  %v1329 = vadd.f32 0.0, %v1328
  %1330 = vmatmul.bf16.gmra.mxu0 %v935
  %v1331 = vpop.f32.mrf.mxu0
  %v1332 = vadd.f32 0.0, %v1331
  %v1333 = vpop.f32.mrf.mxu0
  %v1334 = vadd.f32 0.0, %v1333
  %1335 = vmatmul.bf16.gmra.mxu0 %v938
  %v1336 = vpop.f32.mrf.mxu0
  %v1337 = vadd.f32 0.0, %v1336
  %v1338 = vpop.f32.mrf.mxu0
  %v1339 = vadd.f32 0.0, %v1338
  %1340 = vmatmul.bf16.gmra.mxu0 %v941
  %v1341 = vpop.f32.mrf.mxu0
  %v1342 = vadd.f32 0.0, %v1341
  %v1343 = vpop.f32.mrf.mxu0
  %v1344 = vadd.f32 0.0, %v1343
  %1345 = vmatmul.bf16.gmra.mxu0 %v944
  %v1346 = vpop.f32.mrf.mxu0
  %v1347 = vadd.f32 0.0, %v1346
  %v1348 = vpop.f32.mrf.mxu0
  %v1349 = vadd.f32 0.0, %v1348
  %1350 = vmatmul.bf16.gmra.mxu0 %v947
  %v1351 = vpop.f32.mrf.mxu0
  %v1352 = vadd.f32 0.0, %v1351
  %v1353 = vpop.f32.mrf.mxu0
  %v1354 = vadd.f32 0.0, %v1353
  %1355 = vmatmul.bf16.gmra.mxu0 %v950
  %v1356 = vpop.f32.mrf.mxu0
  %v1357 = vadd.f32 0.0, %v1356
  %v1358 = vpop.f32.mrf.mxu0
  %v1359 = vadd.f32 0.0, %v1358
  %1360 = vmatmul.bf16.gmra.mxu0 %v953
  %v1361 = vpop.f32.mrf.mxu0
  %v1362 = vadd.f32 0.0, %v1361
  %v1363 = vpop.f32.mrf.mxu0
  %v1364 = vadd.f32 0.0, %v1363
  %1365 = vmatmul.bf16.gmra.mxu0 %v956
  %v1366 = vpop.f32.mrf.mxu0
  %v1367 = vadd.f32 0.0, %v1366
  %v1368 = vpop.f32.mrf.mxu0
  %v1369 = vadd.f32 0.0, %v1368
  %1370 = vmatmul.bf16.gmra.mxu0 %v959
  %v1371 = vpop.f32.mrf.mxu0
  %v1372 = vadd.f32 0.0, %v1371
  %v1373 = vpop.f32.mrf.mxu0
  %v1374 = vadd.f32 0.0, %v1373
  %1375 = vmatmul.bf16.gmra.mxu0 %v962
  %v1376 = vpop.f32.mrf.mxu0
  %v1377 = vadd.f32 0.0, %v1376
  %v1378 = vpop.f32.mrf.mxu0
  %v1379 = vadd.f32 0.0, %v1378
  %1380 = vmatmul.bf16.gmra.mxu0 %v965
  %v1381 = vpop.f32.mrf.mxu0
  %v1382 = vadd.f32 0.0, %v1381
  %v1383 = vpop.f32.mrf.mxu0
  %v1384 = vadd.f32 0.0, %v1383
  %1385 = vmatmul.bf16.gmra.mxu0 %v968
  %v1386 = vpop.f32.mrf.mxu0
  %v1387 = vadd.f32 0.0, %v1386
  %v1388 = vpop.f32.mrf.mxu0
  %v1389 = vadd.f32 0.0, %v1388
  %1390 = vmatmul.bf16.gmra.mxu0 %v971
  %v1391 = vpop.f32.mrf.mxu0
  %v1392 = vadd.f32 0.0, %v1391
  %v1393 = vpop.f32.mrf.mxu0
  %v1394 = vadd.f32 0.0, %v1393
  %1395 = vmatmul.bf16.gmra.mxu0 %v974
  %v1396 = vpop.f32.mrf.mxu0
  %v1397 = vadd.f32 0.0, %v1396
  %v1398 = vpop.f32.mrf.mxu0
  %v1399 = vadd.f32 0.0, %v1398
  %1400 = vmatmul.bf16.gmra.mxu0 %v977
  %v1401 = vpop.f32.mrf.mxu0
  %v1402 = vadd.f32 0.0, %v1401
  %v1403 = vpop.f32.mrf.mxu0
  %v1404 = vadd.f32 0.0, %v1403
  %1405 = vmatmul.bf16.gmra.mxu0 %v980
  %v1406 = vpop.f32.mrf.mxu0
  %v1407 = vadd.f32 0.0, %v1406
  %v1408 = vpop.f32.mrf.mxu0
  %v1409 = vadd.f32 0.0, %v1408
  %1410 = vmatmul.bf16.gmra.mxu0 %v983
  %v1411 = vpop.f32.mrf.mxu0
  %v1412 = vadd.f32 0.0, %v1411
  %v1413 = vpop.f32.mrf.mxu0
  %v1414 = vadd.f32 0.0, %v1413
  %1415 = vmatmul.bf16.gmra.mxu0 %v986
  %v1416 = vpop.f32.mrf.mxu0
  %v1417 = vadd.f32 0.0, %v1416
  %v1418 = vpop.f32.mrf.mxu0
  %v1419 = vadd.f32 0.0, %v1418
  %1420 = vmatmul.bf16.gmra.mxu0 %v989
  %v1421 = vpop.f32.mrf.mxu0
  %v1422 = vadd.f32 0.0, %v1421
  %v1423 = vpop.f32.mrf.mxu0
  %v1424 = vadd.f32 0.0, %v1423
  %1425 = vmatmul.bf16.gmra.mxu0 %v992
  %v1426 = vpop.f32.mrf.mxu0
  %v1427 = vadd.f32 0.0, %v1426
  %v1428 = vpop.f32.mrf.mxu0
  %v1429 = vadd.f32 0.0, %v1428
  %1430 = vmatmul.bf16.gmra.mxu0 %v995
  %v1431 = vpop.f32.mrf.mxu0
  %v1432 = vadd.f32 0.0, %v1431
  %v1433 = vpop.f32.mrf.mxu0
  %v1434 = vadd.f32 0.0, %v1433
  %1435 = vmatmul.bf16.gmra.mxu0 %v998
  %v1436 = vpop.f32.mrf.mxu0
  %v1437 = vadd.f32 0.0, %v1436
  %v1438 = vpop.f32.mrf.mxu0
  %v1439 = vadd.f32 0.0, %v1438
  %1440 = vmatmul.bf16.gmra.mxu0 %v1001
  %v1441 = vpop.f32.mrf.mxu0
  %v1442 = vadd.f32 0.0, %v1441
  %v1443 = vpop.f32.mrf.mxu0
  %v1444 = vadd.f32 0.0, %v1443
  %1445 = vmatmul.bf16.gmra.mxu0 %v1004
  %v1446 = vpop.f32.mrf.mxu0
  %v1447 = vadd.f32 0.0, %v1446
  %v1448 = vpop.f32.mrf.mxu0
  %v1449 = vadd.f32 0.0, %v1448
  %1450 = vmatmul.bf16.gmra.mxu0 %v1007
  %v1451 = vpop.f32.mrf.mxu0
  %v1452 = vadd.f32 0.0, %v1451
  %v1453 = vpop.f32.mrf.mxu0
  %v1454 = vadd.f32 0.0, %v1453
  %1455 = vmatmul.bf16.gmra.mxu0 %v1010
  %v1456 = vpop.f32.mrf.mxu0
  %v1457 = vadd.f32 0.0, %v1456
  %v1458 = vpop.f32.mrf.mxu0
  %v1459 = vadd.f32 0.0, %v1458
  %1460 = vmatmul.bf16.gmra.mxu0 %v1013
  %v1461 = vpop.f32.mrf.mxu0
  %v1462 = vadd.f32 0.0, %v1461
  %v1463 = vpop.f32.mrf.mxu0
  %v1464 = vadd.f32 0.0, %v1463
  %1465 = vmatmul.bf16.gmra.mxu0 %v1016
  %v1466 = vpop.f32.mrf.mxu0
  %v1467 = vadd.f32 0.0, %v1466
  %v1468 = vpop.f32.mrf.mxu0
  %v1469 = vadd.f32 0.0, %v1468
  %1470 = vmatmul.bf16.gmra.mxu0 %v1019
  %v1471 = vpop.f32.mrf.mxu0
  %v1472 = vadd.f32 0.0, %v1471
  %v1473 = vpop.f32.mrf.mxu0
  %v1474 = vadd.f32 0.0, %v1473
  %1475 = vmatmul.bf16.gmra.mxu0 %v1022
  %v1476 = vpop.f32.mrf.mxu0
  %v1477 = vadd.f32 0.0, %v1476
  %v1478 = vpop.f32.mrf.mxu0
  %v1479 = vadd.f32 0.0, %v1478
  %1480 = vmatmul.bf16.gmra.mxu0 %v1025
  %v1481 = vpop.f32.mrf.mxu0
  %v1482 = vadd.f32 0.0, %v1481
  %v1483 = vpop.f32.mrf.mxu0
  %v1484 = vadd.f32 0.0, %v1483
  %1485 = vmatmul.bf16.gmra.mxu0 %v1028
  %v1486 = vpop.f32.mrf.mxu0
  %v1487 = vadd.f32 0.0, %v1486
  %v1488 = vpop.f32.mrf.mxu0
  %v1489 = vadd.f32 0.0, %v1488
  %1490 = vmatmul.bf16.gmra.mxu0 %v1031
  %v1491 = vpop.f32.mrf.mxu0
  %v1492 = vadd.f32 0.0, %v1491
  %v1493 = vpop.f32.mrf.mxu0
  %v1494 = vadd.f32 0.0, %v1493
  %1495 = vmatmul.bf16.gmra.mxu0 %v1034
  %v1496 = vpop.f32.mrf.mxu0
  %v1497 = vadd.f32 0.0, %v1496
  %v1498 = vpop.f32.mrf.mxu0
  %v1499 = vadd.f32 0.0, %v1498
  %1500 = vmatmul.bf16.gmra.mxu0 %v1037
  %v1501 = vpop.f32.mrf.mxu0
  %v1502 = vadd.f32 0.0, %v1501
  %v1503 = vpop.f32.mrf.mxu0
  %v1504 = vadd.f32 0.0, %v1503
  %1505 = vmatmul.bf16.gmra.mxu0 %v1040
  %v1506 = vpop.f32.mrf.mxu0
  %v1507 = vadd.f32 0.0, %v1506
  %v1508 = vpop.f32.mrf.mxu0
  %v1509 = vadd.f32 0.0, %v1508
  %1510 = vmatmul.bf16.gmra.mxu0 %v1043
  %v1511 = vpop.f32.mrf.mxu0
  %v1512 = vadd.f32 0.0, %v1511
  %v1513 = vpop.f32.mrf.mxu0
  %v1514 = vadd.f32 0.0, %v1513
  %1515 = vmatmul.bf16.gmra.mxu0 %v1046
  %v1516 = vpop.f32.mrf.mxu0
  %v1517 = vadd.f32 0.0, %v1516
  %v1518 = vpop.f32.mrf.mxu0
  %v1519 = vadd.f32 0.0, %v1518
  %1520 = vmatmul.bf16.gmra.mxu0 %v1049
  %v1521 = vpop.f32.mrf.mxu0
  %v1522 = vadd.f32 0.0, %v1521
  %v1523 = vpop.f32.mrf.mxu0
  %v1524 = vadd.f32 0.0, %v1523
  %1525 = vmatmul.bf16.gmra.mxu0 %v1052
  %v1526 = vpop.f32.mrf.mxu0
  %v1527 = vadd.f32 0.0, %v1526
  %v1528 = vpop.f32.mrf.mxu0
  %v1529 = vadd.f32 0.0, %v1528
  %1530 = vmatmul.bf16.gmra.mxu0 %v1055
  %v1531 = vpop.f32.mrf.mxu0
  %v1532 = vadd.f32 0.0, %v1531
  %v1533 = vpop.f32.mrf.mxu0
  %v1534 = vadd.f32 0.0, %v1533
  %1535 = vmatmul.bf16.gmra.mxu0 %v1058
  %v1536 = vpop.f32.mrf.mxu0
  %v1537 = vadd.f32 0.0, %v1536
  %v1538 = vpop.f32.mrf.mxu0
  %v1539 = vadd.f32 0.0, %v1538
  %1540 = vmatmul.bf16.gmra.mxu0 %v1061
  %v1541 = vpop.f32.mrf.mxu0
  %v1542 = vadd.f32 0.0, %v1541
  %v1543 = vpop.f32.mrf.mxu0
  %v1544 = vadd.f32 0.0, %v1543
  %1545 = vmatmul.bf16.gmra.mxu0 %v1064
  %v1546 = vpop.f32.mrf.mxu0
  %v1547 = vadd.f32 0.0, %v1546
  %v1548 = vpop.f32.mrf.mxu0
  %v1549 = vadd.f32 0.0, %v1548
  %1550 = vmatmul.bf16.gmra.mxu0 %v1067
  %v1551 = vpop.f32.mrf.mxu0
  %v1552 = vadd.f32 0.0, %v1551
  %v1553 = vpop.f32.mrf.mxu0
  %v1554 = vadd.f32 0.0, %v1553
  %1555 = vmatmul.bf16.gmra.mxu0 %v1070
  %v1556 = vpop.f32.mrf.mxu0
  %v1557 = vadd.f32 0.0, %v1556
  %v1558 = vpop.f32.mrf.mxu0
  %v1559 = vadd.f32 0.0, %v1558
  %1560 = vmatmul.bf16.gmra.mxu0 %v1073
  %v1561 = vpop.f32.mrf.mxu0
  %v1562 = vadd.f32 0.0, %v1561
  %v1563 = vpop.f32.mrf.mxu0
  %v1564 = vadd.f32 0.0, %v1563
  %1565 = vmatmul.bf16.gmra.mxu0 %v1076
  %v1566 = vpop.f32.mrf.mxu0
  %v1567 = vadd.f32 0.0, %v1566
  %v1568 = vpop.f32.mrf.mxu0
  %v1569 = vadd.f32 0.0, %v1568
  %1570 = vmatmul.bf16.gmra.mxu0 %v1079
  %v1571 = vpop.f32.mrf.mxu0
  %v1572 = vadd.f32 0.0, %v1571
  %v1573 = vpop.f32.mrf.mxu0
  %v1574 = vadd.f32 0.0, %v1573
  %1575 = vmatmul.bf16.gmra.mxu0 %v1082
  %v1576 = vpop.f32.mrf.mxu0
  %v1577 = vadd.f32 0.0, %v1576
  %v1578 = vpop.f32.mrf.mxu0
  %v1579 = vadd.f32 0.0, %v1578
  %1580 = vmatmul.bf16.gmra.mxu0 %v1085
  %v1581 = vpop.f32.mrf.mxu0
  %v1582 = vadd.f32 0.0, %v1581
  %v1583 = vpop.f32.mrf.mxu0
  %v1584 = vadd.f32 0.0, %v1583
  %1585 = vmatmul.bf16.gmra.mxu0 %v1088
  %v1586 = vpop.f32.mrf.mxu0
  %v1587 = vadd.f32 0.0, %v1586
  %v1588 = vpop.f32.mrf.mxu0
  %v1589 = vadd.f32 0.0, %v1588
  %1590 = vmatmul.bf16.gmra.mxu0 %v1091
  %v1591 = vpop.f32.mrf.mxu0
  %v1592 = vadd.f32 0.0, %v1591
  %v1593 = vpop.f32.mrf.mxu0
  %v1594 = vadd.f32 0.0, %v1593
  %1595 = vmatmul.bf16.gmra.mxu0 %v1094
  %v1596 = vpop.f32.mrf.mxu0
  %v1597 = vadd.f32 0.0, %v1596
  %v1598 = vpop.f32.mrf.mxu0
  %v1599 = vadd.f32 0.0, %v1598
  %1600 = vmatmul.bf16.gmra.mxu0 %v1097
  %v1601 = vpop.f32.mrf.mxu0
  %v1602 = vadd.f32 0.0, %v1601
  %v1603 = vpop.f32.mrf.mxu0
  %v1604 = vadd.f32 0.0, %v1603
  %1605 = vmatmul.bf16.gmra.mxu0 %v1100
  %v1606 = vpop.f32.mrf.mxu0
  %v1607 = vadd.f32 0.0, %v1606
  %v1608 = vpop.f32.mrf.mxu0
  %v1609 = vadd.f32 0.0, %v1608
  %1610 = vmatmul.bf16.gmra.mxu0 %v1103
  %v1611 = vpop.f32.mrf.mxu0
  %v1612 = vadd.f32 0.0, %v1611
  %v1613 = vpop.f32.mrf.mxu0
  %v1614 = vadd.f32 0.0, %v1613
  %1615 = vmatmul.bf16.gmra.mxu0 %v1106
  %v1616 = vpop.f32.mrf.mxu0
  %v1617 = vadd.f32 0.0, %v1616
  %v1618 = vpop.f32.mrf.mxu0
  %v1619 = vadd.f32 0.0, %v1618
  %1620 = vmatmul.bf16.gmra.mxu0 %v1109
  %v1621 = vpop.f32.mrf.mxu0
  %v1622 = vadd.f32 0.0, %v1621
  %v1623 = vpop.f32.mrf.mxu0
  %v1624 = vadd.f32 0.0, %v1623
  %1625 = vmatmul.bf16.gmra.mxu0 %v1112
  %v1626 = vpop.f32.mrf.mxu0
  %v1627 = vadd.f32 0.0, %v1626
  %v1628 = vpop.f32.mrf.mxu0
  %v1629 = vadd.f32 0.0, %v1628
  %1630 = vmatmul.bf16.gmra.mxu0 %v1115
  %v1631 = vpop.f32.mrf.mxu0
  %v1632 = vadd.f32 0.0, %v1631
  %v1633 = vpop.f32.mrf.mxu0
  %v1634 = vadd.f32 0.0, %v1633
  %1635 = vmatmul.bf16.gmra.mxu0 %v1118
  %v1636 = vpop.f32.mrf.mxu0
  %v1637 = vadd.f32 0.0, %v1636
  %v1638 = vpop.f32.mrf.mxu0
  %v1639 = vadd.f32 0.0, %v1638
  %1640 = vmatmul.bf16.gmra.mxu0 %v1121
  %v1641 = vpop.f32.mrf.mxu0
  %v1642 = vadd.f32 0.0, %v1641
  %v1643 = vpop.f32.mrf.mxu0
  %v1644 = vadd.f32 0.0, %v1643
  %1645 = vmatmul.bf16.gmra.mxu0 %v1124
  %v1646 = vpop.f32.mrf.mxu0
  %v1647 = vadd.f32 0.0, %v1646
  %v1648 = vpop.f32.mrf.mxu0
  %v1649 = vadd.f32 0.0, %v1648
  %1650 = vmatmul.bf16.gmra.mxu0 %v1127
  %v1651 = vpop.f32.mrf.mxu0
  %v1652 = vadd.f32 0.0, %v1651
  %v1653 = vpop.f32.mrf.mxu0
  %v1654 = vadd.f32 0.0, %v1653
  %1655 = vmatmul.bf16.gmra.mxu0 %v1130
  %v1656 = vpop.f32.mrf.mxu0
  %v1657 = vadd.f32 0.0, %v1656
  %v1658 = vpop.f32.mrf.mxu0
  %v1659 = vadd.f32 0.0, %v1658
  %1660 = vmatmul.bf16.gmra.mxu0 %v1133
  %v1661 = vpop.f32.mrf.mxu0
  %v1662 = vadd.f32 0.0, %v1661
  %v1663 = vpop.f32.mrf.mxu0
  %v1664 = vadd.f32 0.0, %v1663
  %1665 = vmatmul.bf16.gmra.mxu0 %v1136
  %v1666 = vpop.f32.mrf.mxu0
  %v1667 = vadd.f32 0.0, %v1666
  %v1668 = vpop.f32.mrf.mxu0
  %v1669 = vadd.f32 0.0, %v1668
  %1670 = vmatmul.bf16.gmra.mxu0 %v1139
  %v1671 = vpop.f32.mrf.mxu0
  %v1672 = vadd.f32 0.0, %v1671
  %v1673 = vpop.f32.mrf.mxu0
  %v1674 = vadd.f32 0.0, %v1673
  %1675 = vmatmul.bf16.gmra.mxu0 %v1142
  %v1676 = vpop.f32.mrf.mxu0
  %v1677 = vadd.f32 0.0, %v1676
  %v1678 = vpop.f32.mrf.mxu0
  %v1679 = vadd.f32 0.0, %v1678
  %1680 = vmatmul.bf16.gmra.mxu0 %v1145
  %v1681 = vpop.f32.mrf.mxu0
  %v1682 = vadd.f32 0.0, %v1681
  %v1683 = vpop.f32.mrf.mxu0
  %v1684 = vadd.f32 0.0, %v1683
  %1685 = vmatmul.bf16.gmra.mxu0 %v1148
  %v1686 = vpop.f32.mrf.mxu0
  %v1687 = vadd.f32 0.0, %v1686
  %v1688 = vpop.f32.mrf.mxu0
  %v1689 = vadd.f32 0.0, %v1688
  %1690 = vmatmul.bf16.gmra.mxu0 %v1151
  %v1691 = vpop.f32.mrf.mxu0
  %v1692 = vadd.f32 0.0, %v1691
  %v1693 = vpop.f32.mrf.mxu0
  %v1694 = vadd.f32 0.0, %v1693
  %1695 = vmatmul.bf16.gmra.mxu0 %v1154
  %v1696 = vpop.f32.mrf.mxu0
  %v1697 = vadd.f32 0.0, %v1696
  %v1698 = vpop.f32.mrf.mxu0
  %v1699 = vadd.f32 0.0, %v1698
  %1700 = vmatmul.bf16.gmra.mxu0 %v1157
  %v1701 = vpop.f32.mrf.mxu0
  %v1702 = vadd.f32 0.0, %v1701
  %v1703 = vpop.f32.mrf.mxu0
  %v1704 = vadd.f32 0.0, %v1703
  %1705 = vmatmul.bf16.gmra.mxu0 %v1160
  %v1706 = vpop.f32.mrf.mxu0
  %v1707 = vadd.f32 0.0, %v1706
  %v1708 = vpop.f32.mrf.mxu0
  %v1709 = vadd.f32 0.0, %v1708
  %1710 = vmatmul.bf16.gmra.mxu0 %v1163
  %v1711 = vpop.f32.mrf.mxu0
  %v1712 = vadd.f32 0.0, %v1711
  %v1713 = vpop.f32.mrf.mxu0
  %v1714 = vadd.f32 0.0, %v1713
  %1715 = vmatmul.bf16.gmra.mxu0 %v1166
  %v1716 = vpop.f32.mrf.mxu0
  %v1717 = vadd.f32 0.0, %v1716
  %v1718 = vpop.f32.mrf.mxu0
  %v1719 = vadd.f32 0.0, %v1718
  %1720 = vmatmul.bf16.gmra.mxu0 %v1169
  %v1721 = vpop.f32.mrf.mxu0
  %v1722 = vadd.f32 0.0, %v1721
  %v1723 = vpop.f32.mrf.mxu0
  %v1724 = vadd.f32 0.0, %v1723
  %1725 = vmatmul.bf16.gmra.mxu0 %v1172
  %v1726 = vpop.f32.mrf.mxu0
  %v1727 = vadd.f32 0.0, %v1726
  %v1728 = vpop.f32.mrf.mxu0
  %v1729 = vadd.f32 0.0, %v1728
  %1730 = vmatmul.bf16.gmra.mxu0 %v1175
  %v1731 = vpop.f32.mrf.mxu0
  %v1732 = vadd.f32 0.0, %v1731
  %v1733 = vpop.f32.mrf.mxu0
  %v1734 = vadd.f32 0.0, %v1733
  %1735 = vmatmul.bf16.gmra.mxu0 %v1178
  %v1736 = vpop.f32.mrf.mxu0
  %v1737 = vadd.f32 0.0, %v1736
  %v1738 = vpop.f32.mrf.mxu0
  %v1739 = vadd.f32 0.0, %v1738
  %1740 = vmatmul.bf16.gmra.mxu0 %v1181
  %v1741 = vpop.f32.mrf.mxu0
  %v1742 = vadd.f32 0.0, %v1741
  %v1743 = vpop.f32.mrf.mxu0
  %v1744 = vadd.f32 0.0, %v1743
  %1745 = vmatmul.bf16.gmra.mxu0 %v1184
  %v1746 = vpop.f32.mrf.mxu0
  %v1747 = vadd.f32 0.0, %v1746
  %v1748 = vpop.f32.mrf.mxu0
  %v1749 = vadd.f32 0.0, %v1748
  %1750 = vmatmul.bf16.gmra.mxu0 %v1187
  %v1751 = vpop.f32.mrf.mxu0
  %v1752 = vadd.f32 0.0, %v1751
  %v1753 = vpop.f32.mrf.mxu0
  %v1754 = vadd.f32 0.0, %v1753
  %1755 = vmatmul.bf16.gmra.mxu0 %v1190
  %v1756 = vpop.f32.mrf.mxu0
  %v1757 = vadd.f32 0.0, %v1756
  %v1758 = vpop.f32.mrf.mxu0
  %v1759 = vadd.f32 0.0, %v1758
  %1760 = vmatmul.bf16.gmra.mxu0 %v1193
  %v1761 = vpop.f32.mrf.mxu0
  %v1762 = vadd.f32 0.0, %v1761
  %v1763 = vpop.f32.mrf.mxu0
  %v1764 = vadd.f32 0.0, %v1763
  %1765 = vmatmul.bf16.gmra.mxu0 %v1196
  %v1766 = vpop.f32.mrf.mxu0
  %v1767 = vadd.f32 0.0, %v1766
  %v1768 = vpop.f32.mrf.mxu0
  %v1769 = vadd.f32 0.0, %v1768
  %1770 = vmatmul.bf16.gmra.mxu0 %v1199
  %v1771 = vpop.f32.mrf.mxu0
  %v1772 = vadd.f32 0.0, %v1771
  %v1773 = vpop.f32.mrf.mxu0
  %v1774 = vadd.f32 0.0, %v1773
  %1775 = vmatmul.bf16.gmra.mxu0 %v1202
  %v1776 = vpop.f32.mrf.mxu0
  %v1777 = vadd.f32 0.0, %v1776
  %v1778 = vpop.f32.mrf.mxu0
  %v1779 = vadd.f32 0.0, %v1778
  %1780 = vmatmul.bf16.gmra.mxu0 %v1205
  %v1781 = vpop.f32.mrf.mxu0
  %v1782 = vadd.f32 0.0, %v1781
  %v1783 = vpop.f32.mrf.mxu0
  %v1784 = vadd.f32 0.0, %v1783
  %1785 = vmatmul.bf16.gmra.mxu0 %v1208
  %v1786 = vpop.f32.mrf.mxu0
  %v1787 = vadd.f32 0.0, %v1786
  %v1788 = vpop.f32.mrf.mxu0
  %v1789 = vadd.f32 0.0, %v1788
  %1790 = vmatmul.bf16.gmra.mxu0 %v1211
  %v1791 = vpop.f32.mrf.mxu0
  %v1792 = vadd.f32 0.0, %v1791
  %v1793 = vpop.f32.mrf.mxu0
  %v1794 = vadd.f32 0.0, %v1793
  %1795 = vmatmul.bf16.gmra.mxu0 %v1214
  %v1796 = vpop.f32.mrf.mxu0
  %v1797 = vadd.f32 0.0, %v1796
  %v1798 = vpop.f32.mrf.mxu0
  %v1799 = vadd.f32 0.0, %v1798
  %1800 = vmatmul.bf16.gmra.mxu0 %v1217
  %v1801 = vpop.f32.mrf.mxu0
  %v1802 = vadd.f32 0.0, %v1801
  %v1803 = vpop.f32.mrf.mxu0
  %v1804 = vadd.f32 0.0, %v1803
  %1805 = vmatmul.bf16.gmra.mxu0 %v1220
  %v1806 = vpop.f32.mrf.mxu0
  %v1807 = vadd.f32 0.0, %v1806
  %v1808 = vpop.f32.mrf.mxu0
  %v1809 = vadd.f32 0.0, %v1808
  %1810 = vmatmul.bf16.gmra.mxu0 %v1223
  %v1811 = vpop.f32.mrf.mxu0
  %v1812 = vadd.f32 0.0, %v1811
  %v1813 = vpop.f32.mrf.mxu0
  %v1814 = vadd.f32 0.0, %v1813
  %1815 = vmatmul.bf16.gmra.mxu0 %v1226
  %v1816 = vpop.f32.mrf.mxu0
  %v1817 = vadd.f32 0.0, %v1816
  %v1818 = vpop.f32.mrf.mxu0
  %v1819 = vadd.f32 0.0, %v1818
  %1820 = vmatmul.bf16.gmra.mxu0 %v1229
  %v1821 = vpop.f32.mrf.mxu0
  %v1822 = vadd.f32 0.0, %v1821
  %v1823 = vpop.f32.mrf.mxu0
  %v1824 = vadd.f32 0.0, %v1823
  %1825 = vmatmul.bf16.gmra.mxu0 %v1232
  %v1826 = vpop.f32.mrf.mxu0
  %v1827 = vadd.f32 0.0, %v1826
  %v1828 = vpop.f32.mrf.mxu0
  %v1829 = vadd.f32 0.0, %v1828
  %1830 = vmatmul.bf16.gmra.mxu0 %v1235
  %v1831 = vpop.f32.mrf.mxu0
  %v1832 = vadd.f32 0.0, %v1831
  %v1833 = vpop.f32.mrf.mxu0
  %v1834 = vadd.f32 0.0, %v1833
  %1835 = vmatmul.bf16.gmra.mxu0 %v1238
  %v1836 = vpop.f32.mrf.mxu0
  %v1837 = vadd.f32 0.0, %v1836
  %v1838 = vpop.f32.mrf.mxu0
  %v1839 = vadd.f32 0.0, %v1838
  %1840 = vmatmul.bf16.gmra.mxu0 %v1241
  %v1841 = vpop.f32.mrf.mxu0
  %v1842 = vadd.f32 0.0, %v1841
  %v1843 = vpop.f32.mrf.mxu0
  %v1844 = vadd.f32 0.0, %v1843
  %1845 = vmatmul.bf16.gmra.mxu0 %v1244
  %v1846 = vpop.f32.mrf.mxu0
  %v1847 = vadd.f32 0.0, %v1846
  %v1848 = vpop.f32.mrf.mxu0
  %v1849 = vadd.f32 0.0, %v1848
  %1850 = vmatmul.bf16.gmra.mxu0 %v1247
  %v1851 = vpop.f32.mrf.mxu0
  %v1852 = vadd.f32 0.0, %v1851
  %v1853 = vpop.f32.mrf.mxu0
  %v1854 = vadd.f32 0.0, %v1853
  %1855 = vmatmul.bf16.gmra.mxu0 %v1250
  %v1856 = vpop.f32.mrf.mxu0
  %v1857 = vadd.f32 0.0, %v1856
  %v1858 = vpop.f32.mrf.mxu0
  %v1859 = vadd.f32 0.0, %v1858
  %1860 = vmatmul.bf16.gmra.mxu0 %v1253
  %v1861 = vpop.f32.mrf.mxu0
  %v1862 = vadd.f32 0.0, %v1861
  %v1863 = vpop.f32.mrf.mxu0
  %v1864 = vadd.f32 0.0, %v1863
  %1865 = vmatmul.bf16.gmra.mxu0 %v1256
  %v1866 = vpop.f32.mrf.mxu0
  %v1867 = vadd.f32 0.0, %v1866
  %v1868 = vpop.f32.mrf.mxu0
  %v1869 = vadd.f32 0.0, %v1868
  %1870 = vmatmul.bf16.gmra.mxu0 %v1259
  %v1871 = vpop.f32.mrf.mxu0
  %v1872 = vadd.f32 0.0, %v1871
  %v1873 = vpop.f32.mrf.mxu0
  %v1874 = vadd.f32 0.0, %v1873
  %1875 = vmatmul.bf16.gmra.mxu0 %v1262
  %v1876 = vpop.f32.mrf.mxu0
  %v1877 = vadd.f32 0.0, %v1876
  %v1878 = vpop.f32.mrf.mxu0
  %v1879 = vadd.f32 0.0, %v1878
  %1880 = vmatmul.bf16.gmra.mxu0 %v1265
  %v1881 = vpop.f32.mrf.mxu0
  %v1882 = vadd.f32 0.0, %v1881
  %v1883 = vpop.f32.mrf.mxu0
  %v1884 = vadd.f32 0.0, %v1883
  %1885 = vmatmul.bf16.gmra.mxu0 %v1268
  %v1886 = vpop.f32.mrf.mxu0
  %v1887 = vadd.f32 0.0, %v1886
  %v1888 = vpop.f32.mrf.mxu0
  %v1889 = vadd.f32 0.0, %v1888
  %1890 = vmatmul.bf16.gmra.mxu0 %v1271
  %v1891 = vpop.f32.mrf.mxu0
  %v1892 = vadd.f32 0.0, %v1891
  %v1893 = vpop.f32.mrf.mxu0
  %v1894 = vadd.f32 0.0, %v1893
  %1895 = vmatmul.bf16.gmra.mxu0 %v1274
  %v1896 = vpop.f32.mrf.mxu0
  %v1897 = vadd.f32 0.0, %v1896
  %v1898 = vpop.f32.mrf.mxu0
  %v1899 = vadd.f32 0.0, %v1898
  %1900 = vmatmul.bf16.gmra.mxu0 %v1277
  %v1901 = vpop.f32.mrf.mxu0
  %v1902 = vadd.f32 0.0, %v1901
  %v1903 = vpop.f32.mrf.mxu0
  %v1904 = vadd.f32 0.0, %v1903
  %1905 = vmatmul.bf16.gmra.mxu0 %v1280
  %v1906 = vpop.f32.mrf.mxu0
  %v1907 = vadd.f32 0.0, %v1906
  %v1908 = vpop.f32.mrf.mxu0
  %v1909 = vadd.f32 0.0, %v1908
  %1910 = vmatmul.bf16.gmra.mxu0 %v1283
  %v1911 = vpop.f32.mrf.mxu0
  %v1912 = vadd.f32 0.0, %v1911
  %v1913 = vpop.f32.mrf.mxu0
  %v1914 = vadd.f32 0.0, %v1913
  %1915 = vmatmul.bf16.gmra.mxu0 %v1286
  %v1916 = vpop.f32.mrf.mxu0
  %v1917 = vadd.f32 0.0, %v1916
  %v1918 = vpop.f32.mrf.mxu0
  %v1919 = vadd.f32 0.0, %v1918
  %1920 = vmatmul.bf16.gmra.mxu0 %v1289
  %v1921 = vpop.f32.mrf.mxu0
  %v1922 = vadd.f32 0.0, %v1921
  %v1923 = vpop.f32.mrf.mxu0
  %v1924 = vadd.f32 0.0, %v1923
  %1925 = vmatmul.bf16.gmra.mxu0 %v1292
  %v1926 = vpop.f32.mrf.mxu0
  %v1927 = vadd.f32 0.0, %v1926
  %v1928 = vpop.f32.mrf.mxu0
  %v1929 = vadd.f32 0.0, %v1928
  %1930 = vmatmul.bf16.gmra.mxu0 %v1295
  %v1931 = vpop.f32.mrf.mxu0
  %v1932 = vadd.f32 0.0, %v1931
  %v1933 = vpop.f32.mrf.mxu0
  %v1934 = vadd.f32 0.0, %v1933
  %1935 = vmatmul.bf16.gmra.mxu0 %v1298
  %v1936 = vpop.f32.mrf.mxu0
  %v1937 = vadd.f32 0.0, %v1936
  %v1938 = vpop.f32.mrf.mxu0
  %v1939 = vadd.f32 0.0, %v1938
  %1940 = vmatmul.bf16.gmra.mxu0 %v1301
  %v1941 = vpop.f32.mrf.mxu0
  %v1942 = vadd.f32 0.0, %v1941
  %v1943 = vpop.f32.mrf.mxu0
  %v1944 = vadd.f32 0.0, %v1943
  %1945 = vmatmul.bf16.gmra.mxu0 %v1304
  %v1946 = vpop.f32.mrf.mxu0
  %v1947 = vadd.f32 0.0, %v1946
  %v1948 = vpop.f32.mrf.mxu0
  %v1949 = vadd.f32 0.0, %v1948
  %1950 = vmatmul.bf16.gmra.mxu0 %v1307
  %v1951 = vpop.f32.mrf.mxu0
  %v1952 = vadd.f32 0.0, %v1951
  %v1953 = vpop.f32.mrf.mxu0
  %v1954 = vadd.f32 0.0, %v1953
  %1955 = vmatmul.bf16.gmra.mxu0 %v1310
  %v1956 = vpop.f32.mrf.mxu0
  %v1957 = vadd.f32 0.0, %v1956
  %v1958 = vpop.f32.mrf.mxu0
  %v1959 = vadd.f32 0.0, %v1958
  %1960 = vdwg.mxu0
  %v1961 = vmax.f32 %v1322, %v1482
  %v1962 = vmax.f32 %v1324, %v1484
  %v1963 = vmax.f32 %v1327, %v1487
  %v1964 = vmax.f32 %v1329, %v1489
  %v1965 = vmax.f32 %v1332, %v1492
  %v1966 = vmax.f32 %v1334, %v1494
  %v1967 = vmax.f32 %v1337, %v1497
  %v1968 = vmax.f32 %v1339, %v1499
  %v1969 = vmax.f32 %v1342, %v1502
  %v1970 = vmax.f32 %v1344, %v1504
  %v1971 = vmax.f32 %v1347, %v1507
  %v1972 = vmax.f32 %v1349, %v1509
  %v1973 = vmax.f32 %v1352, %v1512
  %v1974 = vmax.f32 %v1354, %v1514
  %v1975 = vmax.f32 %v1357, %v1517
  %v1976 = vmax.f32 %v1359, %v1519
  %v1977 = vmax.f32 %v1362, %v1522
  %v1978 = vmax.f32 %v1364, %v1524
  %v1979 = vmax.f32 %v1367, %v1527
  %v1980 = vmax.f32 %v1369, %v1529
  %v1981 = vmax.f32 %v1372, %v1532
  %v1982 = vmax.f32 %v1374, %v1534
  %v1983 = vmax.f32 %v1377, %v1537
  %v1984 = vmax.f32 %v1379, %v1539
  %v1985 = vmax.f32 %v1382, %v1542
  %v1986 = vmax.f32 %v1384, %v1544
  %v1987 = vmax.f32 %v1387, %v1547
  %v1988 = vmax.f32 %v1389, %v1549
  %v1989 = vmax.f32 %v1392, %v1552
  %v1990 = vmax.f32 %v1394, %v1554
  %v1991 = vmax.f32 %v1397, %v1557
  %v1992 = vmax.f32 %v1399, %v1559
  %v1993 = vmax.f32 %v1402, %v1562
  %v1994 = vmax.f32 %v1404, %v1564
  %v1995 = vmax.f32 %v1407, %v1567
  %v1996 = vmax.f32 %v1409, %v1569
  %v1997 = vmax.f32 %v1412, %v1572
  %v1998 = vmax.f32 %v1414, %v1574
  %v1999 = vmax.f32 %v1417, %v1577
  %v2000 = vmax.f32 %v1419, %v1579
  %v2001 = vmax.f32 %v1422, %v1582
  %v2002 = vmax.f32 %v1424, %v1584
  %v2003 = vmax.f32 %v1427, %v1587
  %v2004 = vmax.f32 %v1429, %v1589
  %v2005 = vmax.f32 %v1432, %v1592
  %v2006 = vmax.f32 %v1434, %v1594
  %v2007 = vmax.f32 %v1437, %v1597
  %v2008 = vmax.f32 %v1439, %v1599
  %v2009 = vmax.f32 %v1442, %v1602
  %v2010 = vmax.f32 %v1444, %v1604
  %v2011 = vmax.f32 %v1447, %v1607
  %v2012 = vmax.f32 %v1449, %v1609
  %v2013 = vmax.f32 %v1452, %v1612
  %v2014 = vmax.f32 %v1454, %v1614
  %v2015 = vmax.f32 %v1457, %v1617
  %v2016 = vmax.f32 %v1459, %v1619
  %v2017 = vmax.f32 %v1462, %v1622
  %v2018 = vmax.f32 %v1464, %v1624
  %v2019 = vmax.f32 %v1467, %v1627
  %v2020 = vmax.f32 %v1469, %v1629
  %v2021 = vmax.f32 %v1472, %v1632
  %v2022 = vmax.f32 %v1474, %v1634
  %v2023 = vmax.f32 %v1477, %v1637
  %v2024 = vmax.f32 %v1479, %v1639
  %v2025 = vmax.f32 %v1642, %v1802
  %v2026 = vmax.f32 %v1644, %v1804
  %v2027 = vmax.f32 %v1647, %v1807
  %v2028 = vmax.f32 %v1649, %v1809
  %v2029 = vmax.f32 %v1652, %v1812
  %v2030 = vmax.f32 %v1654, %v1814
  %v2031 = vmax.f32 %v1657, %v1817
  %v2032 = vmax.f32 %v1659, %v1819
  %v2033 = vmax.f32 %v1662, %v1822
  %v2034 = vmax.f32 %v1664, %v1824
  %v2035 = vmax.f32 %v1667, %v1827
  %v2036 = vmax.f32 %v1669, %v1829
  %v2037 = vmax.f32 %v1672, %v1832
  %v2038 = vmax.f32 %v1674, %v1834
  %v2039 = vmax.f32 %v1677, %v1837
  %v2040 = vmax.f32 %v1679, %v1839
  %v2041 = vmax.f32 %v1682, %v1842
  %v2042 = vmax.f32 %v1684, %v1844
  %v2043 = vmax.f32 %v1687, %v1847
  %v2044 = vmax.f32 %v1689, %v1849
  %v2045 = vmax.f32 %v1692, %v1852
  %v2046 = vmax.f32 %v1694, %v1854
  %v2047 = vmax.f32 %v1697, %v1857
  %v2048 = vmax.f32 %v1699, %v1859
  %v2049 = vmax.f32 %v1702, %v1862
  %v2050 = vmax.f32 %v1704, %v1864
  %v2051 = vmax.f32 %v1707, %v1867
  %v2052 = vmax.f32 %v1709, %v1869
  %v2053 = vmax.f32 %v1712, %v1872
  %v2054 = vmax.f32 %v1714, %v1874
  %v2055 = vmax.f32 %v1717, %v1877
  %v2056 = vmax.f32 %v1719, %v1879
  %v2057 = vmax.f32 %v1722, %v1882
  %v2058 = vmax.f32 %v1724, %v1884
  %v2059 = vmax.f32 %v1727, %v1887
  %v2060 = vmax.f32 %v1729, %v1889
  %v2061 = vmax.f32 %v1732, %v1892
  %v2062 = vmax.f32 %v1734, %v1894
  %v2063 = vmax.f32 %v1737, %v1897
  %v2064 = vmax.f32 %v1739, %v1899
  %v2065 = vmax.f32 %v1742, %v1902
  %v2066 = vmax.f32 %v1744, %v1904
  %v2067 = vmax.f32 %v1747, %v1907
  %v2068 = vmax.f32 %v1749, %v1909
  %v2069 = vmax.f32 %v1752, %v1912
  %v2070 = vmax.f32 %v1754, %v1914
  %v2071 = vmax.f32 %v1757, %v1917
  %v2072 = vmax.f32 %v1759, %v1919
  %v2073 = vmax.f32 %v1762, %v1922
  %v2074 = vmax.f32 %v1764, %v1924
  %v2075 = vmax.f32 %v1767, %v1927
  %v2076 = vmax.f32 %v1769, %v1929
  %v2077 = vmax.f32 %v1772, %v1932
  %v2078 = vmax.f32 %v1774, %v1934
  %v2079 = vmax.f32 %v1777, %v1937
  %v2080 = vmax.f32 %v1779, %v1939
  %v2081 = vmax.f32 %v1782, %v1942
  %v2082 = vmax.f32 %v1784, %v1944
  %v2083 = vmax.f32 %v1787, %v1947
  %v2084 = vmax.f32 %v1789, %v1949
  %v2085 = vmax.f32 %v1792, %v1952
  %v2086 = vmax.f32 %v1794, %v1954
  %v2087 = vmax.f32 %v1797, %v1957
  %v2088 = vmax.f32 %v1799, %v1959
  %v2089 = vmax.f32 %v1961, %v2025
  %v2090 = vmax.f32 %v1962, %v2026
  %v2091 = vmax.f32 %v1963, %v2027
  %v2092 = vmax.f32 %v1964, %v2028
  %v2093 = vmax.f32 %v1965, %v2029
  %v2094 = vmax.f32 %v1966, %v2030
  %v2095 = vmax.f32 %v1967, %v2031
  %v2096 = vmax.f32 %v1968, %v2032
  %v2097 = vmax.f32 %v1969, %v2033
  %v2098 = vmax.f32 %v1970, %v2034
  %v2099 = vmax.f32 %v1971, %v2035
  %v2100 = vmax.f32 %v1972, %v2036
  %v2101 = vmax.f32 %v1973, %v2037
  %v2102 = vmax.f32 %v1974, %v2038
  %v2103 = vmax.f32 %v1975, %v2039
  %v2104 = vmax.f32 %v1976, %v2040
  %v2105 = vmax.f32 %v1977, %v2041
  %v2106 = vmax.f32 %v1978, %v2042
  %v2107 = vmax.f32 %v1979, %v2043
  %v2108 = vmax.f32 %v1980, %v2044
  %v2109 = vmax.f32 %v1981, %v2045
  %v2110 = vmax.f32 %v1982, %v2046
  %v2111 = vmax.f32 %v1983, %v2047
  %v2112 = vmax.f32 %v1984, %v2048
  %v2113 = vmax.f32 %v1985, %v2049
  %v2114 = vmax.f32 %v1986, %v2050
  %v2115 = vmax.f32 %v1987, %v2051
  %v2116 = vmax.f32 %v1988, %v2052
  %v2117 = vmax.f32 %v1989, %v2053
  %v2118 = vmax.f32 %v1990, %v2054
  %v2119 = vmax.f32 %v1991, %v2055
  %v2120 = vmax.f32 %v1992, %v2056
  %v2121 = vmax.f32 %v1993, %v2057
  %v2122 = vmax.f32 %v1994, %v2058
  %v2123 = vmax.f32 %v1995, %v2059
  %v2124 = vmax.f32 %v1996, %v2060
  %v2125 = vmax.f32 %v1997, %v2061
  %v2126 = vmax.f32 %v1998, %v2062
  %v2127 = vmax.f32 %v1999, %v2063
  %v2128 = vmax.f32 %v2000, %v2064
  %v2129 = vmax.f32 %v2001, %v2065
  %v2130 = vmax.f32 %v2002, %v2066
  %v2131 = vmax.f32 %v2003, %v2067
  %v2132 = vmax.f32 %v2004, %v2068
  %v2133 = vmax.f32 %v2005, %v2069
  %v2134 = vmax.f32 %v2006, %v2070
  %v2135 = vmax.f32 %v2007, %v2071
  %v2136 = vmax.f32 %v2008, %v2072
  %v2137 = vmax.f32 %v2009, %v2073
  %v2138 = vmax.f32 %v2010, %v2074
  %v2139 = vmax.f32 %v2011, %v2075
  %v2140 = vmax.f32 %v2012, %v2076
  %v2141 = vmax.f32 %v2013, %v2077
  %v2142 = vmax.f32 %v2014, %v2078
  %v2143 = vmax.f32 %v2015, %v2079
  %v2144 = vmax.f32 %v2016, %v2080
  %v2145 = vmax.f32 %v2017, %v2081
  %v2146 = vmax.f32 %v2018, %v2082
  %v2147 = vmax.f32 %v2019, %v2083
  %v2148 = vmax.f32 %v2020, %v2084
  %v2149 = vmax.f32 %v2021, %v2085
  %v2150 = vmax.f32 %v2022, %v2086
  %v2151 = vmax.f32 %v2023, %v2087
  %v2152 = vmax.f32 %v2024, %v2088
  %v2153 = vld [vmem:[%s2] sm:$0x1]
  %v2155 = vperm.slane %v2153, 0
  %v2157 = vadd.f32 %v2089, %v2155
  %v2158 = vadd.f32 %v2090, %v2155
  %v2159 = vadd.f32 %v2091, %v2155
  %v2160 = vadd.f32 %v2092, %v2155
  %v2161 = vadd.f32 %v2093, %v2155
  %v2162 = vadd.f32 %v2094, %v2155
  %v2163 = vadd.f32 %v2095, %v2155
  %v2164 = vadd.f32 %v2096, %v2155
  %v2165 = vadd.f32 %v2097, %v2155
  %v2166 = vadd.f32 %v2098, %v2155
  %v2167 = vadd.f32 %v2099, %v2155
  %v2168 = vadd.f32 %v2100, %v2155
  %v2169 = vadd.f32 %v2101, %v2155
  %v2170 = vadd.f32 %v2102, %v2155
  %v2171 = vadd.f32 %v2103, %v2155
  %v2172 = vadd.f32 %v2104, %v2155
  %v2173 = vadd.f32 %v2105, %v2155
  %v2174 = vadd.f32 %v2106, %v2155
  %v2175 = vadd.f32 %v2107, %v2155
  %v2176 = vadd.f32 %v2108, %v2155
  %v2177 = vadd.f32 %v2109, %v2155
  %v2178 = vadd.f32 %v2110, %v2155
  %v2179 = vadd.f32 %v2111, %v2155
  %v2180 = vadd.f32 %v2112, %v2155
  %v2181 = vadd.f32 %v2113, %v2155
  %v2182 = vadd.f32 %v2114, %v2155
  %v2183 = vadd.f32 %v2115, %v2155
  %v2184 = vadd.f32 %v2116, %v2155
  %v2185 = vadd.f32 %v2117, %v2155
  %v2186 = vadd.f32 %v2118, %v2155
  %v2187 = vadd.f32 %v2119, %v2155
  %v2188 = vadd.f32 %v2120, %v2155
  %v2189 = vadd.f32 %v2121, %v2155
  %v2190 = vadd.f32 %v2122, %v2155
  %v2191 = vadd.f32 %v2123, %v2155
  %v2192 = vadd.f32 %v2124, %v2155
  %v2193 = vadd.f32 %v2125, %v2155
  %v2194 = vadd.f32 %v2126, %v2155
  %v2195 = vadd.f32 %v2127, %v2155
  %v2196 = vadd.f32 %v2128, %v2155
  %v2197 = vadd.f32 %v2129, %v2155
  %v2198 = vadd.f32 %v2130, %v2155
  %v2199 = vadd.f32 %v2131, %v2155
  %v2200 = vadd.f32 %v2132, %v2155
  %v2201 = vadd.f32 %v2133, %v2155
  %v2202 = vadd.f32 %v2134, %v2155
  %v2203 = vadd.f32 %v2135, %v2155
  %v2204 = vadd.f32 %v2136, %v2155
  %v2205 = vadd.f32 %v2137, %v2155
  %v2206 = vadd.f32 %v2138, %v2155
  %v2207 = vadd.f32 %v2139, %v2155
  %v2208 = vadd.f32 %v2140, %v2155
  %v2209 = vadd.f32 %v2141, %v2155
  %v2210 = vadd.f32 %v2142, %v2155
  %v2211 = vadd.f32 %v2143, %v2155
  %v2212 = vadd.f32 %v2144, %v2155
  %v2213 = vadd.f32 %v2145, %v2155
  %v2214 = vadd.f32 %v2146, %v2155
  %v2215 = vadd.f32 %v2147, %v2155
  %v2216 = vadd.f32 %v2148, %v2155
  %v2217 = vadd.f32 %v2149, %v2155
  %v2218 = vadd.f32 %v2150, %v2155
  %v2219 = vadd.f32 %v2151, %v2155
  %v2220 = vadd.f32 %v2152, %v2155
  %v2221 = vmax.f32 %v2157, 0.0
  %v2222 = vmax.f32 %v2158, 0.0
  %v2223 = vmax.f32 %v2159, 0.0
  %v2224 = vmax.f32 %v2160, 0.0
  %v2225 = vmax.f32 %v2161, 0.0
  %v2226 = vmax.f32 %v2162, 0.0
  %v2227 = vmax.f32 %v2163, 0.0
  %v2228 = vmax.f32 %v2164, 0.0
  %v2229 = vmax.f32 %v2165, 0.0
  %v2230 = vmax.f32 %v2166, 0.0
  %v2231 = vmax.f32 %v2167, 0.0
  %v2232 = vmax.f32 %v2168, 0.0
  %v2233 = vmax.f32 %v2169, 0.0
  %v2234 = vmax.f32 %v2170, 0.0
  %v2235 = vmax.f32 %v2171, 0.0
  %v2236 = vmax.f32 %v2172, 0.0
  %v2237 = vmax.f32 %v2173, 0.0
  %v2238 = vmax.f32 %v2174, 0.0
  %v2239 = vmax.f32 %v2175, 0.0
  %v2240 = vmax.f32 %v2176, 0.0
  %v2241 = vmax.f32 %v2177, 0.0
  %v2242 = vmax.f32 %v2178, 0.0
  %v2243 = vmax.f32 %v2179, 0.0
  %v2244 = vmax.f32 %v2180, 0.0
  %v2245 = vmax.f32 %v2181, 0.0
  %v2246 = vmax.f32 %v2182, 0.0
  %v2247 = vmax.f32 %v2183, 0.0
  %v2248 = vmax.f32 %v2184, 0.0
  %v2249 = vmax.f32 %v2185, 0.0
  %v2250 = vmax.f32 %v2186, 0.0
  %v2251 = vmax.f32 %v2187, 0.0
  %v2252 = vmax.f32 %v2188, 0.0
  %v2253 = vmax.f32 %v2189, 0.0
  %v2254 = vmax.f32 %v2190, 0.0
  %v2255 = vmax.f32 %v2191, 0.0
  %v2256 = vmax.f32 %v2192, 0.0
  %v2257 = vmax.f32 %v2193, 0.0
  %v2258 = vmax.f32 %v2194, 0.0
  %v2259 = vmax.f32 %v2195, 0.0
  %v2260 = vmax.f32 %v2196, 0.0
  %v2261 = vmax.f32 %v2197, 0.0
  %v2262 = vmax.f32 %v2198, 0.0
  %v2263 = vmax.f32 %v2199, 0.0
  %v2264 = vmax.f32 %v2200, 0.0
  %v2265 = vmax.f32 %v2201, 0.0
  %v2266 = vmax.f32 %v2202, 0.0
  %v2267 = vmax.f32 %v2203, 0.0
  %v2268 = vmax.f32 %v2204, 0.0
  %v2269 = vmax.f32 %v2205, 0.0
  %v2270 = vmax.f32 %v2206, 0.0
  %v2271 = vmax.f32 %v2207, 0.0
  %v2272 = vmax.f32 %v2208, 0.0
  %v2273 = vmax.f32 %v2209, 0.0
  %v2274 = vmax.f32 %v2210, 0.0
  %v2275 = vmax.f32 %v2211, 0.0
  %v2276 = vmax.f32 %v2212, 0.0
  %v2277 = vmax.f32 %v2213, 0.0
  %v2278 = vmax.f32 %v2214, 0.0
  %v2279 = vmax.f32 %v2215, 0.0
  %v2280 = vmax.f32 %v2216, 0.0
  %v2281 = vmax.f32 %v2217, 0.0
  %v2282 = vmax.f32 %v2218, 0.0
  %v2283 = vmax.f32 %v2219, 0.0
  %v2284 = vmax.f32 %v2220, 0.0
  %v2285 = vpack.c.bf16 %v2221, %v2221
  %v2286 = vpack.c.bf16 %v2222, %v2222
  %v2287 = vpack.c.bf16 %v2223, %v2223
  %v2288 = vpack.c.bf16 %v2224, %v2224
  %v2289 = vpack.c.bf16 %v2225, %v2225
  %v2290 = vpack.c.bf16 %v2226, %v2226
  %v2291 = vpack.c.bf16 %v2227, %v2227
  %v2292 = vpack.c.bf16 %v2228, %v2228
  %v2293 = vpack.c.bf16 %v2229, %v2229
  %v2294 = vpack.c.bf16 %v2230, %v2230
  %v2295 = vpack.c.bf16 %v2231, %v2231
  %v2296 = vpack.c.bf16 %v2232, %v2232
  %v2297 = vpack.c.bf16 %v2233, %v2233
  %v2298 = vpack.c.bf16 %v2234, %v2234
  %v2299 = vpack.c.bf16 %v2235, %v2235
  %v2300 = vpack.c.bf16 %v2236, %v2236
  %v2301 = vpack.c.bf16 %v2237, %v2237
  %v2302 = vpack.c.bf16 %v2238, %v2238
  %v2303 = vpack.c.bf16 %v2239, %v2239
  %v2304 = vpack.c.bf16 %v2240, %v2240
  %v2305 = vpack.c.bf16 %v2241, %v2241
  %v2306 = vpack.c.bf16 %v2242, %v2242
  %v2307 = vpack.c.bf16 %v2243, %v2243
  %v2308 = vpack.c.bf16 %v2244, %v2244
  %v2309 = vpack.c.bf16 %v2245, %v2245
  %v2310 = vpack.c.bf16 %v2246, %v2246
  %v2311 = vpack.c.bf16 %v2247, %v2247
  %v2312 = vpack.c.bf16 %v2248, %v2248
  %v2313 = vpack.c.bf16 %v2249, %v2249
  %v2314 = vpack.c.bf16 %v2250, %v2250
  %v2315 = vpack.c.bf16 %v2251, %v2251
  %v2316 = vpack.c.bf16 %v2252, %v2252
  %v2317 = vpack.c.bf16 %v2253, %v2253
  %v2318 = vpack.c.bf16 %v2254, %v2254
  %v2319 = vpack.c.bf16 %v2255, %v2255
  %v2320 = vpack.c.bf16 %v2256, %v2256
  %v2321 = vpack.c.bf16 %v2257, %v2257
  %v2322 = vpack.c.bf16 %v2258, %v2258
  %v2323 = vpack.c.bf16 %v2259, %v2259
  %v2324 = vpack.c.bf16 %v2260, %v2260
  %v2325 = vpack.c.bf16 %v2261, %v2261
  %v2326 = vpack.c.bf16 %v2262, %v2262
  %v2327 = vpack.c.bf16 %v2263, %v2263
  %v2328 = vpack.c.bf16 %v2264, %v2264
  %v2329 = vpack.c.bf16 %v2265, %v2265
  %v2330 = vpack.c.bf16 %v2266, %v2266
  %v2331 = vpack.c.bf16 %v2267, %v2267
  %v2332 = vpack.c.bf16 %v2268, %v2268
  %v2333 = vpack.c.bf16 %v2269, %v2269
  %v2334 = vpack.c.bf16 %v2270, %v2270
  %v2335 = vpack.c.bf16 %v2271, %v2271
  %v2336 = vpack.c.bf16 %v2272, %v2272
  %v2337 = vpack.c.bf16 %v2273, %v2273
  %v2338 = vpack.c.bf16 %v2274, %v2274
  %v2339 = vpack.c.bf16 %v2275, %v2275
  %v2340 = vpack.c.bf16 %v2276, %v2276
  %v2341 = vpack.c.bf16 %v2277, %v2277
  %v2342 = vpack.c.bf16 %v2278, %v2278
  %v2343 = vpack.c.bf16 %v2279, %v2279
  %v2344 = vpack.c.bf16 %v2280, %v2280
  %v2345 = vpack.c.bf16 %v2281, %v2281
  %v2346 = vpack.c.bf16 %v2282, %v2282
  %v2347 = vpack.c.bf16 %v2283, %v2283
  %v2348 = vpack.c.bf16 %v2284, %v2284
  %vm2349 = vcmask 125952
  %2350 = vst.msk [vmem:[%s3] sm:$0xf] %vm2349, %v2285
  %2351 = vst.msk [vmem:[%s3 + $0x4] sm:$0xf] %vm2349, %v2286
  %2352 = vst.msk [vmem:[%s3 + $0x8] sm:$0xf] %vm2349, %v2287
  %2353 = vst.msk [vmem:[%s3 + $0xc] sm:$0xf] %vm2349, %v2288
  %2354 = vst.msk [vmem:[%s3 + $0x10] sm:$0xf] %vm2349, %v2289
  %2355 = vst.msk [vmem:[%s3 + $0x14] sm:$0xf] %vm2349, %v2290
  %2356 = vst.msk [vmem:[%s3 + $0x18] sm:$0xf] %vm2349, %v2291
  %2357 = vst.msk [vmem:[%s3 + $0x1c] sm:$0xf] %vm2349, %v2292
  %2358 = vst.msk [vmem:[%s3 + $0x20] sm:$0xf] %vm2349, %v2293
  %2359 = vst.msk [vmem:[%s3 + $0x24] sm:$0xf] %vm2349, %v2294
  %2360 = vst.msk [vmem:[%s3 + $0x28] sm:$0xf] %vm2349, %v2295
  %2361 = vst.msk [vmem:[%s3 + $0x2c] sm:$0xf] %vm2349, %v2296
  %2362 = vst.msk [vmem:[%s3 + $0x30] sm:$0xf] %vm2349, %v2297
  %2363 = vst.msk [vmem:[%s3 + $0x34] sm:$0xf] %vm2349, %v2298
  %2364 = vst.msk [vmem:[%s3 + $0x38] sm:$0xf] %vm2349, %v2299
  %2365 = vst.msk [vmem:[%s3 + $0x3c] sm:$0xf] %vm2349, %v2300
  %2366 = vst.msk [vmem:[%s3 + $0x40] sm:$0xf] %vm2349, %v2301
  %2367 = vst.msk [vmem:[%s3 + $0x44] sm:$0xf] %vm2349, %v2302
  %2368 = vst.msk [vmem:[%s3 + $0x48] sm:$0xf] %vm2349, %v2303
  %2369 = vst.msk [vmem:[%s3 + $0x4c] sm:$0xf] %vm2349, %v2304
  %2370 = vst.msk [vmem:[%s3 + $0x50] sm:$0xf] %vm2349, %v2305
  %2371 = vst.msk [vmem:[%s3 + $0x54] sm:$0xf] %vm2349, %v2306
  %2372 = vst.msk [vmem:[%s3 + $0x58] sm:$0xf] %vm2349, %v2307
  %2373 = vst.msk [vmem:[%s3 + $0x5c] sm:$0xf] %vm2349, %v2308
  %2374 = vst.msk [vmem:[%s3 + $0x60] sm:$0xf] %vm2349, %v2309
  %2375 = vst.msk [vmem:[%s3 + $0x64] sm:$0xf] %vm2349, %v2310
  %2376 = vst.msk [vmem:[%s3 + $0x68] sm:$0xf] %vm2349, %v2311
  %2377 = vst.msk [vmem:[%s3 + $0x6c] sm:$0xf] %vm2349, %v2312
  %2378 = vst.msk [vmem:[%s3 + $0x70] sm:$0xf] %vm2349, %v2313
  %2379 = vst.msk [vmem:[%s3 + $0x74] sm:$0xf] %vm2349, %v2314
  %2380 = vst.msk [vmem:[%s3 + $0x78] sm:$0xf] %vm2349, %v2315
  %2381 = vst.msk [vmem:[%s3 + $0x7c] sm:$0xf] %vm2349, %v2316
  %2382 = vst.msk [vmem:[%s3 + $0x80] sm:$0xf] %vm2349, %v2317
  %2383 = vst.msk [vmem:[%s3 + $0x84] sm:$0xf] %vm2349, %v2318
  %2384 = vst.msk [vmem:[%s3 + $0x88] sm:$0xf] %vm2349, %v2319
  %2385 = vst.msk [vmem:[%s3 + $0x8c] sm:$0xf] %vm2349, %v2320
  %2386 = vst.msk [vmem:[%s3 + $0x90] sm:$0xf] %vm2349, %v2321
  %2387 = vst.msk [vmem:[%s3 + $0x94] sm:$0xf] %vm2349, %v2322
  %2388 = vst.msk [vmem:[%s3 + $0x98] sm:$0xf] %vm2349, %v2323
  %2389 = vst.msk [vmem:[%s3 + $0x9c] sm:$0xf] %vm2349, %v2324
  %2390 = vst.msk [vmem:[%s3 + $0xa0] sm:$0xf] %vm2349, %v2325
  %2391 = vst.msk [vmem:[%s3 + $0xa4] sm:$0xf] %vm2349, %v2326
  %2392 = vst.msk [vmem:[%s3 + $0xa8] sm:$0xf] %vm2349, %v2327
  %2393 = vst.msk [vmem:[%s3 + $0xac] sm:$0xf] %vm2349, %v2328
  %2394 = vst.msk [vmem:[%s3 + $0xb0] sm:$0xf] %vm2349, %v2329
  %2395 = vst.msk [vmem:[%s3 + $0xb4] sm:$0xf] %vm2349, %v2330
  %2396 = vst.msk [vmem:[%s3 + $0xb8] sm:$0xf] %vm2349, %v2331
  %2397 = vst.msk [vmem:[%s3 + $0xbc] sm:$0xf] %vm2349, %v2332
  %2398 = vst.msk [vmem:[%s3 + $0xc0] sm:$0xf] %vm2349, %v2333
  %2399 = vst.msk [vmem:[%s3 + $0xc4] sm:$0xf] %vm2349, %v2334
  %2400 = vst.msk [vmem:[%s3 + $0xc8] sm:$0xf] %vm2349, %v2335
  %2401 = vst.msk [vmem:[%s3 + $0xcc] sm:$0xf] %vm2349, %v2336
  %2402 = vst.msk [vmem:[%s3 + $0xd0] sm:$0xf] %vm2349, %v2337
  %2403 = vst.msk [vmem:[%s3 + $0xd4] sm:$0xf] %vm2349, %v2338
  %2404 = vst.msk [vmem:[%s3 + $0xd8] sm:$0xf] %vm2349, %v2339
  %2405 = vst.msk [vmem:[%s3 + $0xdc] sm:$0xf] %vm2349, %v2340
  %2406 = vst.msk [vmem:[%s3 + $0xe0] sm:$0xf] %vm2349, %v2341
  %2407 = vst.msk [vmem:[%s3 + $0xe4] sm:$0xf] %vm2349, %v2342
  %2408 = vst.msk [vmem:[%s3 + $0xe8] sm:$0xf] %vm2349, %v2343
  %2409 = vst.msk [vmem:[%s3 + $0xec] sm:$0xf] %vm2349, %v2344
  %2410 = vst.msk [vmem:[%s3 + $0xf0] sm:$0xf] %vm2349, %v2345
  %2411 = vst.msk [vmem:[%s3 + $0xf4] sm:$0xf] %vm2349, %v2346
  %2412 = vst.msk [vmem:[%s3 + $0xf8] sm:$0xf] %vm2349, %v2347
  %2413 = vst.msk [vmem:[%s3 + $0xfc] sm:$0xf] %vm2349, %v2348
  // Predicated region
  $region14: #{net_forward.4} parent=0 // pred_check
    _
  $region15: #{net_forward.4} parent=0 // pred_check_branch
    %2415 = sbr.rel (0) target = $region17
  $region16: #{net_forward.4} parent=0 // pred_region
    _
  $region17: #{net_forward.4} parent=0 // pred_fallthru
    _
  // Predicated region
  $region18: #{net_forward.4} parent=0 // pred_check
    _
  $region19: #{net_forward.4} parent=0 // pred_check_branch
    %2417 = sbr.rel (0) target = $region21
  $region20: #{net_forward.4} parent=0 // pred_region
    _
  $region21: #{net_forward.4} parent=0 // pred_fallthru
    _

// kernel: net_forward.6
$region0: #{net_forward.6}
  #allocation0 [shape = 'u32[]', space=smem, size = 0x4, offset = 0x4, fixed_abs, tag = 'smem constant byte address 0x4 - core index']
  #allocation1 [shape = 'u32[72,128]{1,0:T(1,128)}', space=vmem, size = 0x9000, scoped, tag = 'internal scratch']
  %s0 = inlined_call_operand.vmem [shape: bf16[128,288], index: 0, kind: input, shape index: {}]
  %s1 = inlined_call_operand.vmem [shape: bf16[288,64], index: 1, kind: input, shape index: {}]
  %s2 = inlined_call_operand.vmem [shape: f32[1,64], index: 2, kind: input, shape index: {}]
  %s3 = inlined_call_operand.vmem [shape: bf16[32,64], index: 3, kind: output, shape index: {}]
  %s4 = sld [smem:[#allocation0]]
  $region22: #{net_forward.6} parent=0
    _
  %s6 = ssub.s32 1, %s4
  %s7 = scalar_select 0, %s6, %s4
  // Predicated region
  $region2: #{net_forward.6} parent=0 // pred_check
    _
  $region3: #{net_forward.6} parent=0 // pred_check_branch
    %9 = sbr.rel (0) target = $region5
  $region4: #{net_forward.6} parent=0 // pred_region
    _
  $region5: #{net_forward.6} parent=0 // pred_fallthru
    _
  // Predicated region
  $region6: #{net_forward.6} parent=0 // pred_check
    _
  $region7: #{net_forward.6} parent=0 // pred_check_branch
    %11 = sbr.rel (0) target = $region9
  $region8: #{net_forward.6} parent=0 // pred_region
    _
  $region9: #{net_forward.6} parent=0 // pred_fallthru
    _
  // Predicated region
  $region10: #{net_forward.6} parent=0 // pred_check
    _
  $region11: #{net_forward.6} parent=0 // pred_check_branch
    %13 = sbr.rel (0) target = $region13
  $region12: #{net_forward.6} parent=0 // pred_region
    _
  $region13: #{net_forward.6} parent=0 // pred_fallthru
    _
  %v15 = vld [vmem:[%s0] sm:$0xff]
  %v16 = vld [vmem:[%s0 + $0x8] sm:$0xf]
  %v17 = vld [vmem:[%s0 + $0xc] sm:$0xff]
  %v18 = vld [vmem:[%s0 + $0x14] sm:$0xf]
  %v19 = vld [vmem:[%s0 + $0x18] sm:$0xff]
  %v20 = vld [vmem:[%s0 + $0x20] sm:$0xf]
  %v21 = vld [vmem:[%s0 + $0x24] sm:$0xff]
  %v22 = vld [vmem:[%s0 + $0x2c] sm:$0xf]
  %v23 = vld [vmem:[%s0 + $0x30] sm:$0xff]
  %v24 = vld [vmem:[%s0 + $0x38] sm:$0xf]
  %v25 = vld [vmem:[%s0 + $0x3c] sm:$0xff]
  %v26 = vld [vmem:[%s0 + $0x44] sm:$0xf]
  %v27 = vld [vmem:[%s0 + $0x48] sm:$0xff]
  %v28 = vld [vmem:[%s0 + $0x50] sm:$0xf]
  %v29 = vld [vmem:[%s0 + $0x54] sm:$0xff]
  %v30 = vld [vmem:[%s0 + $0x5c] sm:$0xf]
  %v31 = vld [vmem:[%s0 + $0x60] sm:$0xff]
  %v32 = vld [vmem:[%s0 + $0x68] sm:$0xf]
  %v33 = vld [vmem:[%s0 + $0x6c] sm:$0xff]
  %v34 = vld [vmem:[%s0 + $0x74] sm:$0xf]
  %v35 = vld [vmem:[%s0 + $0x78] sm:$0xff]
  %v36 = vld [vmem:[%s0 + $0x80] sm:$0xf]
  %v37 = vld [vmem:[%s0 + $0x84] sm:$0xff]
  %v38 = vld [vmem:[%s0 + $0x8c] sm:$0xf]
  %v39 = vld [vmem:[%s0 + $0x90] sm:$0xff]
  %v40 = vld [vmem:[%s0 + $0x98] sm:$0xf]
  %v41 = vld [vmem:[%s0 + $0x9c] sm:$0xff]
  %v42 = vld [vmem:[%s0 + $0xa4] sm:$0xf]
  %v43 = vld [vmem:[%s0 + $0xa8] sm:$0xff]
  %v44 = vld [vmem:[%s0 + $0xb0] sm:$0xf]
  %v45 = vld [vmem:[%s0 + $0xb4] sm:$0xff]
  %v46 = vld [vmem:[%s0 + $0xbc] sm:$0xf]
  %v47 = vld [vmem:[%s1] sm:$0xf]
  %v48 = vld [vmem:[%s1 + $0x4] sm:$0xf]
  %v49 = vld [vmem:[%s1 + $0x8] sm:$0xf]
  %v50 = vld [vmem:[%s1 + $0xc] sm:$0xf]
  %v51 = vld [vmem:[%s1 + $0x10] sm:$0xf]
  %v52 = vld [vmem:[%s1 + $0x14] sm:$0xf]
  %v53 = vld [vmem:[%s1 + $0x18] sm:$0xf]
  %v54 = vld [vmem:[%s1 + $0x1c] sm:$0xf]
  %v55 = vld [vmem:[%s1 + $0x20] sm:$0xf]
  %v56 = vld [vmem:[%s1 + $0x24] sm:$0xf]
  %v57 = vld [vmem:[%s1 + $0x28] sm:$0xf]
  %v58 = vld [vmem:[%s1 + $0x2c] sm:$0xf]
  %v59 = vld [vmem:[%s1 + $0x30] sm:$0xf]
  %v60 = vld [vmem:[%s1 + $0x34] sm:$0xf]
  %v61 = vld [vmem:[%s1 + $0x38] sm:$0xf]
  %v62 = vld [vmem:[%s1 + $0x3c] sm:$0xf]
  %v63 = vld [vmem:[%s1 + $0x40] sm:$0xf]
  %v64 = vld [vmem:[%s1 + $0x44] sm:$0xf]
  %v65 = vld [vmem:[%s1 + $0x48] sm:$0xf]
  %v66 = vld [vmem:[%s1 + $0x4c] sm:$0xf]
  %v67 = vld [vmem:[%s1 + $0x50] sm:$0xf]
  %v68 = vld [vmem:[%s1 + $0x54] sm:$0xf]
  %v69 = vld [vmem:[%s1 + $0x58] sm:$0xf]
  %v70 = vld [vmem:[%s1 + $0x5c] sm:$0xf]
  %v71 = vld [vmem:[%s1 + $0x60] sm:$0xf]
  %v72 = vld [vmem:[%s1 + $0x64] sm:$0xf]
  %v73 = vld [vmem:[%s1 + $0x68] sm:$0xf]
  %v74 = vld [vmem:[%s1 + $0x6c] sm:$0xf]
  %v75 = vld [vmem:[%s1 + $0x70] sm:$0xf]
  %v76 = vld [vmem:[%s1 + $0x74] sm:$0xf]
  %v77 = vld [vmem:[%s1 + $0x78] sm:$0xf]
  %v78 = vld [vmem:[%s1 + $0x7c] sm:$0xf]
  %v79 = vld [vmem:[%s1 + $0x80] sm:$0xf]
  %v80 = vld [vmem:[%s1 + $0x84] sm:$0xf]
  %v81 = vld [vmem:[%s1 + $0x88] sm:$0xf]
  %v82 = vld [vmem:[%s1 + $0x8c] sm:$0xf]
  %v115 = vunpack.c.l.b16 %v15
  %v116 = vunpack.c.h.b16 %v15
  %v117 = vunpack.c.l.b16 %v16
  %v118 = vunpack.c.l.b16 %v17
  %v119 = vunpack.c.h.b16 %v17
  %v120 = vunpack.c.l.b16 %v18
  %v121 = vunpack.c.l.b16 %v19
  %v122 = vunpack.c.h.b16 %v19
  %v123 = vunpack.c.l.b16 %v20
  %v124 = vunpack.c.l.b16 %v21
  %v125 = vunpack.c.h.b16 %v21
  %v126 = vunpack.c.l.b16 %v22
  %v127 = vunpack.c.l.b16 %v23
  %v128 = vunpack.c.h.b16 %v23
  %v129 = vunpack.c.l.b16 %v24
  %v130 = vunpack.c.l.b16 %v25
  %v131 = vunpack.c.h.b16 %v25
  %v132 = vunpack.c.l.b16 %v26
  %v133 = vunpack.c.l.b16 %v27
  %v134 = vunpack.c.h.b16 %v27
  %v135 = vunpack.c.l.b16 %v28
  %v136 = vunpack.c.l.b16 %v29
  %v137 = vunpack.c.h.b16 %v29
  %v138 = vunpack.c.l.b16 %v30
  %v139 = vunpack.c.l.b16 %v31
  %v140 = vunpack.c.h.b16 %v31
  %v141 = vunpack.c.l.b16 %v32
  %v142 = vunpack.c.l.b16 %v33
  %v143 = vunpack.c.h.b16 %v33
  %v144 = vunpack.c.l.b16 %v34
  %v145 = vunpack.c.l.b16 %v35
  %v146 = vunpack.c.h.b16 %v35
  %v147 = vunpack.c.l.b16 %v36
  %v148 = vunpack.c.l.b16 %v37
  %v149 = vunpack.c.h.b16 %v37
  %v150 = vunpack.c.l.b16 %v38
  %v151 = vunpack.c.l.b16 %v39
  %v152 = vunpack.c.h.b16 %v39
  %v153 = vunpack.c.l.b16 %v40
  %v154 = vunpack.c.l.b16 %v41
  %v155 = vunpack.c.h.b16 %v41
  %v156 = vunpack.c.l.b16 %v42
  %v157 = vunpack.c.l.b16 %v43
  %v158 = vunpack.c.h.b16 %v43
  %v159 = vunpack.c.l.b16 %v44
  %v160 = vunpack.c.l.b16 %v45
  %v161 = vunpack.c.h.b16 %v45
  %v162 = vunpack.c.l.b16 %v46
  %v163 = vpack.c.b16 %v118, %v115
  %v164 = vpack.c.b16 %v119, %v116
  %v165 = vpack.c.b16 %v120, %v117
  %v166 = vpack.c.b16 %v124, %v121
  %v167 = vpack.c.b16 %v125, %v122
  %v168 = vpack.c.b16 %v126, %v123
  %v169 = vpack.c.b16 %v130, %v127
  %v170 = vpack.c.b16 %v131, %v128
  %v171 = vpack.c.b16 %v132, %v129
  %v172 = vpack.c.b16 %v136, %v133
  %v173 = vpack.c.b16 %v137, %v134
  %v174 = vpack.c.b16 %v138, %v135
  %v175 = vpack.c.b16 %v142, %v139
  %v176 = vpack.c.b16 %v143, %v140
  %v177 = vpack.c.b16 %v144, %v141
  %v178 = vpack.c.b16 %v148, %v145
  %v179 = vpack.c.b16 %v149, %v146
  %v180 = vpack.c.b16 %v150, %v147
  %v181 = vpack.c.b16 %v154, %v151
  %v182 = vpack.c.b16 %v155, %v152
  %v183 = vpack.c.b16 %v156, %v153
  %v184 = vpack.c.b16 %v160, %v157
  %v185 = vpack.c.b16 %v161, %v158
  %v186 = vpack.c.b16 %v162, %v159
  %v239 = vunpack.c.l.b16 %v47
  %v240 = vunpack.c.l.b16 %v48
  %v241 = vunpack.c.l.b16 %v49
  %v242 = vunpack.c.l.b16 %v50
  %v243 = vunpack.c.l.b16 %v51
  %v244 = vunpack.c.l.b16 %v52
  %v245 = vunpack.c.l.b16 %v53
  %v246 = vunpack.c.l.b16 %v54
  %v247 = vunpack.c.l.b16 %v55
  %v248 = vunpack.c.l.b16 %v56
  %v249 = vunpack.c.l.b16 %v57
  %v250 = vunpack.c.l.b16 %v58
  %v251 = vunpack.c.l.b16 %v59
  %v252 = vunpack.c.l.b16 %v60
  %v253 = vunpack.c.l.b16 %v61
  %v254 = vunpack.c.l.b16 %v62
  %v255 = vunpack.c.l.b16 %v63
  %v256 = vunpack.c.l.b16 %v64
  %v257 = vunpack.c.l.b16 %v65
  %v258 = vunpack.c.l.b16 %v66
  %v259 = vunpack.c.l.b16 %v67
  %v260 = vunpack.c.l.b16 %v68
  %v261 = vunpack.c.l.b16 %v69
  %v262 = vunpack.c.l.b16 %v70
  %v263 = vunpack.c.l.b16 %v71
  %v264 = vunpack.c.l.b16 %v72
  %v265 = vunpack.c.l.b16 %v73
  %v266 = vunpack.c.l.b16 %v74
  %v267 = vunpack.c.l.b16 %v75
  %v268 = vunpack.c.l.b16 %v76
  %v269 = vunpack.c.l.b16 %v77
  %v270 = vunpack.c.l.b16 %v78
  %v271 = vunpack.c.l.b16 %v79
  %v272 = vunpack.c.l.b16 %v80
  %v273 = vunpack.c.l.b16 %v81
  %v274 = vunpack.c.l.b16 %v82
  %v275 = vpack.c.b16 %v240, %v239
  %v276 = vpack.c.b16 %v242, %v241
  %v277 = vpack.c.b16 %v244, %v243
  %v278 = vpack.c.b16 %v246, %v245
  %v279 = vpack.c.b16 %v248, %v247
  %v280 = vpack.c.b16 %v250, %v249
  %v281 = vpack.c.b16 %v252, %v251
  %v282 = vpack.c.b16 %v254, %v253
  %v283 = vpack.c.b16 %v256, %v255
  %v284 = vpack.c.b16 %v258, %v257
  %v285 = vpack.c.b16 %v260, %v259
  %v286 = vpack.c.b16 %v262, %v261
  %v287 = vpack.c.b16 %v264, %v263
  %v288 = vpack.c.b16 %v266, %v265
  %v289 = vpack.c.b16 %v268, %v267
  %v290 = vpack.c.b16 %v270, %v269
  %v291 = vpack.c.b16 %v272, %v271
  %v292 = vpack.c.b16 %v274, %v273
  %vm311 = vcmask 261120
  %v313 = vsel %vm311, %v165, 0
  %v316 = vsel %vm311, %v168, 0
  %v319 = vsel %vm311, %v171, 0
  %v322 = vsel %vm311, %v174, 0
  %v325 = vsel %vm311, %v177, 0
  %v328 = vsel %vm311, %v180, 0
  %v331 = vsel %vm311, %v183, 0
  %v334 = vsel %vm311, %v186, 0
  %336 = vmatpush.bf16.msra.mxu0 %v282
  %337 = vmatpush.bf16.msra.mxu0 %v281
  %338 = vmatpush.bf16.msra.mxu0 %v280
  %339 = vmatpush.bf16.msra.mxu0 %v279
  %340 = vmatpush.bf16.msra.mxu0 %v278
  %341 = vmatpush.bf16.msra.mxu0 %v277
  %342 = vmatpush.bf16.msra.mxu0 %v276
  %343 = vmatpush.bf16.msra.mxu0 %v275
  %344 = vmatmul.bf16.gmra.mxu0 %v163
  %v345 = vpop.f32.mrf.mxu0
  %v346 = vadd.f32 0.0, %v345
  %v347 = vpop.f32.mrf.mxu0
  %v348 = vadd.f32 0.0, %v347
  %349 = vmatmul.bf16.gmra.mxu0 %v166
  %v350 = vpop.f32.mrf.mxu0
  %v351 = vadd.f32 0.0, %v350
  %v352 = vpop.f32.mrf.mxu0
  %v353 = vadd.f32 0.0, %v352
  %354 = vmatmul.bf16.gmra.mxu0 %v169
  %v355 = vpop.f32.mrf.mxu0
  %v356 = vadd.f32 0.0, %v355
  %v357 = vpop.f32.mrf.mxu0
  %v358 = vadd.f32 0.0, %v357
  %359 = vmatmul.bf16.gmra.mxu0 %v172
  %v360 = vpop.f32.mrf.mxu0
  %v361 = vadd.f32 0.0, %v360
  %v362 = vpop.f32.mrf.mxu0
  %v363 = vadd.f32 0.0, %v362
  %364 = vmatmul.bf16.gmra.mxu0 %v175
  %v365 = vpop.f32.mrf.mxu0
  %v366 = vadd.f32 0.0, %v365
  %v367 = vpop.f32.mrf.mxu0
  %v368 = vadd.f32 0.0, %v367
  %369 = vmatmul.bf16.gmra.mxu0 %v178
  %v370 = vpop.f32.mrf.mxu0
  %v371 = vadd.f32 0.0, %v370
  %v372 = vpop.f32.mrf.mxu0
  %v373 = vadd.f32 0.0, %v372
  %374 = vmatmul.bf16.gmra.mxu0 %v181
  %v375 = vpop.f32.mrf.mxu0
  %v376 = vadd.f32 0.0, %v375
  %v377 = vpop.f32.mrf.mxu0
  %v378 = vadd.f32 0.0, %v377
  %379 = vmatmul.bf16.gmra.mxu0 %v184
  %v380 = vpop.f32.mrf.mxu0
  %v381 = vadd.f32 0.0, %v380
  %v382 = vpop.f32.mrf.mxu0
  %v383 = vadd.f32 0.0, %v382
  %384 = vdwg.mxu0
  %385 = vmatpush.bf16.msra.mxu0 %v290
  %386 = vmatpush.bf16.msra.mxu0 %v289
  %387 = vmatpush.bf16.msra.mxu0 %v288
  %388 = vmatpush.bf16.msra.mxu0 %v287
  %389 = vmatpush.bf16.msra.mxu0 %v286
  %390 = vmatpush.bf16.msra.mxu0 %v285
  %391 = vmatpush.bf16.msra.mxu0 %v284
  %392 = vmatpush.bf16.msra.mxu0 %v283
  %393 = vmatmul.bf16.gmra.mxu0 %v164
  %v394 = vpop.f32.mrf.mxu0
  %v395 = vadd.f32 %v346, %v394
  %v396 = vpop.f32.mrf.mxu0
  %v397 = vadd.f32 %v348, %v396
  %398 = vmatmul.bf16.gmra.mxu0 %v167
  %v399 = vpop.f32.mrf.mxu0
  %v400 = vadd.f32 %v351, %v399
  %v401 = vpop.f32.mrf.mxu0
  %v402 = vadd.f32 %v353, %v401
  %403 = vmatmul.bf16.gmra.mxu0 %v170
  %v404 = vpop.f32.mrf.mxu0
  %v405 = vadd.f32 %v356, %v404
  %v406 = vpop.f32.mrf.mxu0
  %v407 = vadd.f32 %v358, %v406
  %408 = vmatmul.bf16.gmra.mxu0 %v173
  %v409 = vpop.f32.mrf.mxu0
  %v410 = vadd.f32 %v361, %v409
  %v411 = vpop.f32.mrf.mxu0
  %v412 = vadd.f32 %v363, %v411
  %413 = vmatmul.bf16.gmra.mxu0 %v176
  %v414 = vpop.f32.mrf.mxu0
  %v415 = vadd.f32 %v366, %v414
  %v416 = vpop.f32.mrf.mxu0
  %v417 = vadd.f32 %v368, %v416
  %418 = vmatmul.bf16.gmra.mxu0 %v179
  %v419 = vpop.f32.mrf.mxu0
  %v420 = vadd.f32 %v371, %v419
  %v421 = vpop.f32.mrf.mxu0
  %v422 = vadd.f32 %v373, %v421
  %423 = vmatmul.bf16.gmra.mxu0 %v182
  %v424 = vpop.f32.mrf.mxu0
  %v425 = vadd.f32 %v376, %v424
  %v426 = vpop.f32.mrf.mxu0
  %v427 = vadd.f32 %v378, %v426
  %428 = vmatmul.bf16.gmra.mxu0 %v185
  %v429 = vpop.f32.mrf.mxu0
  %v430 = vadd.f32 %v381, %v429
  %v431 = vpop.f32.mrf.mxu0
  %v432 = vadd.f32 %v383, %v431
  %433 = vdwg.mxu0
  %434 = vmatpush.bf16.msra.mxu0 0
  %435 = vmatpush.bf16.msra.mxu0 0
  %436 = vmatpush.bf16.msra.mxu0 0
  %437 = vmatpush.bf16.msra.mxu0 0
  %438 = vmatpush.bf16.msra.mxu0 0
  %439 = vmatpush.bf16.msra.mxu0 0
  %440 = vmatpush.bf16.msra.mxu0 %v292
  %441 = vmatpush.bf16.msra.mxu0 %v291
  %442 = vmatmul.bf16.gmra.mxu0 %v313
  %v443 = vpop.f32.mrf.mxu0
  %v444 = vadd.f32 %v395, %v443
  %v445 = vpop.f32.mrf.mxu0
  %v446 = vadd.f32 %v397, %v445
  %447 = vmatmul.bf16.gmra.mxu0 %v316
  %v448 = vpop.f32.mrf.mxu0
  %v449 = vadd.f32 %v400, %v448
  %v450 = vpop.f32.mrf.mxu0
  %v451 = vadd.f32 %v402, %v450
  %452 = vmatmul.bf16.gmra.mxu0 %v319
  %v453 = vpop.f32.mrf.mxu0
  %v454 = vadd.f32 %v405, %v453
  %v455 = vpop.f32.mrf.mxu0
  %v456 = vadd.f32 %v407, %v455
  %457 = vmatmul.bf16.gmra.mxu0 %v322
  %v458 = vpop.f32.mrf.mxu0
  %v459 = vadd.f32 %v410, %v458
  %v460 = vpop.f32.mrf.mxu0
  %v461 = vadd.f32 %v412, %v460
  %462 = vmatmul.bf16.gmra.mxu0 %v325
  %v463 = vpop.f32.mrf.mxu0
  %v464 = vadd.f32 %v415, %v463
  %v465 = vpop.f32.mrf.mxu0
  %v466 = vadd.f32 %v417, %v465
  %467 = vmatmul.bf16.gmra.mxu0 %v328
  %v468 = vpop.f32.mrf.mxu0
  %v469 = vadd.f32 %v420, %v468
  %v470 = vpop.f32.mrf.mxu0
  %v471 = vadd.f32 %v422, %v470
  %472 = vmatmul.bf16.gmra.mxu0 %v331
  %v473 = vpop.f32.mrf.mxu0
  %v474 = vadd.f32 %v425, %v473
  %v475 = vpop.f32.mrf.mxu0
  %v476 = vadd.f32 %v427, %v475
  %477 = vmatmul.bf16.gmra.mxu0 %v334
  %v478 = vpop.f32.mrf.mxu0
  %v479 = vadd.f32 %v430, %v478
  %v480 = vpop.f32.mrf.mxu0
  %v481 = vadd.f32 %v432, %v480
  %482 = vdwg.mxu0
  %v483 = vmax.f32 %v444, %v454
  %v484 = vmax.f32 %v446, %v456
  %v485 = vmax.f32 %v449, %v459
  %v486 = vmax.f32 %v451, %v461
  %v487 = vmax.f32 %v464, %v474
  %v488 = vmax.f32 %v466, %v476
  %v489 = vmax.f32 %v469, %v479
  %v490 = vmax.f32 %v471, %v481
  %v491 = vmax.f32 %v483, %v487
  %v492 = vmax.f32 %v484, %v488
  %v493 = vmax.f32 %v485, %v489
  %v494 = vmax.f32 %v486, %v490
  %v495 = vld [vmem:[%s2] sm:$0x1]
  %v497 = vperm.slane %v495, 0
  %v499 = vadd.f32 %v491, %v497
  %v500 = vadd.f32 %v492, %v497
  %v501 = vadd.f32 %v493, %v497
  %v502 = vadd.f32 %v494, %v497
  %v503 = vmax.f32 %v499, 0.0
  %v504 = vmax.f32 %v500, 0.0
  %v505 = vmax.f32 %v501, 0.0
  %v506 = vmax.f32 %v502, 0.0
  %v507 = vpack.c.bf16 %v503, %v503
  %v508 = vpack.c.bf16 %v504, %v504
  %v509 = vpack.c.bf16 %v505, %v505
  %v510 = vpack.c.bf16 %v506, %v506
  %vm511 = vcmask 519168
  %512 = vst.msk [vmem:[%s3] sm:$0xf] %vm511, %v507
  %513 = vst.msk [vmem:[%s3 + $0x4] sm:$0xf] %vm511, %v508
  %514 = vst.msk [vmem:[%s3 + $0x8] sm:$0xf] %vm511, %v509
  %515 = vst.msk [vmem:[%s3 + $0xc] sm:$0xf] %vm511, %v510
  // Predicated region
  $region14: #{net_forward.6} parent=0 // pred_check
    _
  $region15: #{net_forward.6} parent=0 // pred_check_branch
    %517 = sbr.rel (0) target = $region17
  $region16: #{net_forward.6} parent=0 // pred_region
    _
  $region17: #{net_forward.6} parent=0 // pred_fallthru
    _
  // Predicated region
  $region18: #{net_forward.6} parent=0 // pred_check
    _
  $region19: #{net_forward.6} parent=0 // pred_check_branch
    %519 = sbr.rel (0) target = $region21
  $region20: #{net_forward.6} parent=0 // pred_region
    _
  $region21: #{net_forward.6} parent=0 // pred_fallthru
    _

// kernel: net_forward.7
$region0: #{net_forward.7}
  #allocation0 [shape = 'u32[]', space=smem, size = 0x4, offset = 0x4, fixed_abs, tag = 'smem constant byte address 0x4 - core index']
  #allocation1 [shape = 'u32[72,128]{1,0:T(1,128)}', space=vmem, size = 0x9000, scoped, tag = 'internal scratch']
  %s0 = inlined_call_operand.vmem [shape: bf16[2,1024], index: 0, kind: input, shape index: {}]
  %s1 = inlined_call_operand.vmem [shape: bf16[1024,256], index: 1, kind: input, shape index: {}]
  %s2 = inlined_call_operand.vmem [shape: f32[1,256], index: 2, kind: input, shape index: {}]
  %s3 = inlined_call_operand.vmem [shape: bf16[256,64], index: 3, kind: input, shape index: {}]
  %s4 = inlined_call_operand.vmem [shape: f32[1,64], index: 4, kind: input, shape index: {}]
  %s5 = inlined_call_operand.vmem [shape: bf16[64,10], index: 5, kind: input, shape index: {}]
  %s6 = inlined_call_operand.vmem [shape: f32[1,10], index: 6, kind: input, shape index: {}]
  %s7 = inlined_call_operand.hbm [shape: f32[2,10], index: 7, kind: output, shape index: {}]
  %s8 = sld [smem:[#allocation0]]
  $region38: #{net_forward.7} parent=0
    _
  %s10 = ssub.s32 1, %s8
  %s11 = scalar_select 0, %s10, %s8
  $region1: #{net_forward.7} parent=0
    #allocation2 [shape = 'u8[1024]{0}', space=vmem, size = 0x400, scoped, tag = 'output window, operand 0, single buffered']
    #allocation3 [shape = 's32[1]{0}', space=sflag, size = 0x4, scoped, tag = 'scoped memory for net_forward.7']
    %12 = vsyncpa [#allocation3], 0
    // Predicated region
    $region2: #{net_forward.7} parent=1 // pred_check
      _
    $region3: #{net_forward.7} parent=1 // pred_check_branch
      %14 = sbr.rel (0) target = $region5
    $region4: #{net_forward.7} parent=1 // pred_region
      _
    $region5: #{net_forward.7} parent=1 // pred_fallthru
      _
    // Predicated region
    $region6: #{net_forward.7} parent=1 // pred_check
      _
    $region7: #{net_forward.7} parent=1 // pred_check_branch
      %16 = sbr.rel (0) target = $region9
    $region8: #{net_forward.7} parent=1 // pred_region
      _
    $region9: #{net_forward.7} parent=1 // pred_fallthru
      _
    // Predicated region
    $region10: #{net_forward.7} parent=1 // pred_check
      _
    $region11: #{net_forward.7} parent=1 // pred_check_branch
      %18 = sbr.rel (0) target = $region13
    $region12: #{net_forward.7} parent=1 // pred_region
      _
    $region13: #{net_forward.7} parent=1 // pred_fallthru
      _
    // Predicated region
    $region14: #{net_forward.7} parent=1 // pred_check
      _
    $region15: #{net_forward.7} parent=1 // pred_check_branch
      %20 = sbr.rel (0) target = $region17
    $region16: #{net_forward.7} parent=1 // pred_region
      _
    $region17: #{net_forward.7} parent=1 // pred_fallthru
      _
    // Predicated region
    $region18: #{net_forward.7} parent=1 // pred_check
      _
    $region19: #{net_forward.7} parent=1 // pred_check_branch
      %22 = sbr.rel (0) target = $region21
    $region20: #{net_forward.7} parent=1 // pred_region
      _
    $region21: #{net_forward.7} parent=1 // pred_fallthru
      _
    // Predicated region
    $region22: #{net_forward.7} parent=1 // pred_check
      _
    $region23: #{net_forward.7} parent=1 // pred_check_branch
      %24 = sbr.rel (0) target = $region25
    $region24: #{net_forward.7} parent=1 // pred_region
      _
    $region25: #{net_forward.7} parent=1 // pred_fallthru
      _
    // Predicated region
    $region26: #{net_forward.7} parent=1 // pred_check
      _
    $region27: #{net_forward.7} parent=1 // pred_check_branch
      %26 = sbr.rel (0) target = $region29
    $region28: #{net_forward.7} parent=1 // pred_region
      _
    $region29: #{net_forward.7} parent=1 // pred_fallthru
      _
    %v28 = vld [vmem:[%s0] sm:$0xff]
    %v29 = vld [vmem:[%s1] sm:$0xff]
    %v30 = vld [vmem:[%s1 + $0x8] sm:$0xff]
    %v31 = vld [vmem:[%s1 + $0x10] sm:$0xff]
    %v32 = vld [vmem:[%s1 + $0x18] sm:$0xff]
    %v33 = vld [vmem:[%s1 + $0x20] sm:$0xff]
    %v34 = vld [vmem:[%s1 + $0x28] sm:$0xff]
    %v35 = vld [vmem:[%s1 + $0x30] sm:$0xff]
    %v36 = vld [vmem:[%s1 + $0x38] sm:$0xff]
    %v37 = vld [vmem:[%s1 + $0x40] sm:$0xff]
    %v38 = vld [vmem:[%s1 + $0x48] sm:$0xff]
    %v39 = vld [vmem:[%s1 + $0x50] sm:$0xff]
    %v40 = vld [vmem:[%s1 + $0x58] sm:$0xff]
    %v41 = vld [vmem:[%s1 + $0x60] sm:$0xff]
    %v42 = vld [vmem:[%s1 + $0x68] sm:$0xff]
    %v43 = vld [vmem:[%s1 + $0x70] sm:$0xff]
    %v44 = vld [vmem:[%s1 + $0x78] sm:$0xff]
    %v45 = vld [vmem:[%s1 + $0x80] sm:$0xff]
    %v46 = vld [vmem:[%s1 + $0x88] sm:$0xff]
    %v47 = vld [vmem:[%s1 + $0x90] sm:$0xff]
    %v48 = vld [vmem:[%s1 + $0x98] sm:$0xff]
    %v49 = vld [vmem:[%s1 + $0xa0] sm:$0xff]
    %v50 = vld [vmem:[%s1 + $0xa8] sm:$0xff]
    %v51 = vld [vmem:[%s1 + $0xb0] sm:$0xff]
    %v52 = vld [vmem:[%s1 + $0xb8] sm:$0xff]
    %v53 = vld [vmem:[%s1 + $0xc0] sm:$0xff]
    %v54 = vld [vmem:[%s1 + $0xc8] sm:$0xff]
    %v55 = vld [vmem:[%s1 + $0xd0] sm:$0xff]
    %v56 = vld [vmem:[%s1 + $0xd8] sm:$0xff]
    %v57 = vld [vmem:[%s1 + $0xe0] sm:$0xff]
    %v58 = vld [vmem:[%s1 + $0xe8] sm:$0xff]
    %v59 = vld [vmem:[%s1 + $0xf0] sm:$0xff]
    %v60 = vld [vmem:[%s1 + $0xf8] sm:$0xff]
    %v61 = vld [vmem:[%s1 + $0x100] sm:$0xff]
    %v62 = vld [vmem:[%s1 + $0x108] sm:$0xff]
    %v63 = vld [vmem:[%s1 + $0x110] sm:$0xff]
    %v64 = vld [vmem:[%s1 + $0x118] sm:$0xff]
    %v65 = vld [vmem:[%s1 + $0x120] sm:$0xff]
    %v66 = vld [vmem:[%s1 + $0x128] sm:$0xff]
    %v67 = vld [vmem:[%s1 + $0x130] sm:$0xff]
    %v68 = vld [vmem:[%s1 + $0x138] sm:$0xff]
    %v69 = vld [vmem:[%s1 + $0x140] sm:$0xff]
    %v70 = vld [vmem:[%s1 + $0x148] sm:$0xff]
    %v71 = vld [vmem:[%s1 + $0x150] sm:$0xff]
    %v72 = vld [vmem:[%s1 + $0x158] sm:$0xff]
    %v73 = vld [vmem:[%s1 + $0x160] sm:$0xff]
    %v74 = vld [vmem:[%s1 + $0x168] sm:$0xff]
    %v75 = vld [vmem:[%s1 + $0x170] sm:$0xff]
    %v76 = vld [vmem:[%s1 + $0x178] sm:$0xff]
    %v77 = vld [vmem:[%s1 + $0x180] sm:$0xff]
    %v78 = vld [vmem:[%s1 + $0x188] sm:$0xff]
    %v79 = vld [vmem:[%s1 + $0x190] sm:$0xff]
    %v80 = vld [vmem:[%s1 + $0x198] sm:$0xff]
    %v81 = vld [vmem:[%s1 + $0x1a0] sm:$0xff]
    %v82 = vld [vmem:[%s1 + $0x1a8] sm:$0xff]
    %v83 = vld [vmem:[%s1 + $0x1b0] sm:$0xff]
    %v84 = vld [vmem:[%s1 + $0x1b8] sm:$0xff]
    %v85 = vld [vmem:[%s1 + $0x1c0] sm:$0xff]
    %v86 = vld [vmem:[%s1 + $0x1c8] sm:$0xff]
    %v87 = vld [vmem:[%s1 + $0x1d0] sm:$0xff]
    %v88 = vld [vmem:[%s1 + $0x1d8] sm:$0xff]
    %v89 = vld [vmem:[%s1 + $0x1e0] sm:$0xff]
    %v90 = vld [vmem:[%s1 + $0x1e8] sm:$0xff]
    %v91 = vld [vmem:[%s1 + $0x1f0] sm:$0xff]
    %v92 = vld [vmem:[%s1 + $0x1f8] sm:$0xff]
    %v93 = vld [vmem:[%s1 + $0x200] sm:$0xff]
    %v94 = vld [vmem:[%s1 + $0x208] sm:$0xff]
    %v95 = vld [vmem:[%s1 + $0x210] sm:$0xff]
    %v96 = vld [vmem:[%s1 + $0x218] sm:$0xff]
    %v97 = vld [vmem:[%s1 + $0x220] sm:$0xff]
    %v98 = vld [vmem:[%s1 + $0x228] sm:$0xff]
    %v99 = vld [vmem:[%s1 + $0x230] sm:$0xff]
    %v100 = vld [vmem:[%s1 + $0x238] sm:$0xff]
    %v101 = vld [vmem:[%s1 + $0x240] sm:$0xff]
    %v102 = vld [vmem:[%s1 + $0x248] sm:$0xff]
    %v103 = vld [vmem:[%s1 + $0x250] sm:$0xff]
    %v104 = vld [vmem:[%s1 + $0x258] sm:$0xff]
    %v105 = vld [vmem:[%s1 + $0x260] sm:$0xff]
    %v106 = vld [vmem:[%s1 + $0x268] sm:$0xff]
    %v107 = vld [vmem:[%s1 + $0x270] sm:$0xff]
    %v108 = vld [vmem:[%s1 + $0x278] sm:$0xff]
    %v109 = vld [vmem:[%s1 + $0x280] sm:$0xff]
    %v110 = vld [vmem:[%s1 + $0x288] sm:$0xff]
    %v111 = vld [vmem:[%s1 + $0x290] sm:$0xff]
    %v112 = vld [vmem:[%s1 + $0x298] sm:$0xff]
    %v113 = vld [vmem:[%s1 + $0x2a0] sm:$0xff]
    %v114 = vld [vmem:[%s1 + $0x2a8] sm:$0xff]
    %v115 = vld [vmem:[%s1 + $0x2b0] sm:$0xff]
    %v116 = vld [vmem:[%s1 + $0x2b8] sm:$0xff]
    %v117 = vld [vmem:[%s1 + $0x2c0] sm:$0xff]
    %v118 = vld [vmem:[%s1 + $0x2c8] sm:$0xff]
    %v119 = vld [vmem:[%s1 + $0x2d0] sm:$0xff]
    %v120 = vld [vmem:[%s1 + $0x2d8] sm:$0xff]
    %v121 = vld [vmem:[%s1 + $0x2e0] sm:$0xff]
    %v122 = vld [vmem:[%s1 + $0x2e8] sm:$0xff]
    %v123 = vld [vmem:[%s1 + $0x2f0] sm:$0xff]
    %v124 = vld [vmem:[%s1 + $0x2f8] sm:$0xff]
    %v125 = vld [vmem:[%s1 + $0x300] sm:$0xff]
    %v126 = vld [vmem:[%s1 + $0x308] sm:$0xff]
    %v127 = vld [vmem:[%s1 + $0x310] sm:$0xff]
    %v128 = vld [vmem:[%s1 + $0x318] sm:$0xff]
    %v129 = vld [vmem:[%s1 + $0x320] sm:$0xff]
    %v130 = vld [vmem:[%s1 + $0x328] sm:$0xff]
    %v131 = vld [vmem:[%s1 + $0x330] sm:$0xff]
    %v132 = vld [vmem:[%s1 + $0x338] sm:$0xff]
    %v133 = vld [vmem:[%s1 + $0x340] sm:$0xff]
    %v134 = vld [vmem:[%s1 + $0x348] sm:$0xff]
    %v135 = vld [vmem:[%s1 + $0x350] sm:$0xff]
    %v136 = vld [vmem:[%s1 + $0x358] sm:$0xff]
    %v137 = vld [vmem:[%s1 + $0x360] sm:$0xff]
    %v138 = vld [vmem:[%s1 + $0x368] sm:$0xff]
    %v139 = vld [vmem:[%s1 + $0x370] sm:$0xff]
    %v140 = vld [vmem:[%s1 + $0x378] sm:$0xff]
    %v141 = vld [vmem:[%s1 + $0x380] sm:$0xff]
    %v142 = vld [vmem:[%s1 + $0x388] sm:$0xff]
    %v143 = vld [vmem:[%s1 + $0x390] sm:$0xff]
    %v144 = vld [vmem:[%s1 + $0x398] sm:$0xff]
    %v145 = vld [vmem:[%s1 + $0x3a0] sm:$0xff]
    %v146 = vld [vmem:[%s1 + $0x3a8] sm:$0xff]
    %v147 = vld [vmem:[%s1 + $0x3b0] sm:$0xff]
    %v148 = vld [vmem:[%s1 + $0x3b8] sm:$0xff]
    %v149 = vld [vmem:[%s1 + $0x3c0] sm:$0xff]
    %v150 = vld [vmem:[%s1 + $0x3c8] sm:$0xff]
    %v151 = vld [vmem:[%s1 + $0x3d0] sm:$0xff]
    %v152 = vld [vmem:[%s1 + $0x3d8] sm:$0xff]
    %v153 = vld [vmem:[%s1 + $0x3e0] sm:$0xff]
    %v154 = vld [vmem:[%s1 + $0x3e8] sm:$0xff]
    %v155 = vld [vmem:[%s1 + $0x3f0] sm:$0xff]
    %v156 = vld [vmem:[%s1 + $0x3f8] sm:$0xff]
    %v157 = vld [vmem:[%s2] sm:$0x3]
    %v159 = vperm.slane %v157, 0
    %v160 = vperm.slane %v157, 1
    %164 = vst [vmem:[#allocation1] ss:$9 sm:$0xff] %v28
    %v165 = vld [vmem:[#allocation1] sm:$0xff]
    %v166 = vld [vmem:[#allocation1 + $0x9] sm:$0xff]
    %v167 = vld [vmem:[#allocation1 + $0x12] sm:$0xff]
    %v168 = vld [vmem:[#allocation1 + $0x1b] sm:$0xff]
    %v169 = vld [vmem:[#allocation1 + $0x24] sm:$0xff]
    %v170 = vld [vmem:[#allocation1 + $0x2d] sm:$0xff]
    %v171 = vld [vmem:[#allocation1 + $0x36] sm:$0xff]
    %v172 = vld [vmem:[#allocation1 + $0x3f] sm:$0xff]
    %v309 = vunpack.c.l.b16 %v29
    %v310 = vunpack.c.h.b16 %v29
    %v311 = vunpack.c.l.b16 %v30
    %v312 = vunpack.c.h.b16 %v30
    %v313 = vunpack.c.l.b16 %v31
    %v314 = vunpack.c.h.b16 %v31
    %v315 = vunpack.c.l.b16 %v32
    %v316 = vunpack.c.h.b16 %v32
    %v317 = vunpack.c.l.b16 %v33
    %v318 = vunpack.c.h.b16 %v33
    %v319 = vunpack.c.l.b16 %v34
    %v320 = vunpack.c.h.b16 %v34
    %v321 = vunpack.c.l.b16 %v35
    %v322 = vunpack.c.h.b16 %v35
    %v323 = vunpack.c.l.b16 %v36
    %v324 = vunpack.c.h.b16 %v36
    %v325 = vunpack.c.l.b16 %v37
    %v326 = vunpack.c.h.b16 %v37
    %v327 = vunpack.c.l.b16 %v38
    %v328 = vunpack.c.h.b16 %v38
    %v329 = vunpack.c.l.b16 %v39
    %v330 = vunpack.c.h.b16 %v39
    %v331 = vunpack.c.l.b16 %v40
    %v332 = vunpack.c.h.b16 %v40
    %v333 = vunpack.c.l.b16 %v41
    %v334 = vunpack.c.h.b16 %v41
    %v335 = vunpack.c.l.b16 %v42
    %v336 = vunpack.c.h.b16 %v42
    %v337 = vunpack.c.l.b16 %v43
    %v338 = vunpack.c.h.b16 %v43
    %v339 = vunpack.c.l.b16 %v44
    %v340 = vunpack.c.h.b16 %v44
    %v341 = vunpack.c.l.b16 %v45
    %v342 = vunpack.c.h.b16 %v45
    %v343 = vunpack.c.l.b16 %v46
    %v344 = vunpack.c.h.b16 %v46
    %v345 = vunpack.c.l.b16 %v47
    %v346 = vunpack.c.h.b16 %v47
    %v347 = vunpack.c.l.b16 %v48
    %v348 = vunpack.c.h.b16 %v48
    %v349 = vunpack.c.l.b16 %v49
    %v350 = vunpack.c.h.b16 %v49
    %v351 = vunpack.c.l.b16 %v50
    %v352 = vunpack.c.h.b16 %v50
    %v353 = vunpack.c.l.b16 %v51
    %v354 = vunpack.c.h.b16 %v51
    %v355 = vunpack.c.l.b16 %v52
    %v356 = vunpack.c.h.b16 %v52
    %v357 = vunpack.c.l.b16 %v53
    %v358 = vunpack.c.h.b16 %v53
    %v359 = vunpack.c.l.b16 %v54
    %v360 = vunpack.c.h.b16 %v54
    %v361 = vunpack.c.l.b16 %v55
    %v362 = vunpack.c.h.b16 %v55
    %v363 = vunpack.c.l.b16 %v56
    %v364 = vunpack.c.h.b16 %v56
    %v365 = vunpack.c.l.b16 %v57
    %v366 = vunpack.c.h.b16 %v57
    %v367 = vunpack.c.l.b16 %v58
    %v368 = vunpack.c.h.b16 %v58
    %v369 = vunpack.c.l.b16 %v59
    %v370 = vunpack.c.h.b16 %v59
    %v371 = vunpack.c.l.b16 %v60
    %v372 = vunpack.c.h.b16 %v60
    %v373 = vunpack.c.l.b16 %v61
    %v374 = vunpack.c.h.b16 %v61
    %v375 = vunpack.c.l.b16 %v62
    %v376 = vunpack.c.h.b16 %v62
    %v377 = vunpack.c.l.b16 %v63
    %v378 = vunpack.c.h.b16 %v63
    %v379 = vunpack.c.l.b16 %v64
    %v380 = vunpack.c.h.b16 %v64
    %v381 = vunpack.c.l.b16 %v65
    %v382 = vunpack.c.h.b16 %v65
    %v383 = vunpack.c.l.b16 %v66
    %v384 = vunpack.c.h.b16 %v66
    %v385 = vunpack.c.l.b16 %v67
    %v386 = vunpack.c.h.b16 %v67
    %v387 = vunpack.c.l.b16 %v68
    %v388 = vunpack.c.h.b16 %v68
    %v389 = vunpack.c.l.b16 %v69
    %v390 = vunpack.c.h.b16 %v69
    %v391 = vunpack.c.l.b16 %v70
    %v392 = vunpack.c.h.b16 %v70
    %v393 = vunpack.c.l.b16 %v71
    %v394 = vunpack.c.h.b16 %v71
    %v395 = vunpack.c.l.b16 %v72
    %v396 = vunpack.c.h.b16 %v72
    %v397 = vunpack.c.l.b16 %v73
    %v398 = vunpack.c.h.b16 %v73
    %v399 = vunpack.c.l.b16 %v74
    %v400 = vunpack.c.h.b16 %v74
    %v401 = vunpack.c.l.b16 %v75
    %v402 = vunpack.c.h.b16 %v75
    %v403 = vunpack.c.l.b16 %v76
    %v404 = vunpack.c.h.b16 %v76
    %v405 = vunpack.c.l.b16 %v77
    %v406 = vunpack.c.h.b16 %v77
    %v407 = vunpack.c.l.b16 %v78
    %v408 = vunpack.c.h.b16 %v78
    %v409 = vunpack.c.l.b16 %v79
    %v410 = vunpack.c.h.b16 %v79
    %v411 = vunpack.c.l.b16 %v80
    %v412 = vunpack.c.h.b16 %v80
    %v413 = vunpack.c.l.b16 %v81
    %v414 = vunpack.c.h.b16 %v81
    %v415 = vunpack.c.l.b16 %v82
    %v416 = vunpack.c.h.b16 %v82
    %v417 = vunpack.c.l.b16 %v83
    %v418 = vunpack.c.h.b16 %v83
    %v419 = vunpack.c.l.b16 %v84
    %v420 = vunpack.c.h.b16 %v84
    %v421 = vunpack.c.l.b16 %v85
    %v422 = vunpack.c.h.b16 %v85
    %v423 = vunpack.c.l.b16 %v86
    %v424 = vunpack.c.h.b16 %v86
    %v425 = vunpack.c.l.b16 %v87
    %v426 = vunpack.c.h.b16 %v87
    %v427 = vunpack.c.l.b16 %v88
    %v428 = vunpack.c.h.b16 %v88
    %v429 = vunpack.c.l.b16 %v89
    %v430 = vunpack.c.h.b16 %v89
    %v431 = vunpack.c.l.b16 %v90
    %v432 = vunpack.c.h.b16 %v90
    %v433 = vunpack.c.l.b16 %v91
    %v434 = vunpack.c.h.b16 %v91
    %v435 = vunpack.c.l.b16 %v92
    %v436 = vunpack.c.h.b16 %v92
    %v437 = vunpack.c.l.b16 %v93
    %v438 = vunpack.c.h.b16 %v93
    %v439 = vunpack.c.l.b16 %v94
    %v440 = vunpack.c.h.b16 %v94
    %v441 = vunpack.c.l.b16 %v95
    %v442 = vunpack.c.h.b16 %v95
    %v443 = vunpack.c.l.b16 %v96
    %v444 = vunpack.c.h.b16 %v96
    %v445 = vunpack.c.l.b16 %v97
    %v446 = vunpack.c.h.b16 %v97
    %v447 = vunpack.c.l.b16 %v98
    %v448 = vunpack.c.h.b16 %v98
    %v449 = vunpack.c.l.b16 %v99
    %v450 = vunpack.c.h.b16 %v99
    %v451 = vunpack.c.l.b16 %v100
    %v452 = vunpack.c.h.b16 %v100
    %v453 = vunpack.c.l.b16 %v101
    %v454 = vunpack.c.h.b16 %v101
    %v455 = vunpack.c.l.b16 %v102
    %v456 = vunpack.c.h.b16 %v102
    %v457 = vunpack.c.l.b16 %v103
    %v458 = vunpack.c.h.b16 %v103
    %v459 = vunpack.c.l.b16 %v104
    %v460 = vunpack.c.h.b16 %v104
    %v461 = vunpack.c.l.b16 %v105
    %v462 = vunpack.c.h.b16 %v105
    %v463 = vunpack.c.l.b16 %v106
    %v464 = vunpack.c.h.b16 %v106
    %v465 = vunpack.c.l.b16 %v107
    %v466 = vunpack.c.h.b16 %v107
    %v467 = vunpack.c.l.b16 %v108
    %v468 = vunpack.c.h.b16 %v108
    %v469 = vunpack.c.l.b16 %v109
    %v470 = vunpack.c.h.b16 %v109
    %v471 = vunpack.c.l.b16 %v110
    %v472 = vunpack.c.h.b16 %v110
    %v473 = vunpack.c.l.b16 %v111
    %v474 = vunpack.c.h.b16 %v111
    %v475 = vunpack.c.l.b16 %v112
    %v476 = vunpack.c.h.b16 %v112
    %v477 = vunpack.c.l.b16 %v113
    %v478 = vunpack.c.h.b16 %v113
    %v479 = vunpack.c.l.b16 %v114
    %v480 = vunpack.c.h.b16 %v114
    %v481 = vunpack.c.l.b16 %v115
    %v482 = vunpack.c.h.b16 %v115
    %v483 = vunpack.c.l.b16 %v116
    %v484 = vunpack.c.h.b16 %v116
    %v485 = vunpack.c.l.b16 %v117
    %v486 = vunpack.c.h.b16 %v117
    %v487 = vunpack.c.l.b16 %v118
    %v488 = vunpack.c.h.b16 %v118
    %v489 = vunpack.c.l.b16 %v119
    %v490 = vunpack.c.h.b16 %v119
    %v491 = vunpack.c.l.b16 %v120
    %v492 = vunpack.c.h.b16 %v120
    %v493 = vunpack.c.l.b16 %v121
    %v494 = vunpack.c.h.b16 %v121
    %v495 = vunpack.c.l.b16 %v122
    %v496 = vunpack.c.h.b16 %v122
    %v497 = vunpack.c.l.b16 %v123
    %v498 = vunpack.c.h.b16 %v123
    %v499 = vunpack.c.l.b16 %v124
    %v500 = vunpack.c.h.b16 %v124
    %v501 = vunpack.c.l.b16 %v125
    %v502 = vunpack.c.h.b16 %v125
    %v503 = vunpack.c.l.b16 %v126
    %v504 = vunpack.c.h.b16 %v126
    %v505 = vunpack.c.l.b16 %v127
    %v506 = vunpack.c.h.b16 %v127
    %v507 = vunpack.c.l.b16 %v128
    %v508 = vunpack.c.h.b16 %v128
    %v509 = vunpack.c.l.b16 %v129
    %v510 = vunpack.c.h.b16 %v129
    %v511 = vunpack.c.l.b16 %v130
    %v512 = vunpack.c.h.b16 %v130
    %v513 = vunpack.c.l.b16 %v131
    %v514 = vunpack.c.h.b16 %v131
    %v515 = vunpack.c.l.b16 %v132
    %v516 = vunpack.c.h.b16 %v132
    %v517 = vunpack.c.l.b16 %v133
    %v518 = vunpack.c.h.b16 %v133
    %v519 = vunpack.c.l.b16 %v134
    %v520 = vunpack.c.h.b16 %v134
    %v521 = vunpack.c.l.b16 %v135
    %v522 = vunpack.c.h.b16 %v135
    %v523 = vunpack.c.l.b16 %v136
    %v524 = vunpack.c.h.b16 %v136
    %v525 = vunpack.c.l.b16 %v137
    %v526 = vunpack.c.h.b16 %v137
    %v527 = vunpack.c.l.b16 %v138
    %v528 = vunpack.c.h.b16 %v138
    %v529 = vunpack.c.l.b16 %v139
    %v530 = vunpack.c.h.b16 %v139
    %v531 = vunpack.c.l.b16 %v140
    %v532 = vunpack.c.h.b16 %v140
    %v533 = vunpack.c.l.b16 %v141
    %v534 = vunpack.c.h.b16 %v141
    %v535 = vunpack.c.l.b16 %v142
    %v536 = vunpack.c.h.b16 %v142
    %v537 = vunpack.c.l.b16 %v143
    %v538 = vunpack.c.h.b16 %v143
    %v539 = vunpack.c.l.b16 %v144
    %v540 = vunpack.c.h.b16 %v144
    %v541 = vunpack.c.l.b16 %v145
    %v542 = vunpack.c.h.b16 %v145
    %v543 = vunpack.c.l.b16 %v146
    %v544 = vunpack.c.h.b16 %v146
    %v545 = vunpack.c.l.b16 %v147
    %v546 = vunpack.c.h.b16 %v147
    %v547 = vunpack.c.l.b16 %v148
    %v548 = vunpack.c.h.b16 %v148
    %v549 = vunpack.c.l.b16 %v149
    %v550 = vunpack.c.h.b16 %v149
    %v551 = vunpack.c.l.b16 %v150
    %v552 = vunpack.c.h.b16 %v150
    %v553 = vunpack.c.l.b16 %v151
    %v554 = vunpack.c.h.b16 %v151
    %v555 = vunpack.c.l.b16 %v152
    %v556 = vunpack.c.h.b16 %v152
    %v557 = vunpack.c.l.b16 %v153
    %v558 = vunpack.c.h.b16 %v153
    %v559 = vunpack.c.l.b16 %v154
    %v560 = vunpack.c.h.b16 %v154
    %v561 = vunpack.c.l.b16 %v155
    %v562 = vunpack.c.h.b16 %v155
    %v563 = vunpack.c.l.b16 %v156
    %v564 = vunpack.c.h.b16 %v156
    %v565 = vpack.c.b16 %v311, %v309
    %v566 = vpack.c.b16 %v312, %v310
    %v567 = vpack.c.b16 %v315, %v313
    %v568 = vpack.c.b16 %v316, %v314
    %v569 = vpack.c.b16 %v319, %v317
    %v570 = vpack.c.b16 %v320, %v318
    %v571 = vpack.c.b16 %v323, %v321
    %v572 = vpack.c.b16 %v324, %v322
    %v573 = vpack.c.b16 %v327, %v325
    %v574 = vpack.c.b16 %v328, %v326
    %v575 = vpack.c.b16 %v331, %v329
    %v576 = vpack.c.b16 %v332, %v330
    %v577 = vpack.c.b16 %v335, %v333
    %v578 = vpack.c.b16 %v336, %v334
    %v579 = vpack.c.b16 %v339, %v337
    %v580 = vpack.c.b16 %v340, %v338
    %v581 = vpack.c.b16 %v343, %v341
    %v582 = vpack.c.b16 %v344, %v342
    %v583 = vpack.c.b16 %v347, %v345
    %v584 = vpack.c.b16 %v348, %v346
    %v585 = vpack.c.b16 %v351, %v349
    %v586 = vpack.c.b16 %v352, %v350
    %v587 = vpack.c.b16 %v355, %v353
    %v588 = vpack.c.b16 %v356, %v354
    %v589 = vpack.c.b16 %v359, %v357
    %v590 = vpack.c.b16 %v360, %v358
    %v591 = vpack.c.b16 %v363, %v361
    %v592 = vpack.c.b16 %v364, %v362
    %v593 = vpack.c.b16 %v367, %v365
    %v594 = vpack.c.b16 %v368, %v366
    %v595 = vpack.c.b16 %v371, %v369
    %v596 = vpack.c.b16 %v372, %v370
    %v597 = vpack.c.b16 %v375, %v373
    %v598 = vpack.c.b16 %v376, %v374
    %v599 = vpack.c.b16 %v379, %v377
    %v600 = vpack.c.b16 %v380, %v378
    %v601 = vpack.c.b16 %v383, %v381
    %v602 = vpack.c.b16 %v384, %v382
    %v603 = vpack.c.b16 %v387, %v385
    %v604 = vpack.c.b16 %v388, %v386
    %v605 = vpack.c.b16 %v391, %v389
    %v606 = vpack.c.b16 %v392, %v390
    %v607 = vpack.c.b16 %v395, %v393
    %v608 = vpack.c.b16 %v396, %v394
    %v609 = vpack.c.b16 %v399, %v397
    %v610 = vpack.c.b16 %v400, %v398
    %v611 = vpack.c.b16 %v403, %v401
    %v612 = vpack.c.b16 %v404, %v402
    %v613 = vpack.c.b16 %v407, %v405
    %v614 = vpack.c.b16 %v408, %v406
    %v615 = vpack.c.b16 %v411, %v409
    %v616 = vpack.c.b16 %v412, %v410
    %v617 = vpack.c.b16 %v415, %v413
    %v618 = vpack.c.b16 %v416, %v414
    %v619 = vpack.c.b16 %v419, %v417
    %v620 = vpack.c.b16 %v420, %v418
    %v621 = vpack.c.b16 %v423, %v421
    %v622 = vpack.c.b16 %v424, %v422
    %v623 = vpack.c.b16 %v427, %v425
    %v624 = vpack.c.b16 %v428, %v426
    %v625 = vpack.c.b16 %v431, %v429
    %v626 = vpack.c.b16 %v432, %v430
    %v627 = vpack.c.b16 %v435, %v433
    %v628 = vpack.c.b16 %v436, %v434
    %v629 = vpack.c.b16 %v439, %v437
    %v630 = vpack.c.b16 %v440, %v438
    %v631 = vpack.c.b16 %v443, %v441
    %v632 = vpack.c.b16 %v444, %v442
    %v633 = vpack.c.b16 %v447, %v445
    %v634 = vpack.c.b16 %v448, %v446
    %v635 = vpack.c.b16 %v451, %v449
    %v636 = vpack.c.b16 %v452, %v450
    %v637 = vpack.c.b16 %v455, %v453
    %v638 = vpack.c.b16 %v456, %v454
    %v639 = vpack.c.b16 %v459, %v457
    %v640 = vpack.c.b16 %v460, %v458
    %v641 = vpack.c.b16 %v463, %v461
    %v642 = vpack.c.b16 %v464, %v462
    %v643 = vpack.c.b16 %v467, %v465
    %v644 = vpack.c.b16 %v468, %v466
    %v645 = vpack.c.b16 %v471, %v469
    %v646 = vpack.c.b16 %v472, %v470
    %v647 = vpack.c.b16 %v475, %v473
    %v648 = vpack.c.b16 %v476, %v474
    %v649 = vpack.c.b16 %v479, %v477
    %v650 = vpack.c.b16 %v480, %v478
    %v651 = vpack.c.b16 %v483, %v481
    %v652 = vpack.c.b16 %v484, %v482
    %v653 = vpack.c.b16 %v487, %v485
    %v654 = vpack.c.b16 %v488, %v486
    %v655 = vpack.c.b16 %v491, %v489
    %v656 = vpack.c.b16 %v492, %v490
    %v657 = vpack.c.b16 %v495, %v493
    %v658 = vpack.c.b16 %v496, %v494
    %v659 = vpack.c.b16 %v499, %v497
    %v660 = vpack.c.b16 %v500, %v498
    %v661 = vpack.c.b16 %v503, %v501
    %v662 = vpack.c.b16 %v504, %v502
    %v663 = vpack.c.b16 %v507, %v505
    %v664 = vpack.c.b16 %v508, %v506
    %v665 = vpack.c.b16 %v511, %v509
    %v666 = vpack.c.b16 %v512, %v510
    %v667 = vpack.c.b16 %v515, %v513
    %v668 = vpack.c.b16 %v516, %v514
    %v669 = vpack.c.b16 %v519, %v517
    %v670 = vpack.c.b16 %v520, %v518
    %v671 = vpack.c.b16 %v523, %v521
    %v672 = vpack.c.b16 %v524, %v522
    %v673 = vpack.c.b16 %v527, %v525
    %v674 = vpack.c.b16 %v528, %v526
    %v675 = vpack.c.b16 %v531, %v529
    %v676 = vpack.c.b16 %v532, %v530
    %v677 = vpack.c.b16 %v535, %v533
    %v678 = vpack.c.b16 %v536, %v534
    %v679 = vpack.c.b16 %v539, %v537
    %v680 = vpack.c.b16 %v540, %v538
    %v681 = vpack.c.b16 %v543, %v541
    %v682 = vpack.c.b16 %v544, %v542
    %v683 = vpack.c.b16 %v547, %v545
    %v684 = vpack.c.b16 %v548, %v546
    %v685 = vpack.c.b16 %v551, %v549
    %v686 = vpack.c.b16 %v552, %v550
    %v687 = vpack.c.b16 %v555, %v553
    %v688 = vpack.c.b16 %v556, %v554
    %v689 = vpack.c.b16 %v559, %v557
    %v690 = vpack.c.b16 %v560, %v558
    %v691 = vpack.c.b16 %v563, %v561
    %v692 = vpack.c.b16 %v564, %v562
    %821 = vmatpush.bf16.msra.mxu0 %v579
    %822 = vmatpush.bf16.msra.mxu0 %v577
    %823 = vmatpush.bf16.msra.mxu0 %v575
    %824 = vmatpush.bf16.msra.mxu0 %v573
    %825 = vmatpush.bf16.msra.mxu0 %v571
    %826 = vmatpush.bf16.msra.mxu0 %v569
    %827 = vmatpush.bf16.msra.mxu0 %v567
    %828 = vmatpush.bf16.msra.mxu0 %v565
    %829 = vmatmul.bf16.gmra.mxu0 %v165
    %v830 = vpop.f32.mrf.mxu0
    %v831 = vadd.f32 %v159, %v830
    %v832 = vpop.f32.mrf.mxu0
    %833 = vdwg.mxu0
    %834 = vmatpush.bf16.msra.mxu0 %v595
    %835 = vmatpush.bf16.msra.mxu0 %v593
    %836 = vmatpush.bf16.msra.mxu0 %v591
    %837 = vmatpush.bf16.msra.mxu0 %v589
    %838 = vmatpush.bf16.msra.mxu0 %v587
    %839 = vmatpush.bf16.msra.mxu0 %v585
    %840 = vmatpush.bf16.msra.mxu0 %v583
    %841 = vmatpush.bf16.msra.mxu0 %v581
    %842 = vmatmul.bf16.gmra.mxu0 %v166
    %v843 = vpop.f32.mrf.mxu0
    %v844 = vadd.f32 %v831, %v843
    %v845 = vpop.f32.mrf.mxu0
    %846 = vdwg.mxu0
    %847 = vmatpush.bf16.msra.mxu0 %v611
    %848 = vmatpush.bf16.msra.mxu0 %v609
    %849 = vmatpush.bf16.msra.mxu0 %v607
    %850 = vmatpush.bf16.msra.mxu0 %v605
    %851 = vmatpush.bf16.msra.mxu0 %v603
    %852 = vmatpush.bf16.msra.mxu0 %v601
    %853 = vmatpush.bf16.msra.mxu0 %v599
    %854 = vmatpush.bf16.msra.mxu0 %v597
    %855 = vmatmul.bf16.gmra.mxu0 %v167
    %v856 = vpop.f32.mrf.mxu0
    %v857 = vadd.f32 %v844, %v856
    %v858 = vpop.f32.mrf.mxu0
    %859 = vdwg.mxu0
    %860 = vmatpush.bf16.msra.mxu0 %v627
    %861 = vmatpush.bf16.msra.mxu0 %v625
    %862 = vmatpush.bf16.msra.mxu0 %v623
    %863 = vmatpush.bf16.msra.mxu0 %v621
    %864 = vmatpush.bf16.msra.mxu0 %v619
    %865 = vmatpush.bf16.msra.mxu0 %v617
    %866 = vmatpush.bf16.msra.mxu0 %v615
    %867 = vmatpush.bf16.msra.mxu0 %v613
    %868 = vmatmul.bf16.gmra.mxu0 %v168
    %v869 = vpop.f32.mrf.mxu0
    %v870 = vadd.f32 %v857, %v869
    %v871 = vpop.f32.mrf.mxu0
    %872 = vdwg.mxu0
    %873 = vmatpush.bf16.msra.mxu0 %v643
    %874 = vmatpush.bf16.msra.mxu0 %v641
    %875 = vmatpush.bf16.msra.mxu0 %v639
    %876 = vmatpush.bf16.msra.mxu0 %v637
    %877 = vmatpush.bf16.msra.mxu0 %v635
    %878 = vmatpush.bf16.msra.mxu0 %v633
    %879 = vmatpush.bf16.msra.mxu0 %v631
    %880 = vmatpush.bf16.msra.mxu0 %v629
    %881 = vmatmul.bf16.gmra.mxu0 %v169
    %v882 = vpop.f32.mrf.mxu0
    %v883 = vadd.f32 %v870, %v882
    %v884 = vpop.f32.mrf.mxu0
    %885 = vdwg.mxu0
    %886 = vmatpush.bf16.msra.mxu0 %v659
    %887 = vmatpush.bf16.msra.mxu0 %v657
    %888 = vmatpush.bf16.msra.mxu0 %v655
    %889 = vmatpush.bf16.msra.mxu0 %v653
    %890 = vmatpush.bf16.msra.mxu0 %v651
    %891 = vmatpush.bf16.msra.mxu0 %v649
    %892 = vmatpush.bf16.msra.mxu0 %v647
    %893 = vmatpush.bf16.msra.mxu0 %v645
    %894 = vmatmul.bf16.gmra.mxu0 %v170
    %v895 = vpop.f32.mrf.mxu0
    %v896 = vadd.f32 %v883, %v895
    %v897 = vpop.f32.mrf.mxu0
    %898 = vdwg.mxu0
    %899 = vmatpush.bf16.msra.mxu0 %v675
    %900 = vmatpush.bf16.msra.mxu0 %v673
    %901 = vmatpush.bf16.msra.mxu0 %v671
    %902 = vmatpush.bf16.msra.mxu0 %v669
    %903 = vmatpush.bf16.msra.mxu0 %v667
    %904 = vmatpush.bf16.msra.mxu0 %v665
    %905 = vmatpush.bf16.msra.mxu0 %v663
    %906 = vmatpush.bf16.msra.mxu0 %v661
    %907 = vmatmul.bf16.gmra.mxu0 %v171
    %v908 = vpop.f32.mrf.mxu0
    %v909 = vadd.f32 %v896, %v908
    %v910 = vpop.f32.mrf.mxu0
    %911 = vdwg.mxu0
    %912 = vmatpush.bf16.msra.mxu0 %v691
    %913 = vmatpush.bf16.msra.mxu0 %v689
    %914 = vmatpush.bf16.msra.mxu0 %v687
    %915 = vmatpush.bf16.msra.mxu0 %v685
    %916 = vmatpush.bf16.msra.mxu0 %v683
    %917 = vmatpush.bf16.msra.mxu0 %v681
    %918 = vmatpush.bf16.msra.mxu0 %v679
    %919 = vmatpush.bf16.msra.mxu0 %v677
    %920 = vmatmul.bf16.gmra.mxu0 %v172
    %v921 = vpop.f32.mrf.mxu0
    %v922 = vadd.f32 %v909, %v921
    %v923 = vpop.f32.mrf.mxu0
    %924 = vdwg.mxu0
    %925 = vmatpush.bf16.msra.mxu0 %v580
    %926 = vmatpush.bf16.msra.mxu0 %v578
    %927 = vmatpush.bf16.msra.mxu0 %v576
    %928 = vmatpush.bf16.msra.mxu0 %v574
    %929 = vmatpush.bf16.msra.mxu0 %v572
    %930 = vmatpush.bf16.msra.mxu0 %v570
    %931 = vmatpush.bf16.msra.mxu0 %v568
    %932 = vmatpush.bf16.msra.mxu0 %v566
    %933 = vmatmul.bf16.gmra.mxu0 %v165
    %v934 = vpop.f32.mrf.mxu0
    %v935 = vadd.f32 %v160, %v934
    %v936 = vpop.f32.mrf.mxu0
    %937 = vdwg.mxu0
    %938 = vmatpush.bf16.msra.mxu0 %v596
    %939 = vmatpush.bf16.msra.mxu0 %v594
    %940 = vmatpush.bf16.msra.mxu0 %v592
    %941 = vmatpush.bf16.msra.mxu0 %v590
    %942 = vmatpush.bf16.msra.mxu0 %v588
    %943 = vmatpush.bf16.msra.mxu0 %v586
    %944 = vmatpush.bf16.msra.mxu0 %v584
    %945 = vmatpush.bf16.msra.mxu0 %v582
    %946 = vmatmul.bf16.gmra.mxu0 %v166
    %v947 = vpop.f32.mrf.mxu0
    %v948 = vadd.f32 %v935, %v947
    %v949 = vpop.f32.mrf.mxu0
    %950 = vdwg.mxu0
    %951 = vmatpush.bf16.msra.mxu0 %v612
    %952 = vmatpush.bf16.msra.mxu0 %v610
    %953 = vmatpush.bf16.msra.mxu0 %v608
    %954 = vmatpush.bf16.msra.mxu0 %v606
    %955 = vmatpush.bf16.msra.mxu0 %v604
    %956 = vmatpush.bf16.msra.mxu0 %v602
    %957 = vmatpush.bf16.msra.mxu0 %v600
    %958 = vmatpush.bf16.msra.mxu0 %v598
    %959 = vmatmul.bf16.gmra.mxu0 %v167
    %v960 = vpop.f32.mrf.mxu0
    %v961 = vadd.f32 %v948, %v960
    %v962 = vpop.f32.mrf.mxu0
    %963 = vdwg.mxu0
    %964 = vmatpush.bf16.msra.mxu0 %v628
    %965 = vmatpush.bf16.msra.mxu0 %v626
    %966 = vmatpush.bf16.msra.mxu0 %v624
    %967 = vmatpush.bf16.msra.mxu0 %v622
    %968 = vmatpush.bf16.msra.mxu0 %v620
    %969 = vmatpush.bf16.msra.mxu0 %v618
    %970 = vmatpush.bf16.msra.mxu0 %v616
    %971 = vmatpush.bf16.msra.mxu0 %v614
    %972 = vmatmul.bf16.gmra.mxu0 %v168
    %v973 = vpop.f32.mrf.mxu0
    %v974 = vadd.f32 %v961, %v973
    %v975 = vpop.f32.mrf.mxu0
    %976 = vdwg.mxu0
    %977 = vmatpush.bf16.msra.mxu0 %v644
    %978 = vmatpush.bf16.msra.mxu0 %v642
    %979 = vmatpush.bf16.msra.mxu0 %v640
    %980 = vmatpush.bf16.msra.mxu0 %v638
    %981 = vmatpush.bf16.msra.mxu0 %v636
    %982 = vmatpush.bf16.msra.mxu0 %v634
    %983 = vmatpush.bf16.msra.mxu0 %v632
    %984 = vmatpush.bf16.msra.mxu0 %v630
    %985 = vmatmul.bf16.gmra.mxu0 %v169
    %v986 = vpop.f32.mrf.mxu0
    %v987 = vadd.f32 %v974, %v986
    %v988 = vpop.f32.mrf.mxu0
    %989 = vdwg.mxu0
    %990 = vmatpush.bf16.msra.mxu0 %v660
    %991 = vmatpush.bf16.msra.mxu0 %v658
    %992 = vmatpush.bf16.msra.mxu0 %v656
    %993 = vmatpush.bf16.msra.mxu0 %v654
    %994 = vmatpush.bf16.msra.mxu0 %v652
    %995 = vmatpush.bf16.msra.mxu0 %v650
    %996 = vmatpush.bf16.msra.mxu0 %v648
    %997 = vmatpush.bf16.msra.mxu0 %v646
    %998 = vmatmul.bf16.gmra.mxu0 %v170
    %v999 = vpop.f32.mrf.mxu0
    %v1000 = vadd.f32 %v987, %v999
    %v1001 = vpop.f32.mrf.mxu0
    %1002 = vdwg.mxu0
    %1003 = vmatpush.bf16.msra.mxu0 %v676
    %1004 = vmatpush.bf16.msra.mxu0 %v674
    %1005 = vmatpush.bf16.msra.mxu0 %v672
    %1006 = vmatpush.bf16.msra.mxu0 %v670
    %1007 = vmatpush.bf16.msra.mxu0 %v668
    %1008 = vmatpush.bf16.msra.mxu0 %v666
    %1009 = vmatpush.bf16.msra.mxu0 %v664
    %1010 = vmatpush.bf16.msra.mxu0 %v662
    %1011 = vmatmul.bf16.gmra.mxu0 %v171
    %v1012 = vpop.f32.mrf.mxu0
    %v1013 = vadd.f32 %v1000, %v1012
    %v1014 = vpop.f32.mrf.mxu0
    %1015 = vdwg.mxu0
    %1016 = vmatpush.bf16.msra.mxu0 %v692
    %1017 = vmatpush.bf16.msra.mxu0 %v690
    %1018 = vmatpush.bf16.msra.mxu0 %v688
    %1019 = vmatpush.bf16.msra.mxu0 %v686
    %1020 = vmatpush.bf16.msra.mxu0 %v684
    %1021 = vmatpush.bf16.msra.mxu0 %v682
    %1022 = vmatpush.bf16.msra.mxu0 %v680
    %1023 = vmatpush.bf16.msra.mxu0 %v678
    %1024 = vmatmul.bf16.gmra.mxu0 %v172
    %v1025 = vpop.f32.mrf.mxu0
    %v1026 = vadd.f32 %v1013, %v1025
    %v1027 = vpop.f32.mrf.mxu0
    %1028 = vdwg.mxu0
    %v1029 = vmax.f32 %v922, 0.0
    %v1030 = vmax.f32 %v1026, 0.0
    %v1031 = vpack.c.bf16 %v1029, %v1029
    %v1032 = vpack.c.bf16 %v1030, %v1030
    %v1033 = vld [vmem:[%s3] sm:$0xf]
    %v1034 = vld [vmem:[%s3 + $0x4] sm:$0xf]
    %v1035 = vld [vmem:[%s3 + $0x8] sm:$0xf]
    %v1036 = vld [vmem:[%s3 + $0xc] sm:$0xf]
    %v1037 = vld [vmem:[%s3 + $0x10] sm:$0xf]
    %v1038 = vld [vmem:[%s3 + $0x14] sm:$0xf]
    %v1039 = vld [vmem:[%s3 + $0x18] sm:$0xf]
    %v1040 = vld [vmem:[%s3 + $0x1c] sm:$0xf]
    %v1041 = vld [vmem:[%s3 + $0x20] sm:$0xf]
    %v1042 = vld [vmem:[%s3 + $0x24] sm:$0xf]
    %v1043 = vld [vmem:[%s3 + $0x28] sm:$0xf]
    %v1044 = vld [vmem:[%s3 + $0x2c] sm:$0xf]
    %v1045 = vld [vmem:[%s3 + $0x30] sm:$0xf]
    %v1046 = vld [vmem:[%s3 + $0x34] sm:$0xf]
    %v1047 = vld [vmem:[%s3 + $0x38] sm:$0xf]
    %v1048 = vld [vmem:[%s3 + $0x3c] sm:$0xf]
    %v1049 = vld [vmem:[%s3 + $0x40] sm:$0xf]
    %v1050 = vld [vmem:[%s3 + $0x44] sm:$0xf]
    %v1051 = vld [vmem:[%s3 + $0x48] sm:$0xf]
    %v1052 = vld [vmem:[%s3 + $0x4c] sm:$0xf]
    %v1053 = vld [vmem:[%s3 + $0x50] sm:$0xf]
    %v1054 = vld [vmem:[%s3 + $0x54] sm:$0xf]
    %v1055 = vld [vmem:[%s3 + $0x58] sm:$0xf]
    %v1056 = vld [vmem:[%s3 + $0x5c] sm:$0xf]
    %v1057 = vld [vmem:[%s3 + $0x60] sm:$0xf]
    %v1058 = vld [vmem:[%s3 + $0x64] sm:$0xf]
    %v1059 = vld [vmem:[%s3 + $0x68] sm:$0xf]
    %v1060 = vld [vmem:[%s3 + $0x6c] sm:$0xf]
    %v1061 = vld [vmem:[%s3 + $0x70] sm:$0xf]
    %v1062 = vld [vmem:[%s3 + $0x74] sm:$0xf]
    %v1063 = vld [vmem:[%s3 + $0x78] sm:$0xf]
    %v1064 = vld [vmem:[%s3 + $0x7c] sm:$0xf]
    %v1065 = vld [vmem:[%s4] sm:$0x1]
    %v1067 = vperm.slane %v1065, 0
    %v1101 = vunpack.c.l.b16 %v1033
    %v1102 = vunpack.c.l.b16 %v1034
    %v1103 = vunpack.c.l.b16 %v1035
    %v1104 = vunpack.c.l.b16 %v1036
    %v1105 = vunpack.c.l.b16 %v1037
    %v1106 = vunpack.c.l.b16 %v1038
    %v1107 = vunpack.c.l.b16 %v1039
    %v1108 = vunpack.c.l.b16 %v1040
    %v1109 = vunpack.c.l.b16 %v1041
    %v1110 = vunpack.c.l.b16 %v1042
    %v1111 = vunpack.c.l.b16 %v1043
    %v1112 = vunpack.c.l.b16 %v1044
    %v1113 = vunpack.c.l.b16 %v1045
    %v1114 = vunpack.c.l.b16 %v1046
    %v1115 = vunpack.c.l.b16 %v1047
    %v1116 = vunpack.c.l.b16 %v1048
    %v1117 = vunpack.c.l.b16 %v1049
    %v1118 = vunpack.c.l.b16 %v1050
    %v1119 = vunpack.c.l.b16 %v1051
    %v1120 = vunpack.c.l.b16 %v1052
    %v1121 = vunpack.c.l.b16 %v1053
    %v1122 = vunpack.c.l.b16 %v1054
    %v1123 = vunpack.c.l.b16 %v1055
    %v1124 = vunpack.c.l.b16 %v1056
    %v1125 = vunpack.c.l.b16 %v1057
    %v1126 = vunpack.c.l.b16 %v1058
    %v1127 = vunpack.c.l.b16 %v1059
    %v1128 = vunpack.c.l.b16 %v1060
    %v1129 = vunpack.c.l.b16 %v1061
    %v1130 = vunpack.c.l.b16 %v1062
    %v1131 = vunpack.c.l.b16 %v1063
    %v1132 = vunpack.c.l.b16 %v1064
    %v1133 = vpack.c.b16 %v1102, %v1101
    %v1134 = vpack.c.b16 %v1104, %v1103
    %v1135 = vpack.c.b16 %v1106, %v1105
    %v1136 = vpack.c.b16 %v1108, %v1107
    %v1137 = vpack.c.b16 %v1110, %v1109
    %v1138 = vpack.c.b16 %v1112, %v1111
    %v1139 = vpack.c.b16 %v1114, %v1113
    %v1140 = vpack.c.b16 %v1116, %v1115
    %v1141 = vpack.c.b16 %v1118, %v1117
    %v1142 = vpack.c.b16 %v1120, %v1119
    %v1143 = vpack.c.b16 %v1122, %v1121
    %v1144 = vpack.c.b16 %v1124, %v1123
    %v1145 = vpack.c.b16 %v1126, %v1125
    %v1146 = vpack.c.b16 %v1128, %v1127
    %v1147 = vpack.c.b16 %v1130, %v1129
    %v1148 = vpack.c.b16 %v1132, %v1131
    %1165 = vmatpush.bf16.msra.mxu0 %v1140
    %1166 = vmatpush.bf16.msra.mxu0 %v1139
    %1167 = vmatpush.bf16.msra.mxu0 %v1138
    %1168 = vmatpush.bf16.msra.mxu0 %v1137
    %1169 = vmatpush.bf16.msra.mxu0 %v1136
    %1170 = vmatpush.bf16.msra.mxu0 %v1135
    %1171 = vmatpush.bf16.msra.mxu0 %v1134
    %1172 = vmatpush.bf16.msra.mxu0 %v1133
    %1173 = vmatmul.bf16.gmra.mxu0 %v1031
    %v1174 = vpop.f32.mrf.mxu0
    %v1175 = vadd.f32 %v1067, %v1174
    %v1176 = vpop.f32.mrf.mxu0
    %1177 = vdwg.mxu0
    %1178 = vmatpush.bf16.msra.mxu0 %v1148
    %1179 = vmatpush.bf16.msra.mxu0 %v1147
    %1180 = vmatpush.bf16.msra.mxu0 %v1146
    %1181 = vmatpush.bf16.msra.mxu0 %v1145
    %1182 = vmatpush.bf16.msra.mxu0 %v1144
    %1183 = vmatpush.bf16.msra.mxu0 %v1143
    %1184 = vmatpush.bf16.msra.mxu0 %v1142
    %1185 = vmatpush.bf16.msra.mxu0 %v1141
    %1186 = vmatmul.bf16.gmra.mxu0 %v1032
    %v1187 = vpop.f32.mrf.mxu0
    %v1188 = vadd.f32 %v1175, %v1187
    %v1189 = vpop.f32.mrf.mxu0
    %1190 = vdwg.mxu0
    %v1191 = vmax.f32 %v1188, 0.0
    %v1192 = vpack.c.bf16 %v1191, %v1191
    %v1193 = vld [vmem:[%s5] sm:$0xf]
    %v1194 = vld [vmem:[%s5 + $0x4] sm:$0xf]
    %v1195 = vld [vmem:[%s5 + $0x8] sm:$0xf]
    %v1196 = vld [vmem:[%s5 + $0xc] sm:$0xf]
    %v1197 = vld [vmem:[%s5 + $0x10] sm:$0xf]
    %v1198 = vld [vmem:[%s5 + $0x14] sm:$0xf]
    %v1199 = vld [vmem:[%s5 + $0x18] sm:$0xf]
    %v1200 = vld [vmem:[%s5 + $0x1c] sm:$0xf]
    %v1201 = vld [vmem:[%s6] sm:$0x1]
    %v1203 = vperm.slane %v1201, 0
    %v1213 = vunpack.c.l.b16 %v1193
    %v1214 = vunpack.c.l.b16 %v1194
    %v1215 = vunpack.c.l.b16 %v1195
    %v1216 = vunpack.c.l.b16 %v1196
    %v1217 = vunpack.c.l.b16 %v1197
    %v1218 = vunpack.c.l.b16 %v1198
    %v1219 = vunpack.c.l.b16 %v1199
    %v1220 = vunpack.c.l.b16 %v1200
    %v1221 = vpack.c.b16 %v1214, %v1213
    %v1222 = vpack.c.b16 %v1216, %v1215
    %v1223 = vpack.c.b16 %v1218, %v1217
    %v1224 = vpack.c.b16 %v1220, %v1219
    %vm1229 = vcmask 523264
    %v1231 = vsel %vm1229, %v1192, 0
    %1233 = vmatpush.bf16.msra.mxu0 0
    %1234 = vmatpush.bf16.msra.mxu0 0
    %1235 = vmatpush.bf16.msra.mxu0 0
    %1236 = vmatpush.bf16.msra.mxu0 0
    %1237 = vmatpush.bf16.msra.mxu0 %v1224
    %1238 = vmatpush.bf16.msra.mxu0 %v1223
    %1239 = vmatpush.bf16.msra.mxu0 %v1222
    %1240 = vmatpush.bf16.msra.mxu0 %v1221
    %1241 = vmatmul.bf16.gmra.mxu0 %v1231
    %v1242 = vpop.f32.mrf.mxu0
    %v1243 = vadd.f32 %v1203, %v1242
    %v1244 = vpop.f32.mrf.mxu0
    %1245 = vdwg.mxu0
    %vm1246 = vcmask 74752
    %1247 = vst.msk [vmem:[#allocation2] sm:$0x3] %vm1246, %v1243
    // Predicated region
    $region30: #{net_forward.7} parent=1 // pred_check
      _
    $region31: #{net_forward.7} parent=1 // pred_check_branch
      %1249 = sbr.rel (0) target = $region33
    $region32: #{net_forward.7} parent=1 // pred_region
      %1251 = vsyncadd [#allocation3], 0
      %s1253 = sshll.u32 [#allocation2], 4
      %s1254 = int_to_ptr.vmem [resolvable:$true] %s1253
      %s1255 = sshll.u32 %s7, 4
      %s1256 = int_to_ptr.hbm [resolvable:$true] %s1255
      %1258 = dma.vmem_to_hbm [thread:$0]  %s1254, 32, %s1256, [#allocation3]
    $region33: #{net_forward.7} parent=1 // pred_fallthru
      _
    // Predicated region
    $region34: #{net_forward.7} parent=1 // pred_check
      _
    $region35: #{net_forward.7} parent=1 // pred_check_branch
      %1260 = sbr.rel (0) target = $region37
    $region36: #{net_forward.7} parent=1 // pred_region
      %1262 = dma.done [#allocation3], 32
    $region37: #{net_forward.7} parent=1 // pred_fallthru
      _
    %1263 = vsyncpa [#allocation3], 1

</llo_original>
